<compile_context>
chip_gen: v5e
topology: v5e:2x2
jax: 0.10.0
libtpu: 0.0.40
codegen_flags: <defaults>
</compile_context>

<pallas_src>
import functools

import jax
import jax.numpy as jnp
from jax import lax
from jax.experimental import pallas as pl
from jax.experimental.pallas import tpu as pltpu


def _layernorm_f32(xf, gamma, beta, eps):
    """LayerNorm over the last axis, f32 math (matches torch.nn.LayerNorm)."""
    mu = jnp.mean(xf, axis=-1, keepdims=True)
    var = jnp.mean(jnp.square(xf - mu), axis=-1, keepdims=True)
    return (xf - mu) * lax.rsqrt(var + eps) * gamma + beta


def _erf_poly(x):
    # Abramowitz & Stegun 7.1.26, |err| <= 1.5e-7; only exp/mul/add/where -> Mosaic-lowerable.
    a1, a2, a3, a4, a5 = 0.254829592, -0.284496736, 1.421413741, -1.453152027, 1.061405429
    p = 0.3275911
    sgn = jnp.where(x >= 0.0, 1.0, -1.0)
    ax = jnp.abs(x)
    t = 1.0 / (1.0 + p * ax)
    poly = ((((a5 * t + a4) * t + a3) * t + a2) * t + a1) * t
    return sgn * (1.0 - poly * jnp.exp(-ax * ax))


def _gelu_exact(x):
    # nn.GELU() default (erf form).
    return 0.5 * x * (1.0 + _erf_poly(x * 0.7071067811865476))


def _encoder_block_kernel(
    x_ref,                      # (R, E)   with R = block_b * seq_len
    ln1_g_ref, ln1_b_ref,       # (1, E), (1, E)
    wqkv_ref,                   # (E, 3E)  pre-transposed (in, out)
    wproj_ref,                  # (E, E)   pre-transposed (in, out)
    bproj_ref,                  # (1, E)
    ln2_g_ref, ln2_b_ref,       # (1, E), (1, E)
    w1_ref,                     # (E, Hd)  pre-transposed
    b1_ref,                     # (1, Hd)
    w2_ref,                     # (Hd, E)  pre-transposed
    b2_ref,                     # (1, E)
    o_ref,                      # (R, E)
    *, num_heads, block_b, seq_len, ln_eps,
):
    x = x_ref[...]                                   # (R, E) model dtype
    R, E = x.shape
    hd = E // num_heads
    dt = x.dtype
    xf = x.astype(jnp.float32)                       # f32 only for LN / residual math

    # ---------------- LN1 + fused QKV projection (batch folded into the M dim) ----------------
    h1 = _layernorm_f32(xf, ln1_g_ref[...].astype(jnp.float32),
                        ln1_b_ref[...].astype(jnp.float32), ln_eps).astype(dt)
    qkv = jnp.dot(h1, wqkv_ref[...], preferred_element_type=jnp.float32)   # (R, 3E) f32
    qkv = qkv.astype(dt)                             # single downcast; f32 copy dies here

    # ---------------- multi-head attention, head outputs folded into the projection ----------------
    scale = 1.0 / (hd ** 0.5)
    # Accumulator starts at the broadcast projection bias (saves one (R,E) VALU add).
    acc = jnp.broadcast_to(bproj_ref[...].astype(jnp.float32), (R, E))
    for h in range(num_heads):                       # static unroll: back-to-back MXU pushes
        q = qkv[:, h * hd:(h + 1) * hd].reshape(block_b, seq_len, hd)
        k = qkv[:, E + h * hd:E + (h + 1) * hd].reshape(block_b, seq_len, hd)
        v = qkv[:, 2 * E + h * hd:2 * E + (h + 1) * hd].reshape(block_b, seq_len, hd)

        # NT-form batched matmul: contract the head dim directly, no explicit k transpose.
        s = lax.dot_general(q, k, (((2,), (2,)), ((0,), (0,))),
                            preferred_element_type=jnp.float32) * scale    # (Bblk, T, T) f32
        s = s - jnp.max(s, axis=-1, keepdims=True)   # stable softmax (f32)
        p = jnp.exp(s)
        attn = (p * pl.reciprocal(jnp.sum(p, axis=-1, keepdims=True), approx=True)).astype(dt)

        head_out = lax.dot_general(attn, v, (((2,), (1,)), ((0,), (0,))),
                                   preferred_element_type=jnp.float32)     # (Bblk, T, hd)
        # fold "concat + proj" into a per-head rank-hd update of the projection
        acc = acc + jnp.dot(head_out.reshape(R, hd).astype(dt),
                            wproj_ref[h * hd:(h + 1) * hd, :],
                            preferred_element_type=jnp.float32)

    # ---------------- residual 1 (dropout = identity in eval) ----------------
    r1 = xf + acc                                    # (R, E) f32

    # ---------------- LN2 + MLP ----------------
    h2 = _layernorm_f32(r1, ln2_g_ref[...].astype(jnp.float32),
                        ln2_b_ref[...].astype(jnp.float32), ln_eps).astype(dt)
    z = jnp.dot(h2, w1_ref[...], preferred_element_type=jnp.float32) \
        + b1_ref[...].astype(jnp.float32)            # (R, Hd) f32
    z = _gelu_exact(z)
    z = jnp.dot(z.astype(dt), w2_ref[...], preferred_element_type=jnp.float32) \
        + b2_ref[...].astype(jnp.float32)            # (R, E) f32

    # ---------------- residual 2 ----------------
    o_ref[...] = (r1 + z).astype(o_ref.dtype)


def _pick_block_b(B, T, max_rows=512, max_score_bytes=4 << 20):
    """Largest batch block such that rows stay MXU-friendly and score tiles stay small.

    A block's row count (Bblk*T) must be a multiple of 8 (sublane tile) unless the block
    covers the whole batch.
    """
    cands = [c for c in range(1, B + 1)
             if B % c == 0 and (c == B or (c * T) % 8 == 0)]
    ok = [c for c in cands if c * T <= max_rows and c * T * T * 4 <= max_score_bytes]
    return max(ok) if ok else min(cands)


def _vmem_limit_bytes():
    try:
        cap = pltpu.get_tpu_info().vmem_capacity_bytes
    except Exception:
        cap = 128 * 1024 * 1024
    # ~25% headroom for compiler scratch / double buffers: ~48 MiB on v7x, ~96 MiB on v5e/v6e.
    return min(int(cap * 0.75), 100 * 1024 * 1024)


def transformer_encoder_block(x, params, *, num_heads):
    """x: (B, T, E). params hold torch-layout weights: nn.Linear weight = (out, in)."""
    B, T, E = x.shape
    assert E % num_heads == 0
    Hd = params["w1"].shape[0]
    ln_eps = 1e-5
    dt = x.dtype

    # One-time pre-arrangement (transpose to (in, out); cast weights to model dtype).
    wqkv_t = jnp.transpose(params["w_qkv"]).astype(dt)     # (E, 3E)
    wproj_t = jnp.transpose(params["w_proj"]).astype(dt)   # (E, E)
    w1_t = jnp.transpose(params["w1"]).astype(dt)          # (E, Hd)
    w2_t = jnp.transpose(params["w2"]).astype(dt)          # (Hd, E)
    ln1_g = params["ln1_g"].reshape(1, E)
    ln1_b = params["ln1_b"].reshape(1, E)
    ln2_g = params["ln2_g"].reshape(1, E)
    ln2_b = params["ln2_b"].reshape(1, E)
    bproj = params["b_proj"].reshape(1, E)
    b1 = params["b1"].reshape(1, Hd)
    b2 = params["b2"].reshape(1, E)

    Bblk = _pick_block_b(B, T)
    R = Bblk * T
    x2d = x.reshape(B * T, E)       # row-major merge of leading dims: free, no HBM copy

    kernel = functools.partial(_encoder_block_kernel, num_heads=num_heads,
                               block_b=Bblk, seq_len=T, ln_eps=ln_eps)
    xspec = pl.BlockSpec((R, E), lambda i: (i, 0))

    def build(single_buffer_weights):
        rep = lambda i: (0, 0)

        def wspec(shape):
            # Invariant weights: single-buffer when supported (frees VMEM, esp. on v7x).
            if single_buffer_weights and hasattr(pl, "Buffered"):
                return pl.BlockSpec(shape, rep, pipeline_mode=pl.Buffered(1))
            return pl.BlockSpec(shape, rep)

        return pl.pallas_call(
            kernel,
            out_shape=jax.ShapeDtypeStruct((B * T, E), dt),
            grid=(B // Bblk,),
            in_specs=[
                xspec,
                wspec((1, E)),          # ln1 gamma
                wspec((1, E)),          # ln1 beta
                wspec((E, 3 * E)),      # Wqkv
                wspec((E, E)),          # Wproj
                wspec((1, E)),          # bproj
                wspec((1, E)),          # ln2 gamma
                wspec((1, E)),          # ln2 beta
                wspec((E, Hd)),         # W1
                wspec((1, Hd)),         # b1
                wspec((Hd, E)),         # W2
                wspec((1, E)),          # b2
            ],
            out_specs=xspec,
            compiler_params=pltpu.CompilerParams(
                dimension_semantics=("parallel",),
                vmem_limit_bytes=_vmem_limit_bytes(),
            ),
        )

    args = (x2d, ln1_g, ln1_b, wqkv_t, wproj_t, bproj, ln2_g, ln2_b, w1_t, b1, w2_t, b2)
    try:
        out2d = build(True)(*args)
    except Exception:
        # pipeline_mode / single-buffering unsupported on this JAX version -> default buffering.
        out2d = build(False)(*args)
    return out2d.reshape(B, T, E)


def _reference(x, p, num_heads, eps=1e-5):
    """Plain-JAX port of the PyTorch TransformerEncoderBlock.forward (eval mode)."""
    def ln(v, g, b):
        mu = v.mean(-1, keepdims=True)
        var = ((v - mu) ** 2).mean(-1, keepdims=True)
        return (v - mu) / jnp.sqrt(var + eps) * g + b

    B, T, E = x.shape
    hd = E // num_heads
    h = ln(x, p["ln1_g"], p["ln1_b"])
    qkv = h @ p["w_qkv"].T                                          # (B, T, 3E)
    qkv = qkv.reshape(B, T, 3, num_heads, hd).transpose(2, 0, 3, 1, 4)
    q, k, v = qkv[0], qkv[1], qkv[2]                                # (B, H, T, hd)
    dots = (q @ jnp.swapaxes(k, -2, -1)) / (hd ** 0.5)
    attn = jax.nn.softmax(dots, axis=-1)
    out = jnp.swapaxes(attn @ v, 1, 2).reshape(B, T, E)
    x = x + (out @ p["w_proj"].T + p["b_proj"])                     # dropout = identity
    h2 = ln(x, p["ln2_g"], p["ln2_b"])
    z = h2 @ p["w1"].T + p["b1"]
    z = jax.nn.gelu(z, approximate=False)                           # nn.GELU() exact
    z = z @ p["w2"].T + p["b2"]
    return x + z                                                    # dropout = identity


if __name__ == "__main__":
    B, T, E, H, MLP_H = 2, 8, 32, 4, 64

    key = jax.random.PRNGKey(0)
    ks = jax.random.split(key, 12)
    x = jax.random.normal(ks[0], (B, T, E), dtype=jnp.float32)
    params = dict(
        ln1_g=1.0 + 0.1 * jax.random.normal(ks[1], (E,), jnp.float32),
        ln1_b=0.1 * jax.random.normal(ks[2], (E,), jnp.float32),
        w_qkv=0.05 * jax.random.normal(ks[3], (3 * E, E), jnp.float32),   # nn.Linear (out, in)
        w_proj=0.05 * jax.random.normal(ks[4], (E, E), jnp.float32),
        b_proj=0.05 * jax.random.normal(ks[5], (E,), jnp.float32),
        ln2_g=1.0 + 0.1 * jax.random.normal(ks[6], (E,), jnp.float32),
        ln2_b=0.1 * jax.random.normal(ks[7], (E,), jnp.float32),
        w1=0.05 * jax.random.normal(ks[8], (MLP_H, E), jnp.float32),
        b1=0.05 * jax.random.normal(ks[9], (MLP_H,), jnp.float32),
        w2=0.05 * jax.random.normal(ks[10], (E, MLP_H), jnp.float32),
        b2=0.05 * jax.random.normal(ks[11], (E,), jnp.float32),
    )

    out = transformer_encoder_block(x, params, num_heads=H)
    out = jax.block_until_ready(out)

    ref = _reference(x, params, H)
    assert out.shape == (B, T, E)
    # tolerance accounts for the EUP approx-reciprocal in softmax and the erf polynomial
    assert jnp.allclose(out, ref, atol=2e-3, rtol=2e-3), float(jnp.max(jnp.abs(out - ref)))
    print("KERNEL_OK")
</pallas_src>

<mosaic_0001>
module attributes {stable_mosaic.version = 11 : i64} {
  func.func @_encoder_block_kernel(%arg0: i32, %arg1: memref<16x32xf32, #tpu.memory_space<vmem>>, %arg2: memref<1x32xf32, #tpu.memory_space<vmem>>, %arg3: memref<1x32xf32, #tpu.memory_space<vmem>>, %arg4: memref<32x96xf32, #tpu.memory_space<vmem>>, %arg5: memref<32x32xf32, #tpu.memory_space<vmem>>, %arg6: memref<1x32xf32, #tpu.memory_space<vmem>>, %arg7: memref<1x32xf32, #tpu.memory_space<vmem>>, %arg8: memref<1x32xf32, #tpu.memory_space<vmem>>, %arg9: memref<32x64xf32, #tpu.memory_space<vmem>>, %arg10: memref<1x64xf32, #tpu.memory_space<vmem>>, %arg11: memref<64x32xf32, #tpu.memory_space<vmem>>, %arg12: memref<1x32xf32, #tpu.memory_space<vmem>>, %arg13: memref<16x32xf32, #tpu.memory_space<vmem>>) attributes {dimension_semantics = [#tpu.dimension_semantics<parallel>], iteration_bounds = array<i64: 1>, scalar_prefetch = 0 : i64, scratch_operands = 0 : i64, tpu.core_type = #tpu.core_type<tc>, window_params = [{transform_indices = @transform_0, window_bounds = array<i64: 16, 32>}, {pipeline_mode = #tpu.pipeline_mode<synchronous>, transform_indices = @transform_1, window_bounds = array<i64: 1, 32>}, {pipeline_mode = #tpu.pipeline_mode<synchronous>, transform_indices = @transform_2, window_bounds = array<i64: 1, 32>}, {pipeline_mode = #tpu.pipeline_mode<synchronous>, transform_indices = @transform_3, window_bounds = array<i64: 32, 96>}, {pipeline_mode = #tpu.pipeline_mode<synchronous>, transform_indices = @transform_4, window_bounds = array<i64: 32, 32>}, {pipeline_mode = #tpu.pipeline_mode<synchronous>, transform_indices = @transform_5, window_bounds = array<i64: 1, 32>}, {pipeline_mode = #tpu.pipeline_mode<synchronous>, transform_indices = @transform_6, window_bounds = array<i64: 1, 32>}, {pipeline_mode = #tpu.pipeline_mode<synchronous>, transform_indices = @transform_7, window_bounds = array<i64: 1, 32>}, {pipeline_mode = #tpu.pipeline_mode<synchronous>, transform_indices = @transform_8, window_bounds = array<i64: 32, 64>}, {pipeline_mode = #tpu.pipeline_mode<synchronous>, transform_indices = @transform_9, window_bounds = array<i64: 1, 64>}, {pipeline_mode = #tpu.pipeline_mode<synchronous>, transform_indices = @transform_10, window_bounds = array<i64: 64, 32>}, {pipeline_mode = #tpu.pipeline_mode<synchronous>, transform_indices = @transform_11, window_bounds = array<i64: 1, 32>}, {transform_indices = @transform_12, window_bounds = array<i64: 16, 32>}]} {
    %c0 = arith.constant 0 : index
    %c0_0 = arith.constant 0 : index
    %0 = vector.load %arg1[%c0, %c0_0] : memref<16x32xf32, #tpu.memory_space<vmem>>, vector<16x32xf32>
    %c0_1 = arith.constant 0 : index
    %c0_2 = arith.constant 0 : index
    %1 = vector.load %arg2[%c0_1, %c0_2] : memref<1x32xf32, #tpu.memory_space<vmem>>, vector<1x32xf32>
    %c0_3 = arith.constant 0 : index
    %c0_4 = arith.constant 0 : index
    %2 = vector.load %arg3[%c0_3, %c0_4] : memref<1x32xf32, #tpu.memory_space<vmem>>, vector<1x32xf32>
    %cst = arith.constant dense<0.000000e+00> : vector<16xf32>
    %3 = vector.multi_reduction <add>, %0, %cst [1] : vector<16x32xf32> to vector<16xf32>
    %4 = vector.shape_cast %3 : vector<16xf32> to vector<16x1xf32>
    %cst_5 = arith.constant 3.200000e+01 : f32
    %5 = vector.broadcast %cst_5 : f32 to vector<16x1xf32>
    %6 = arith.divf %4, %5 : vector<16x1xf32>
    %7 = vector.broadcast %6 : vector<16x1xf32> to vector<16x32xf32>
    %8 = arith.subf %0, %7 : vector<16x32xf32>
    %9 = arith.mulf %8, %8 : vector<16x32xf32>
    %cst_6 = arith.constant dense<0.000000e+00> : vector<16xf32>
    %10 = vector.multi_reduction <add>, %9, %cst_6 [1] : vector<16x32xf32> to vector<16xf32>
    %11 = vector.shape_cast %10 : vector<16xf32> to vector<16x1xf32>
    %cst_7 = arith.constant 3.200000e+01 : f32
    %12 = vector.broadcast %cst_7 : f32 to vector<16x1xf32>
    %13 = arith.divf %11, %12 : vector<16x1xf32>
    %14 = vector.broadcast %6 : vector<16x1xf32> to vector<16x32xf32>
    %15 = arith.subf %0, %14 : vector<16x32xf32>
    %cst_8 = arith.constant 9.99999974E-6 : f32
    %16 = vector.broadcast %cst_8 : f32 to vector<16x1xf32>
    %17 = arith.addf %13, %16 : vector<16x1xf32>
    %18 = math.rsqrt %17 : vector<16x1xf32>
    %19 = vector.broadcast %18 : vector<16x1xf32> to vector<16x32xf32>
    %20 = arith.mulf %15, %19 : vector<16x32xf32>
    %21 = vector.broadcast %1 : vector<1x32xf32> to vector<16x32xf32>
    %22 = arith.mulf %20, %21 : vector<16x32xf32>
    %23 = vector.broadcast %2 : vector<1x32xf32> to vector<16x32xf32>
    %24 = arith.addf %22, %23 : vector<16x32xf32>
    %c0_9 = arith.constant 0 : index
    %c0_10 = arith.constant 0 : index
    %25 = vector.load %arg4[%c0_9, %c0_10] : memref<32x96xf32, #tpu.memory_space<vmem>>, vector<32x96xf32>
    %cst_11 = arith.constant dense<0.000000e+00> : vector<16x96xf32>
    %26 = tpu.matmul %24, %25, %cst_11 {dimension_numbers = #tpu.dot_dimension_numbers<[1], [0], [0], [1], [0, 0, 1, 1], [], []>} : vector<16x32xf32>, vector<32x96xf32>, vector<16x96xf32> -> vector<16x96xf32>
    %c0_12 = arith.constant 0 : index
    %c0_13 = arith.constant 0 : index
    %27 = vector.load %arg6[%c0_12, %c0_13] : memref<1x32xf32, #tpu.memory_space<vmem>>, vector<1x32xf32>
    %28 = vector.shape_cast %27 : vector<1x32xf32> to vector<1x32xf32>
    %29 = vector.broadcast %28 : vector<1x32xf32> to vector<16x32xf32>
    %30 = vector.extract_strided_slice %26 {offsets = [0, 0], sizes = [16, 8], strides = [1, 1]} : vector<16x96xf32> to vector<16x8xf32>
    %31 = vector.shape_cast %30 : vector<16x8xf32> to vector<2x8x8xf32>
    %32 = vector.extract_strided_slice %26 {offsets = [0, 32], sizes = [16, 8], strides = [1, 1]} : vector<16x96xf32> to vector<16x8xf32>
    %33 = vector.shape_cast %32 : vector<16x8xf32> to vector<2x8x8xf32>
    %34 = vector.extract_strided_slice %26 {offsets = [0, 64], sizes = [16, 8], strides = [1, 1]} : vector<16x96xf32> to vector<16x8xf32>
    %35 = vector.shape_cast %34 : vector<16x8xf32> to vector<2x8x8xf32>
    %cst_14 = arith.constant dense<0.000000e+00> : vector<2x8x8xf32>
    %36 = tpu.matmul %31, %33, %cst_14 {dimension_numbers = #tpu.dot_dimension_numbers<[2], [2], [1], [1], [0, 0, 0, 1, 1, 1], [0], [0]>} : vector<2x8x8xf32>, vector<2x8x8xf32>, vector<2x8x8xf32> -> vector<2x8x8xf32>
    %cst_15 = arith.constant 0.353553385 : f32
    %37 = vector.broadcast %cst_15 : f32 to vector<2x8x8xf32>
    %38 = arith.mulf %36, %37 : vector<2x8x8xf32>
    %cst_16 = arith.constant dense<0xFF800000> : vector<2x8xf32>
    %39 = vector.multi_reduction <maximumf>, %38, %cst_16 [2] : vector<2x8x8xf32> to vector<2x8xf32>
    %40 = vector.shape_cast %39 : vector<2x8xf32> to vector<2x8x1xf32>
    %41 = vector.broadcast %40 : vector<2x8x1xf32> to vector<2x8x8xf32>
    %42 = arith.subf %38, %41 : vector<2x8x8xf32>
    %43 = math.exp %42 : vector<2x8x8xf32>
    %cst_17 = arith.constant dense<0.000000e+00> : vector<2x8xf32>
    %44 = vector.multi_reduction <add>, %43, %cst_17 [2] : vector<2x8x8xf32> to vector<2x8xf32>
    %45 = vector.shape_cast %44 : vector<2x8xf32> to vector<2x8x1xf32>
    %46 = tpu.reciprocal %45 {approx = true} : vector<2x8x1xf32> -> vector<2x8x1xf32>
    %47 = vector.broadcast %46 : vector<2x8x1xf32> to vector<2x8x8xf32>
    %48 = arith.mulf %43, %47 : vector<2x8x8xf32>
    %cst_18 = arith.constant dense<0.000000e+00> : vector<2x8x8xf32>
    %49 = tpu.matmul %48, %35, %cst_18 {dimension_numbers = #tpu.dot_dimension_numbers<[2], [1], [1], [2], [0, 0, 0, 1, 1, 2], [0], [0]>} : vector<2x8x8xf32>, vector<2x8x8xf32>, vector<2x8x8xf32> -> vector<2x8x8xf32>
    %50 = vector.shape_cast %49 : vector<2x8x8xf32> to vector<16x8xf32>
    %c0_19 = arith.constant 0 : index
    %c0_20 = arith.constant 0 : index
    %51 = vector.load %arg5[%c0_19, %c0_20] : memref<32x32xf32, #tpu.memory_space<vmem>>, vector<8x32xf32>
    %cst_21 = arith.constant dense<0.000000e+00> : vector<16x32xf32>
    %52 = tpu.matmul %50, %51, %cst_21 {dimension_numbers = #tpu.dot_dimension_numbers<[1], [0], [0], [1], [0, 0, 1, 1], [], []>} : vector<16x8xf32>, vector<8x32xf32>, vector<16x32xf32> -> vector<16x32xf32>
    %53 = arith.addf %29, %52 : vector<16x32xf32>
    %54 = vector.extract_strided_slice %26 {offsets = [0, 8], sizes = [16, 8], strides = [1, 1]} : vector<16x96xf32> to vector<16x8xf32>
    %55 = vector.shape_cast %54 : vector<16x8xf32> to vector<2x8x8xf32>
    %56 = vector.extract_strided_slice %26 {offsets = [0, 40], sizes = [16, 8], strides = [1, 1]} : vector<16x96xf32> to vector<16x8xf32>
    %57 = vector.shape_cast %56 : vector<16x8xf32> to vector<2x8x8xf32>
    %58 = vector.extract_strided_slice %26 {offsets = [0, 72], sizes = [16, 8], strides = [1, 1]} : vector<16x96xf32> to vector<16x8xf32>
    %59 = vector.shape_cast %58 : vector<16x8xf32> to vector<2x8x8xf32>
    %cst_22 = arith.constant dense<0.000000e+00> : vector<2x8x8xf32>
    %60 = tpu.matmul %55, %57, %cst_22 {dimension_numbers = #tpu.dot_dimension_numbers<[2], [2], [1], [1], [0, 0, 0, 1, 1, 1], [0], [0]>} : vector<2x8x8xf32>, vector<2x8x8xf32>, vector<2x8x8xf32> -> vector<2x8x8xf32>
    %cst_23 = arith.constant 0.353553385 : f32
    %61 = vector.broadcast %cst_23 : f32 to vector<2x8x8xf32>
    %62 = arith.mulf %60, %61 : vector<2x8x8xf32>
    %cst_24 = arith.constant dense<0xFF800000> : vector<2x8xf32>
    %63 = vector.multi_reduction <maximumf>, %62, %cst_24 [2] : vector<2x8x8xf32> to vector<2x8xf32>
    %64 = vector.shape_cast %63 : vector<2x8xf32> to vector<2x8x1xf32>
    %65 = vector.broadcast %64 : vector<2x8x1xf32> to vector<2x8x8xf32>
    %66 = arith.subf %62, %65 : vector<2x8x8xf32>
    %67 = math.exp %66 : vector<2x8x8xf32>
    %cst_25 = arith.constant dense<0.000000e+00> : vector<2x8xf32>
    %68 = vector.multi_reduction <add>, %67, %cst_25 [2] : vector<2x8x8xf32> to vector<2x8xf32>
    %69 = vector.shape_cast %68 : vector<2x8xf32> to vector<2x8x1xf32>
    %70 = tpu.reciprocal %69 {approx = true} : vector<2x8x1xf32> -> vector<2x8x1xf32>
    %71 = vector.broadcast %70 : vector<2x8x1xf32> to vector<2x8x8xf32>
    %72 = arith.mulf %67, %71 : vector<2x8x8xf32>
    %cst_26 = arith.constant dense<0.000000e+00> : vector<2x8x8xf32>
    %73 = tpu.matmul %72, %59, %cst_26 {dimension_numbers = #tpu.dot_dimension_numbers<[2], [1], [1], [2], [0, 0, 0, 1, 1, 2], [0], [0]>} : vector<2x8x8xf32>, vector<2x8x8xf32>, vector<2x8x8xf32> -> vector<2x8x8xf32>
    %74 = vector.shape_cast %73 : vector<2x8x8xf32> to vector<16x8xf32>
    %c8 = arith.constant 8 : index
    %c0_27 = arith.constant 0 : index
    %75 = vector.load %arg5[%c8, %c0_27] : memref<32x32xf32, #tpu.memory_space<vmem>>, vector<8x32xf32>
    %cst_28 = arith.constant dense<0.000000e+00> : vector<16x32xf32>
    %76 = tpu.matmul %74, %75, %cst_28 {dimension_numbers = #tpu.dot_dimension_numbers<[1], [0], [0], [1], [0, 0, 1, 1], [], []>} : vector<16x8xf32>, vector<8x32xf32>, vector<16x32xf32> -> vector<16x32xf32>
    %77 = arith.addf %53, %76 : vector<16x32xf32>
    %78 = vector.extract_strided_slice %26 {offsets = [0, 16], sizes = [16, 8], strides = [1, 1]} : vector<16x96xf32> to vector<16x8xf32>
    %79 = vector.shape_cast %78 : vector<16x8xf32> to vector<2x8x8xf32>
    %80 = vector.extract_strided_slice %26 {offsets = [0, 48], sizes = [16, 8], strides = [1, 1]} : vector<16x96xf32> to vector<16x8xf32>
    %81 = vector.shape_cast %80 : vector<16x8xf32> to vector<2x8x8xf32>
    %82 = vector.extract_strided_slice %26 {offsets = [0, 80], sizes = [16, 8], strides = [1, 1]} : vector<16x96xf32> to vector<16x8xf32>
    %83 = vector.shape_cast %82 : vector<16x8xf32> to vector<2x8x8xf32>
    %cst_29 = arith.constant dense<0.000000e+00> : vector<2x8x8xf32>
    %84 = tpu.matmul %79, %81, %cst_29 {dimension_numbers = #tpu.dot_dimension_numbers<[2], [2], [1], [1], [0, 0, 0, 1, 1, 1], [0], [0]>} : vector<2x8x8xf32>, vector<2x8x8xf32>, vector<2x8x8xf32> -> vector<2x8x8xf32>
    %cst_30 = arith.constant 0.353553385 : f32
    %85 = vector.broadcast %cst_30 : f32 to vector<2x8x8xf32>
    %86 = arith.mulf %84, %85 : vector<2x8x8xf32>
    %cst_31 = arith.constant dense<0xFF800000> : vector<2x8xf32>
    %87 = vector.multi_reduction <maximumf>, %86, %cst_31 [2] : vector<2x8x8xf32> to vector<2x8xf32>
    %88 = vector.shape_cast %87 : vector<2x8xf32> to vector<2x8x1xf32>
    %89 = vector.broadcast %88 : vector<2x8x1xf32> to vector<2x8x8xf32>
    %90 = arith.subf %86, %89 : vector<2x8x8xf32>
    %91 = math.exp %90 : vector<2x8x8xf32>
    %cst_32 = arith.constant dense<0.000000e+00> : vector<2x8xf32>
    %92 = vector.multi_reduction <add>, %91, %cst_32 [2] : vector<2x8x8xf32> to vector<2x8xf32>
    %93 = vector.shape_cast %92 : vector<2x8xf32> to vector<2x8x1xf32>
    %94 = tpu.reciprocal %93 {approx = true} : vector<2x8x1xf32> -> vector<2x8x1xf32>
    %95 = vector.broadcast %94 : vector<2x8x1xf32> to vector<2x8x8xf32>
    %96 = arith.mulf %91, %95 : vector<2x8x8xf32>
    %cst_33 = arith.constant dense<0.000000e+00> : vector<2x8x8xf32>
    %97 = tpu.matmul %96, %83, %cst_33 {dimension_numbers = #tpu.dot_dimension_numbers<[2], [1], [1], [2], [0, 0, 0, 1, 1, 2], [0], [0]>} : vector<2x8x8xf32>, vector<2x8x8xf32>, vector<2x8x8xf32> -> vector<2x8x8xf32>
    %98 = vector.shape_cast %97 : vector<2x8x8xf32> to vector<16x8xf32>
    %c16 = arith.constant 16 : index
    %c0_34 = arith.constant 0 : index
    %99 = vector.load %arg5[%c16, %c0_34] : memref<32x32xf32, #tpu.memory_space<vmem>>, vector<8x32xf32>
    %cst_35 = arith.constant dense<0.000000e+00> : vector<16x32xf32>
    %100 = tpu.matmul %98, %99, %cst_35 {dimension_numbers = #tpu.dot_dimension_numbers<[1], [0], [0], [1], [0, 0, 1, 1], [], []>} : vector<16x8xf32>, vector<8x32xf32>, vector<16x32xf32> -> vector<16x32xf32>
    %101 = arith.addf %77, %100 : vector<16x32xf32>
    %102 = vector.extract_strided_slice %26 {offsets = [0, 24], sizes = [16, 8], strides = [1, 1]} : vector<16x96xf32> to vector<16x8xf32>
    %103 = vector.shape_cast %102 : vector<16x8xf32> to vector<2x8x8xf32>
    %104 = vector.extract_strided_slice %26 {offsets = [0, 56], sizes = [16, 8], strides = [1, 1]} : vector<16x96xf32> to vector<16x8xf32>
    %105 = vector.shape_cast %104 : vector<16x8xf32> to vector<2x8x8xf32>
    %106 = vector.extract_strided_slice %26 {offsets = [0, 88], sizes = [16, 8], strides = [1, 1]} : vector<16x96xf32> to vector<16x8xf32>
    %107 = vector.shape_cast %106 : vector<16x8xf32> to vector<2x8x8xf32>
    %cst_36 = arith.constant dense<0.000000e+00> : vector<2x8x8xf32>
    %108 = tpu.matmul %103, %105, %cst_36 {dimension_numbers = #tpu.dot_dimension_numbers<[2], [2], [1], [1], [0, 0, 0, 1, 1, 1], [0], [0]>} : vector<2x8x8xf32>, vector<2x8x8xf32>, vector<2x8x8xf32> -> vector<2x8x8xf32>
    %cst_37 = arith.constant 0.353553385 : f32
    %109 = vector.broadcast %cst_37 : f32 to vector<2x8x8xf32>
    %110 = arith.mulf %108, %109 : vector<2x8x8xf32>
    %cst_38 = arith.constant dense<0xFF800000> : vector<2x8xf32>
    %111 = vector.multi_reduction <maximumf>, %110, %cst_38 [2] : vector<2x8x8xf32> to vector<2x8xf32>
    %112 = vector.shape_cast %111 : vector<2x8xf32> to vector<2x8x1xf32>
    %113 = vector.broadcast %112 : vector<2x8x1xf32> to vector<2x8x8xf32>
    %114 = arith.subf %110, %113 : vector<2x8x8xf32>
    %115 = math.exp %114 : vector<2x8x8xf32>
    %cst_39 = arith.constant dense<0.000000e+00> : vector<2x8xf32>
    %116 = vector.multi_reduction <add>, %115, %cst_39 [2] : vector<2x8x8xf32> to vector<2x8xf32>
    %117 = vector.shape_cast %116 : vector<2x8xf32> to vector<2x8x1xf32>
    %118 = tpu.reciprocal %117 {approx = true} : vector<2x8x1xf32> -> vector<2x8x1xf32>
    %119 = vector.broadcast %118 : vector<2x8x1xf32> to vector<2x8x8xf32>
    %120 = arith.mulf %115, %119 : vector<2x8x8xf32>
    %cst_40 = arith.constant dense<0.000000e+00> : vector<2x8x8xf32>
    %121 = tpu.matmul %120, %107, %cst_40 {dimension_numbers = #tpu.dot_dimension_numbers<[2], [1], [1], [2], [0, 0, 0, 1, 1, 2], [0], [0]>} : vector<2x8x8xf32>, vector<2x8x8xf32>, vector<2x8x8xf32> -> vector<2x8x8xf32>
    %122 = vector.shape_cast %121 : vector<2x8x8xf32> to vector<16x8xf32>
    %c24 = arith.constant 24 : index
    %c0_41 = arith.constant 0 : index
    %123 = vector.load %arg5[%c24, %c0_41] : memref<32x32xf32, #tpu.memory_space<vmem>>, vector<8x32xf32>
    %cst_42 = arith.constant dense<0.000000e+00> : vector<16x32xf32>
    %124 = tpu.matmul %122, %123, %cst_42 {dimension_numbers = #tpu.dot_dimension_numbers<[1], [0], [0], [1], [0, 0, 1, 1], [], []>} : vector<16x8xf32>, vector<8x32xf32>, vector<16x32xf32> -> vector<16x32xf32>
    %125 = arith.addf %101, %124 : vector<16x32xf32>
    %126 = arith.addf %0, %125 : vector<16x32xf32>
    %c0_43 = arith.constant 0 : index
    %c0_44 = arith.constant 0 : index
    %127 = vector.load %arg7[%c0_43, %c0_44] : memref<1x32xf32, #tpu.memory_space<vmem>>, vector<1x32xf32>
    %c0_45 = arith.constant 0 : index
    %c0_46 = arith.constant 0 : index
    %128 = vector.load %arg8[%c0_45, %c0_46] : memref<1x32xf32, #tpu.memory_space<vmem>>, vector<1x32xf32>
    %cst_47 = arith.constant dense<0.000000e+00> : vector<16xf32>
    %129 = vector.multi_reduction <add>, %126, %cst_47 [1] : vector<16x32xf32> to vector<16xf32>
    %130 = vector.shape_cast %129 : vector<16xf32> to vector<16x1xf32>
    %cst_48 = arith.constant 3.200000e+01 : f32
    %131 = vector.broadcast %cst_48 : f32 to vector<16x1xf32>
    %132 = arith.divf %130, %131 : vector<16x1xf32>
    %133 = vector.broadcast %132 : vector<16x1xf32> to vector<16x32xf32>
    %134 = arith.subf %126, %133 : vector<16x32xf32>
    %135 = arith.mulf %134, %134 : vector<16x32xf32>
    %cst_49 = arith.constant dense<0.000000e+00> : vector<16xf32>
    %136 = vector.multi_reduction <add>, %135, %cst_49 [1] : vector<16x32xf32> to vector<16xf32>
    %137 = vector.shape_cast %136 : vector<16xf32> to vector<16x1xf32>
    %cst_50 = arith.constant 3.200000e+01 : f32
    %138 = vector.broadcast %cst_50 : f32 to vector<16x1xf32>
    %139 = arith.divf %137, %138 : vector<16x1xf32>
    %140 = vector.broadcast %132 : vector<16x1xf32> to vector<16x32xf32>
    %141 = arith.subf %126, %140 : vector<16x32xf32>
    %cst_51 = arith.constant 9.99999974E-6 : f32
    %142 = vector.broadcast %cst_51 : f32 to vector<16x1xf32>
    %143 = arith.addf %139, %142 : vector<16x1xf32>
    %144 = math.rsqrt %143 : vector<16x1xf32>
    %145 = vector.broadcast %144 : vector<16x1xf32> to vector<16x32xf32>
    %146 = arith.mulf %141, %145 : vector<16x32xf32>
    %147 = vector.broadcast %127 : vector<1x32xf32> to vector<16x32xf32>
    %148 = arith.mulf %146, %147 : vector<16x32xf32>
    %149 = vector.broadcast %128 : vector<1x32xf32> to vector<16x32xf32>
    %150 = arith.addf %148, %149 : vector<16x32xf32>
    %c0_52 = arith.constant 0 : index
    %c0_53 = arith.constant 0 : index
    %151 = vector.load %arg9[%c0_52, %c0_53] : memref<32x64xf32, #tpu.memory_space<vmem>>, vector<32x64xf32>
    %cst_54 = arith.constant dense<0.000000e+00> : vector<16x64xf32>
    %152 = tpu.matmul %150, %151, %cst_54 {dimension_numbers = #tpu.dot_dimension_numbers<[1], [0], [0], [1], [0, 0, 1, 1], [], []>} : vector<16x32xf32>, vector<32x64xf32>, vector<16x64xf32> -> vector<16x64xf32>
    %c0_55 = arith.constant 0 : index
    %c0_56 = arith.constant 0 : index
    %153 = vector.load %arg10[%c0_55, %c0_56] : memref<1x64xf32, #tpu.memory_space<vmem>>, vector<1x64xf32>
    %154 = vector.broadcast %153 : vector<1x64xf32> to vector<16x64xf32>
    %155 = arith.addf %152, %154 : vector<16x64xf32>
    %cst_57 = arith.constant 5.000000e-01 : f32
    %156 = vector.broadcast %cst_57 : f32 to vector<16x64xf32>
    %157 = arith.mulf %156, %155 : vector<16x64xf32>
    %cst_58 = arith.constant 0.707106769 : f32
    %158 = vector.broadcast %cst_58 : f32 to vector<16x64xf32>
    %159 = arith.mulf %155, %158 : vector<16x64xf32>
    %cst_59 = arith.constant 0.000000e+00 : f32
    %160 = vector.broadcast %cst_59 : f32 to vector<16x64xf32>
    %161 = arith.cmpf oge, %159, %160 : vector<16x64xf32>
    %cst_60 = arith.constant 1.000000e+00 : f32
    %cst_61 = arith.constant -1.000000e+00 : f32
    %162 = vector.broadcast %cst_60 : f32 to vector<16x64xf32>
    %163 = vector.broadcast %cst_61 : f32 to vector<16x64xf32>
    %164 = arith.select %161, %162, %163 : vector<16x64xi1>, vector<16x64xf32>
    %165 = math.absf %159 : vector<16x64xf32>
    %cst_62 = arith.constant 0.327591091 : f32
    %166 = vector.broadcast %cst_62 : f32 to vector<16x64xf32>
    %167 = arith.mulf %166, %165 : vector<16x64xf32>
    %cst_63 = arith.constant 1.000000e+00 : f32
    %168 = vector.broadcast %cst_63 : f32 to vector<16x64xf32>
    %169 = arith.addf %168, %167 : vector<16x64xf32>
    %cst_64 = arith.constant 1.000000e+00 : f32
    %170 = vector.broadcast %cst_64 : f32 to vector<16x64xf32>
    %171 = arith.divf %170, %169 : vector<16x64xf32>
    %cst_65 = arith.constant 1.06140542 : f32
    %172 = vector.broadcast %cst_65 : f32 to vector<16x64xf32>
    %173 = arith.mulf %172, %171 : vector<16x64xf32>
    %cst_66 = arith.constant -1.45315206 : f32
    %174 = vector.broadcast %cst_66 : f32 to vector<16x64xf32>
    %175 = arith.addf %173, %174 : vector<16x64xf32>
    %176 = arith.mulf %175, %171 : vector<16x64xf32>
    %cst_67 = arith.constant 1.42141378 : f32
    %177 = vector.broadcast %cst_67 : f32 to vector<16x64xf32>
    %178 = arith.addf %176, %177 : vector<16x64xf32>
    %179 = arith.mulf %178, %171 : vector<16x64xf32>
    %cst_68 = arith.constant -0.284496725 : f32
    %180 = vector.broadcast %cst_68 : f32 to vector<16x64xf32>
    %181 = arith.addf %179, %180 : vector<16x64xf32>
    %182 = arith.mulf %181, %171 : vector<16x64xf32>
    %cst_69 = arith.constant 0.254829586 : f32
    %183 = vector.broadcast %cst_69 : f32 to vector<16x64xf32>
    %184 = arith.addf %182, %183 : vector<16x64xf32>
    %185 = arith.mulf %184, %171 : vector<16x64xf32>
    %cst_70 = arith.constant 0.000000e+00 : f32
    %186 = vector.broadcast %cst_70 : f32 to vector<16x64xf32>
    %187 = arith.subf %186, %165 : vector<16x64xf32>
    %188 = arith.mulf %187, %165 : vector<16x64xf32>
    %189 = math.exp %188 : vector<16x64xf32>
    %190 = arith.mulf %185, %189 : vector<16x64xf32>
    %cst_71 = arith.constant 1.000000e+00 : f32
    %191 = vector.broadcast %cst_71 : f32 to vector<16x64xf32>
    %192 = arith.subf %191, %190 : vector<16x64xf32>
    %193 = arith.mulf %164, %192 : vector<16x64xf32>
    %cst_72 = arith.constant 1.000000e+00 : f32
    %194 = vector.broadcast %cst_72 : f32 to vector<16x64xf32>
    %195 = arith.addf %194, %193 : vector<16x64xf32>
    %196 = arith.mulf %157, %195 : vector<16x64xf32>
    %c0_73 = arith.constant 0 : index
    %c0_74 = arith.constant 0 : index
    %197 = vector.load %arg11[%c0_73, %c0_74] : memref<64x32xf32, #tpu.memory_space<vmem>>, vector<64x32xf32>
    %cst_75 = arith.constant dense<0.000000e+00> : vector<16x32xf32>
    %198 = tpu.matmul %196, %197, %cst_75 {dimension_numbers = #tpu.dot_dimension_numbers<[1], [0], [0], [1], [0, 0, 1, 1], [], []>} : vector<16x64xf32>, vector<64x32xf32>, vector<16x32xf32> -> vector<16x32xf32>
    %c0_76 = arith.constant 0 : index
    %c0_77 = arith.constant 0 : index
    %199 = vector.load %arg12[%c0_76, %c0_77] : memref<1x32xf32, #tpu.memory_space<vmem>>, vector<1x32xf32>
    %200 = vector.broadcast %199 : vector<1x32xf32> to vector<16x32xf32>
    %201 = arith.addf %198, %200 : vector<16x32xf32>
    %202 = arith.addf %126, %201 : vector<16x32xf32>
    %c0_78 = arith.constant 0 : index
    %c0_79 = arith.constant 0 : index
    %203 = vector.load %arg13[%c0_78, %c0_79] : memref<16x32xf32, #tpu.memory_space<vmem>>, vector<16x32xf32>
    tpu.vector_store %arg13[%c0_78, %c0_79], %202 {strides = array<i32>} : memref<16x32xf32, #tpu.memory_space<vmem>>, vector<16x32xf32>,
    return
  }
  func.func @transform_0(%arg0: i32) -> (i32, i32) {
    %c0_i32 = arith.constant 0 : i32
    %c0_i32_0 = arith.constant 0 : i32
    return %arg0, %c0_i32 : i32, i32
  }
  func.func @transform_1(%arg0: i32) -> (i32, i32) {
    %c0_i32 = arith.constant 0 : i32
    %c0_i32_0 = arith.constant 0 : i32
    %c0_i32_1 = arith.constant 0 : i32
    return %c0_i32, %c0_i32_0 : i32, i32
  }
  func.func @transform_2(%arg0: i32) -> (i32, i32) {
    %c0_i32 = arith.constant 0 : i32
    %c0_i32_0 = arith.constant 0 : i32
    %c0_i32_1 = arith.constant 0 : i32
    return %c0_i32, %c0_i32_0 : i32, i32
  }
  func.func @transform_3(%arg0: i32) -> (i32, i32) {
    %c0_i32 = arith.constant 0 : i32
    %c0_i32_0 = arith.constant 0 : i32
    %c0_i32_1 = arith.constant 0 : i32
    return %c0_i32, %c0_i32_0 : i32, i32
  }
  func.func @transform_4(%arg0: i32) -> (i32, i32) {
    %c0_i32 = arith.constant 0 : i32
    %c0_i32_0 = arith.constant 0 : i32
    %c0_i32_1 = arith.constant 0 : i32
    return %c0_i32, %c0_i32_0 : i32, i32
  }
  func.func @transform_5(%arg0: i32) -> (i32, i32) {
    %c0_i32 = arith.constant 0 : i32
    %c0_i32_0 = arith.constant 0 : i32
    %c0_i32_1 = arith.constant 0 : i32
    return %c0_i32, %c0_i32_0 : i32, i32
  }
  func.func @transform_6(%arg0: i32) -> (i32, i32) {
    %c0_i32 = arith.constant 0 : i32
    %c0_i32_0 = arith.constant 0 : i32
    %c0_i32_1 = arith.constant 0 : i32
    return %c0_i32, %c0_i32_0 : i32, i32
  }
  func.func @transform_7(%arg0: i32) -> (i32, i32) {
    %c0_i32 = arith.constant 0 : i32
    %c0_i32_0 = arith.constant 0 : i32
    %c0_i32_1 = arith.constant 0 : i32
    return %c0_i32, %c0_i32_0 : i32, i32
  }
  func.func @transform_8(%arg0: i32) -> (i32, i32) {
    %c0_i32 = arith.constant 0 : i32
    %c0_i32_0 = arith.constant 0 : i32
    %c0_i32_1 = arith.constant 0 : i32
    return %c0_i32, %c0_i32_0 : i32, i32
  }
  func.func @transform_9(%arg0: i32) -> (i32, i32) {
    %c0_i32 = arith.constant 0 : i32
    %c0_i32_0 = arith.constant 0 : i32
    %c0_i32_1 = arith.constant 0 : i32
    return %c0_i32, %c0_i32_0 : i32, i32
  }
  func.func @transform_10(%arg0: i32) -> (i32, i32) {
    %c0_i32 = arith.constant 0 : i32
    %c0_i32_0 = arith.constant 0 : i32
    %c0_i32_1 = arith.constant 0 : i32
    return %c0_i32, %c0_i32_0 : i32, i32
  }
  func.func @transform_11(%arg0: i32) -> (i32, i32) {
    %c0_i32 = arith.constant 0 : i32
    %c0_i32_0 = arith.constant 0 : i32
    %c0_i32_1 = arith.constant 0 : i32
    return %c0_i32, %c0_i32_0 : i32, i32
  }
  func.func @transform_12(%arg0: i32) -> (i32, i32) {
    %c0_i32 = arith.constant 0 : i32
    %c0_i32_0 = arith.constant 0 : i32
    return %arg0, %c0_i32 : i32, i32
  }
}

module attributes {stable_mosaic.version = 11 : i64} {
  func.func @_encoder_block_kernel(%arg0: i32, %arg1: memref<16x32xf32, #tpu.memory_space<vmem>>, %arg2: memref<1x32xf32, #tpu.memory_space<vmem>>, %arg3: memref<1x32xf32, #tpu.memory_space<vmem>>, %arg4: memref<32x96xf32, #tpu.memory_space<vmem>>, %arg5: memref<32x32xf32, #tpu.memory_space<vmem>>, %arg6: memref<1x32xf32, #tpu.memory_space<vmem>>, %arg7: memref<1x32xf32, #tpu.memory_space<vmem>>, %arg8: memref<1x32xf32, #tpu.memory_space<vmem>>, %arg9: memref<32x64xf32, #tpu.memory_space<vmem>>, %arg10: memref<1x64xf32, #tpu.memory_space<vmem>>, %arg11: memref<64x32xf32, #tpu.memory_space<vmem>>, %arg12: memref<1x32xf32, #tpu.memory_space<vmem>>, %arg13: memref<16x32xf32, #tpu.memory_space<vmem>>) attributes {dimension_semantics = [#tpu.dimension_semantics<parallel>], iteration_bounds = array<i64: 1>, scalar_prefetch = 0 : i64, scratch_operands = 0 : i64, tpu.core_type = #tpu.core_type<tc>, window_params = [{transform_indices = @transform_0, window_bounds = array<i64: 16, 32>}, {pipeline_mode = #tpu.pipeline_mode<synchronous>, transform_indices = @transform_1, window_bounds = array<i64: 1, 32>}, {pipeline_mode = #tpu.pipeline_mode<synchronous>, transform_indices = @transform_2, window_bounds = array<i64: 1, 32>}, {pipeline_mode = #tpu.pipeline_mode<synchronous>, transform_indices = @transform_3, window_bounds = array<i64: 32, 96>}, {pipeline_mode = #tpu.pipeline_mode<synchronous>, transform_indices = @transform_4, window_bounds = array<i64: 32, 32>}, {pipeline_mode = #tpu.pipeline_mode<synchronous>, transform_indices = @transform_5, window_bounds = array<i64: 1, 32>}, {pipeline_mode = #tpu.pipeline_mode<synchronous>, transform_indices = @transform_6, window_bounds = array<i64: 1, 32>}, {pipeline_mode = #tpu.pipeline_mode<synchronous>, transform_indices = @transform_7, window_bounds = array<i64: 1, 32>}, {pipeline_mode = #tpu.pipeline_mode<synchronous>, transform_indices = @transform_8, window_bounds = array<i64: 32, 64>}, {pipeline_mode = #tpu.pipeline_mode<synchronous>, transform_indices = @transform_9, window_bounds = array<i64: 1, 64>}, {pipeline_mode = #tpu.pipeline_mode<synchronous>, transform_indices = @transform_10, window_bounds = array<i64: 64, 32>}, {pipeline_mode = #tpu.pipeline_mode<synchronous>, transform_indices = @transform_11, window_bounds = array<i64: 1, 32>}, {transform_indices = @transform_12, window_bounds = array<i64: 16, 32>}]} {
    %c0 = arith.constant 0 : index
    %c0_0 = arith.constant 0 : index
    %0 = vector.load %arg1[%c0, %c0_0] : memref<16x32xf32, #tpu.memory_space<vmem>>, vector<16x32xf32>
    %c0_1 = arith.constant 0 : index
    %c0_2 = arith.constant 0 : index
    %1 = vector.load %arg2[%c0_1, %c0_2] : memref<1x32xf32, #tpu.memory_space<vmem>>, vector<1x32xf32>
    %c0_3 = arith.constant 0 : index
    %c0_4 = arith.constant 0 : index
    %2 = vector.load %arg3[%c0_3, %c0_4] : memref<1x32xf32, #tpu.memory_space<vmem>>, vector<1x32xf32>
    %cst = arith.constant dense<0.000000e+00> : vector<16xf32>
    %3 = vector.multi_reduction <add>, %0, %cst [1] : vector<16x32xf32> to vector<16xf32>
    %4 = vector.shape_cast %3 : vector<16xf32> to vector<16x1xf32>
    %cst_5 = arith.constant 3.200000e+01 : f32
    %5 = vector.broadcast %cst_5 : f32 to vector<16x1xf32>
    %6 = arith.divf %4, %5 : vector<16x1xf32>
    %7 = vector.broadcast %6 : vector<16x1xf32> to vector<16x32xf32>
    %8 = arith.subf %0, %7 : vector<16x32xf32>
    %9 = arith.mulf %8, %8 : vector<16x32xf32>
    %cst_6 = arith.constant dense<0.000000e+00> : vector<16xf32>
    %10 = vector.multi_reduction <add>, %9, %cst_6 [1] : vector<16x32xf32> to vector<16xf32>
    %11 = vector.shape_cast %10 : vector<16xf32> to vector<16x1xf32>
    %cst_7 = arith.constant 3.200000e+01 : f32
    %12 = vector.broadcast %cst_7 : f32 to vector<16x1xf32>
    %13 = arith.divf %11, %12 : vector<16x1xf32>
    %14 = vector.broadcast %6 : vector<16x1xf32> to vector<16x32xf32>
    %15 = arith.subf %0, %14 : vector<16x32xf32>
    %cst_8 = arith.constant 9.99999974E-6 : f32
    %16 = vector.broadcast %cst_8 : f32 to vector<16x1xf32>
    %17 = arith.addf %13, %16 : vector<16x1xf32>
    %18 = math.rsqrt %17 : vector<16x1xf32>
    %19 = vector.broadcast %18 : vector<16x1xf32> to vector<16x32xf32>
    %20 = arith.mulf %15, %19 : vector<16x32xf32>
    %21 = vector.broadcast %1 : vector<1x32xf32> to vector<16x32xf32>
    %22 = arith.mulf %20, %21 : vector<16x32xf32>
    %23 = vector.broadcast %2 : vector<1x32xf32> to vector<16x32xf32>
    %24 = arith.addf %22, %23 : vector<16x32xf32>
    %c0_9 = arith.constant 0 : index
    %c0_10 = arith.constant 0 : index
    %25 = vector.load %arg4[%c0_9, %c0_10] : memref<32x96xf32, #tpu.memory_space<vmem>>, vector<32x96xf32>
    %cst_11 = arith.constant dense<0.000000e+00> : vector<16x96xf32>
    %26 = tpu.matmul %24, %25, %cst_11 {dimension_numbers = #tpu.dot_dimension_numbers<[1], [0], [0], [1], [0, 0, 1, 1], [], []>} : vector<16x32xf32>, vector<32x96xf32>, vector<16x96xf32> -> vector<16x96xf32>
    %c0_12 = arith.constant 0 : index
    %c0_13 = arith.constant 0 : index
    %27 = vector.load %arg6[%c0_12, %c0_13] : memref<1x32xf32, #tpu.memory_space<vmem>>, vector<1x32xf32>
    %28 = vector.shape_cast %27 : vector<1x32xf32> to vector<1x32xf32>
    %29 = vector.broadcast %28 : vector<1x32xf32> to vector<16x32xf32>
    %30 = vector.extract_strided_slice %26 {offsets = [0, 0], sizes = [16, 8], strides = [1, 1]} : vector<16x96xf32> to vector<16x8xf32>
    %31 = vector.shape_cast %30 : vector<16x8xf32> to vector<2x8x8xf32>
    %32 = vector.extract_strided_slice %26 {offsets = [0, 32], sizes = [16, 8], strides = [1, 1]} : vector<16x96xf32> to vector<16x8xf32>
    %33 = vector.shape_cast %32 : vector<16x8xf32> to vector<2x8x8xf32>
    %34 = vector.extract_strided_slice %26 {offsets = [0, 64], sizes = [16, 8], strides = [1, 1]} : vector<16x96xf32> to vector<16x8xf32>
    %35 = vector.shape_cast %34 : vector<16x8xf32> to vector<2x8x8xf32>
    %cst_14 = arith.constant dense<0.000000e+00> : vector<2x8x8xf32>
    %36 = tpu.matmul %31, %33, %cst_14 {dimension_numbers = #tpu.dot_dimension_numbers<[2], [2], [1], [1], [0, 0, 0, 1, 1, 1], [0], [0]>} : vector<2x8x8xf32>, vector<2x8x8xf32>, vector<2x8x8xf32> -> vector<2x8x8xf32>
    %cst_15 = arith.constant 0.353553385 : f32
    %37 = vector.broadcast %cst_15 : f32 to vector<2x8x8xf32>
    %38 = arith.mulf %36, %37 : vector<2x8x8xf32>
    %cst_16 = arith.constant dense<0xFF800000> : vector<2x8xf32>
    %39 = vector.multi_reduction <maximumf>, %38, %cst_16 [2] : vector<2x8x8xf32> to vector<2x8xf32>
    %40 = vector.shape_cast %39 : vector<2x8xf32> to vector<2x8x1xf32>
    %41 = vector.broadcast %40 : vector<2x8x1xf32> to vector<2x8x8xf32>
    %42 = arith.subf %38, %41 : vector<2x8x8xf32>
    %43 = math.exp %42 : vector<2x8x8xf32>
    %cst_17 = arith.constant dense<0.000000e+00> : vector<2x8xf32>
    %44 = vector.multi_reduction <add>, %43, %cst_17 [2] : vector<2x8x8xf32> to vector<2x8xf32>
    %45 = vector.shape_cast %44 : vector<2x8xf32> to vector<2x8x1xf32>
    %46 = tpu.reciprocal %45 {approx = true} : vector<2x8x1xf32> -> vector<2x8x1xf32>
    %47 = vector.broadcast %46 : vector<2x8x1xf32> to vector<2x8x8xf32>
    %48 = arith.mulf %43, %47 : vector<2x8x8xf32>
    %cst_18 = arith.constant dense<0.000000e+00> : vector<2x8x8xf32>
    %49 = tpu.matmul %48, %35, %cst_18 {dimension_numbers = #tpu.dot_dimension_numbers<[2], [1], [1], [2], [0, 0, 0, 1, 1, 2], [0], [0]>} : vector<2x8x8xf32>, vector<2x8x8xf32>, vector<2x8x8xf32> -> vector<2x8x8xf32>
    %50 = vector.shape_cast %49 : vector<2x8x8xf32> to vector<16x8xf32>
    %c0_19 = arith.constant 0 : index
    %c0_20 = arith.constant 0 : index
    %51 = vector.load %arg5[%c0_19, %c0_20] : memref<32x32xf32, #tpu.memory_space<vmem>>, vector<8x32xf32>
    %cst_21 = arith.constant dense<0.000000e+00> : vector<16x32xf32>
    %52 = tpu.matmul %50, %51, %cst_21 {dimension_numbers = #tpu.dot_dimension_numbers<[1], [0], [0], [1], [0, 0, 1, 1], [], []>} : vector<16x8xf32>, vector<8x32xf32>, vector<16x32xf32> -> vector<16x32xf32>
    %53 = arith.addf %29, %52 : vector<16x32xf32>
    %54 = vector.extract_strided_slice %26 {offsets = [0, 8], sizes = [16, 8], strides = [1, 1]} : vector<16x96xf32> to vector<16x8xf32>
    %55 = vector.shape_cast %54 : vector<16x8xf32> to vector<2x8x8xf32>
    %56 = vector.extract_strided_slice %26 {offsets = [0, 40], sizes = [16, 8], strides = [1, 1]} : vector<16x96xf32> to vector<16x8xf32>
    %57 = vector.shape_cast %56 : vector<16x8xf32> to vector<2x8x8xf32>
    %58 = vector.extract_strided_slice %26 {offsets = [0, 72], sizes = [16, 8], strides = [1, 1]} : vector<16x96xf32> to vector<16x8xf32>
    %59 = vector.shape_cast %58 : vector<16x8xf32> to vector<2x8x8xf32>
    %cst_22 = arith.constant dense<0.000000e+00> : vector<2x8x8xf32>
    %60 = tpu.matmul %55, %57, %cst_22 {dimension_numbers = #tpu.dot_dimension_numbers<[2], [2], [1], [1], [0, 0, 0, 1, 1, 1], [0], [0]>} : vector<2x8x8xf32>, vector<2x8x8xf32>, vector<2x8x8xf32> -> vector<2x8x8xf32>
    %cst_23 = arith.constant 0.353553385 : f32
    %61 = vector.broadcast %cst_23 : f32 to vector<2x8x8xf32>
    %62 = arith.mulf %60, %61 : vector<2x8x8xf32>
    %cst_24 = arith.constant dense<0xFF800000> : vector<2x8xf32>
    %63 = vector.multi_reduction <maximumf>, %62, %cst_24 [2] : vector<2x8x8xf32> to vector<2x8xf32>
    %64 = vector.shape_cast %63 : vector<2x8xf32> to vector<2x8x1xf32>
    %65 = vector.broadcast %64 : vector<2x8x1xf32> to vector<2x8x8xf32>
    %66 = arith.subf %62, %65 : vector<2x8x8xf32>
    %67 = math.exp %66 : vector<2x8x8xf32>
    %cst_25 = arith.constant dense<0.000000e+00> : vector<2x8xf32>
    %68 = vector.multi_reduction <add>, %67, %cst_25 [2] : vector<2x8x8xf32> to vector<2x8xf32>
    %69 = vector.shape_cast %68 : vector<2x8xf32> to vector<2x8x1xf32>
    %70 = tpu.reciprocal %69 {approx = true} : vector<2x8x1xf32> -> vector<2x8x1xf32>
    %71 = vector.broadcast %70 : vector<2x8x1xf32> to vector<2x8x8xf32>
    %72 = arith.mulf %67, %71 : vector<2x8x8xf32>
    %cst_26 = arith.constant dense<0.000000e+00> : vector<2x8x8xf32>
    %73 = tpu.matmul %72, %59, %cst_26 {dimension_numbers = #tpu.dot_dimension_numbers<[2], [1], [1], [2], [0, 0, 0, 1, 1, 2], [0], [0]>} : vector<2x8x8xf32>, vector<2x8x8xf32>, vector<2x8x8xf32> -> vector<2x8x8xf32>
    %74 = vector.shape_cast %73 : vector<2x8x8xf32> to vector<16x8xf32>
    %c8 = arith.constant 8 : index
    %c0_27 = arith.constant 0 : index
    %75 = vector.load %arg5[%c8, %c0_27] : memref<32x32xf32, #tpu.memory_space<vmem>>, vector<8x32xf32>
    %cst_28 = arith.constant dense<0.000000e+00> : vector<16x32xf32>
    %76 = tpu.matmul %74, %75, %cst_28 {dimension_numbers = #tpu.dot_dimension_numbers<[1], [0], [0], [1], [0, 0, 1, 1], [], []>} : vector<16x8xf32>, vector<8x32xf32>, vector<16x32xf32> -> vector<16x32xf32>
    %77 = arith.addf %53, %76 : vector<16x32xf32>
    %78 = vector.extract_strided_slice %26 {offsets = [0, 16], sizes = [16, 8], strides = [1, 1]} : vector<16x96xf32> to vector<16x8xf32>
    %79 = vector.shape_cast %78 : vector<16x8xf32> to vector<2x8x8xf32>
    %80 = vector.extract_strided_slice %26 {offsets = [0, 48], sizes = [16, 8], strides = [1, 1]} : vector<16x96xf32> to vector<16x8xf32>
    %81 = vector.shape_cast %80 : vector<16x8xf32> to vector<2x8x8xf32>
    %82 = vector.extract_strided_slice %26 {offsets = [0, 80], sizes = [16, 8], strides = [1, 1]} : vector<16x96xf32> to vector<16x8xf32>
    %83 = vector.shape_cast %82 : vector<16x8xf32> to vector<2x8x8xf32>
    %cst_29 = arith.constant dense<0.000000e+00> : vector<2x8x8xf32>
    %84 = tpu.matmul %79, %81, %cst_29 {dimension_numbers = #tpu.dot_dimension_numbers<[2], [2], [1], [1], [0, 0, 0, 1, 1, 1], [0], [0]>} : vector<2x8x8xf32>, vector<2x8x8xf32>, vector<2x8x8xf32> -> vector<2x8x8xf32>
    %cst_30 = arith.constant 0.353553385 : f32
    %85 = vector.broadcast %cst_30 : f32 to vector<2x8x8xf32>
    %86 = arith.mulf %84, %85 : vector<2x8x8xf32>
    %cst_31 = arith.constant dense<0xFF800000> : vector<2x8xf32>
    %87 = vector.multi_reduction <maximumf>, %86, %cst_31 [2] : vector<2x8x8xf32> to vector<2x8xf32>
    %88 = vector.shape_cast %87 : vector<2x8xf32> to vector<2x8x1xf32>
    %89 = vector.broadcast %88 : vector<2x8x1xf32> to vector<2x8x8xf32>
    %90 = arith.subf %86, %89 : vector<2x8x8xf32>
    %91 = math.exp %90 : vector<2x8x8xf32>
    %cst_32 = arith.constant dense<0.000000e+00> : vector<2x8xf32>
    %92 = vector.multi_reduction <add>, %91, %cst_32 [2] : vector<2x8x8xf32> to vector<2x8xf32>
    %93 = vector.shape_cast %92 : vector<2x8xf32> to vector<2x8x1xf32>
    %94 = tpu.reciprocal %93 {approx = true} : vector<2x8x1xf32> -> vector<2x8x1xf32>
    %95 = vector.broadcast %94 : vector<2x8x1xf32> to vector<2x8x8xf32>
    %96 = arith.mulf %91, %95 : vector<2x8x8xf32>
    %cst_33 = arith.constant dense<0.000000e+00> : vector<2x8x8xf32>
    %97 = tpu.matmul %96, %83, %cst_33 {dimension_numbers = #tpu.dot_dimension_numbers<[2], [1], [1], [2], [0, 0, 0, 1, 1, 2], [0], [0]>} : vector<2x8x8xf32>, vector<2x8x8xf32>, vector<2x8x8xf32> -> vector<2x8x8xf32>
    %98 = vector.shape_cast %97 : vector<2x8x8xf32> to vector<16x8xf32>
    %c16 = arith.constant 16 : index
    %c0_34 = arith.constant 0 : index
    %99 = vector.load %arg5[%c16, %c0_34] : memref<32x32xf32, #tpu.memory_space<vmem>>, vector<8x32xf32>
    %cst_35 = arith.constant dense<0.000000e+00> : vector<16x32xf32>
    %100 = tpu.matmul %98, %99, %cst_35 {dimension_numbers = #tpu.dot_dimension_numbers<[1], [0], [0], [1], [0, 0, 1, 1], [], []>} : vector<16x8xf32>, vector<8x32xf32>, vector<16x32xf32> -> vector<16x32xf32>
    %101 = arith.addf %77, %100 : vector<16x32xf32>
    %102 = vector.extract_strided_slice %26 {offsets = [0, 24], sizes = [16, 8], strides = [1, 1]} : vector<16x96xf32> to vector<16x8xf32>
    %103 = vector.shape_cast %102 : vector<16x8xf32> to vector<2x8x8xf32>
    %104 = vector.extract_strided_slice %26 {offsets = [0, 56], sizes = [16, 8], strides = [1, 1]} : vector<16x96xf32> to vector<16x8xf32>
    %105 = vector.shape_cast %104 : vector<16x8xf32> to vector<2x8x8xf32>
    %106 = vector.extract_strided_slice %26 {offsets = [0, 88], sizes = [16, 8], strides = [1, 1]} : vector<16x96xf32> to vector<16x8xf32>
    %107 = vector.shape_cast %106 : vector<16x8xf32> to vector<2x8x8xf32>
    %cst_36 = arith.constant dense<0.000000e+00> : vector<2x8x8xf32>
    %108 = tpu.matmul %103, %105, %cst_36 {dimension_numbers = #tpu.dot_dimension_numbers<[2], [2], [1], [1], [0, 0, 0, 1, 1, 1], [0], [0]>} : vector<2x8x8xf32>, vector<2x8x8xf32>, vector<2x8x8xf32> -> vector<2x8x8xf32>
    %cst_37 = arith.constant 0.353553385 : f32
    %109 = vector.broadcast %cst_37 : f32 to vector<2x8x8xf32>
    %110 = arith.mulf %108, %109 : vector<2x8x8xf32>
    %cst_38 = arith.constant dense<0xFF800000> : vector<2x8xf32>
    %111 = vector.multi_reduction <maximumf>, %110, %cst_38 [2] : vector<2x8x8xf32> to vector<2x8xf32>
    %112 = vector.shape_cast %111 : vector<2x8xf32> to vector<2x8x1xf32>
    %113 = vector.broadcast %112 : vector<2x8x1xf32> to vector<2x8x8xf32>
    %114 = arith.subf %110, %113 : vector<2x8x8xf32>
    %115 = math.exp %114 : vector<2x8x8xf32>
    %cst_39 = arith.constant dense<0.000000e+00> : vector<2x8xf32>
    %116 = vector.multi_reduction <add>, %115, %cst_39 [2] : vector<2x8x8xf32> to vector<2x8xf32>
    %117 = vector.shape_cast %116 : vector<2x8xf32> to vector<2x8x1xf32>
    %118 = tpu.reciprocal %117 {approx = true} : vector<2x8x1xf32> -> vector<2x8x1xf32>
    %119 = vector.broadcast %118 : vector<2x8x1xf32> to vector<2x8x8xf32>
    %120 = arith.mulf %115, %119 : vector<2x8x8xf32>
    %cst_40 = arith.constant dense<0.000000e+00> : vector<2x8x8xf32>
    %121 = tpu.matmul %120, %107, %cst_40 {dimension_numbers = #tpu.dot_dimension_numbers<[2], [1], [1], [2], [0, 0, 0, 1, 1, 2], [0], [0]>} : vector<2x8x8xf32>, vector<2x8x8xf32>, vector<2x8x8xf32> -> vector<2x8x8xf32>
    %122 = vector.shape_cast %121 : vector<2x8x8xf32> to vector<16x8xf32>
    %c24 = arith.constant 24 : index
    %c0_41 = arith.constant 0 : index
    %123 = vector.load %arg5[%c24, %c0_41] : memref<32x32xf32, #tpu.memory_space<vmem>>, vector<8x32xf32>
    %cst_42 = arith.constant dense<0.000000e+00> : vector<16x32xf32>
    %124 = tpu.matmul %122, %123, %cst_42 {dimension_numbers = #tpu.dot_dimension_numbers<[1], [0], [0], [1], [0, 0, 1, 1], [], []>} : vector<16x8xf32>, vector<8x32xf32>, vector<16x32xf32> -> vector<16x32xf32>
    %125 = arith.addf %101, %124 : vector<16x32xf32>
    %126 = arith.addf %0, %125 : vector<16x32xf32>
    %c0_43 = arith.constant 0 : index
    %c0_44 = arith.constant 0 : index
    %127 = vector.load %arg7[%c0_43, %c0_44] : memref<1x32xf32, #tpu.memory_space<vmem>>, vector<1x32xf32>
    %c0_45 = arith.constant 0 : index
    %c0_46 = arith.constant 0 : index
    %128 = vector.load %arg8[%c0_45, %c0_46] : memref<1x32xf32, #tpu.memory_space<vmem>>, vector<1x32xf32>
    %cst_47 = arith.constant dense<0.000000e+00> : vector<16xf32>
    %129 = vector.multi_reduction <add>, %126, %cst_47 [1] : vector<16x32xf32> to vector<16xf32>
    %130 = vector.shape_cast %129 : vector<16xf32> to vector<16x1xf32>
    %cst_48 = arith.constant 3.200000e+01 : f32
    %131 = vector.broadcast %cst_48 : f32 to vector<16x1xf32>
    %132 = arith.divf %130, %131 : vector<16x1xf32>
    %133 = vector.broadcast %132 : vector<16x1xf32> to vector<16x32xf32>
    %134 = arith.subf %126, %133 : vector<16x32xf32>
    %135 = arith.mulf %134, %134 : vector<16x32xf32>
    %cst_49 = arith.constant dense<0.000000e+00> : vector<16xf32>
    %136 = vector.multi_reduction <add>, %135, %cst_49 [1] : vector<16x32xf32> to vector<16xf32>
    %137 = vector.shape_cast %136 : vector<16xf32> to vector<16x1xf32>
    %cst_50 = arith.constant 3.200000e+01 : f32
    %138 = vector.broadcast %cst_50 : f32 to vector<16x1xf32>
    %139 = arith.divf %137, %138 : vector<16x1xf32>
    %140 = vector.broadcast %132 : vector<16x1xf32> to vector<16x32xf32>
    %141 = arith.subf %126, %140 : vector<16x32xf32>
    %cst_51 = arith.constant 9.99999974E-6 : f32
    %142 = vector.broadcast %cst_51 : f32 to vector<16x1xf32>
    %143 = arith.addf %139, %142 : vector<16x1xf32>
    %144 = math.rsqrt %143 : vector<16x1xf32>
    %145 = vector.broadcast %144 : vector<16x1xf32> to vector<16x32xf32>
    %146 = arith.mulf %141, %145 : vector<16x32xf32>
    %147 = vector.broadcast %127 : vector<1x32xf32> to vector<16x32xf32>
    %148 = arith.mulf %146, %147 : vector<16x32xf32>
    %149 = vector.broadcast %128 : vector<1x32xf32> to vector<16x32xf32>
    %150 = arith.addf %148, %149 : vector<16x32xf32>
    %c0_52 = arith.constant 0 : index
    %c0_53 = arith.constant 0 : index
    %151 = vector.load %arg9[%c0_52, %c0_53] : memref<32x64xf32, #tpu.memory_space<vmem>>, vector<32x64xf32>
    %cst_54 = arith.constant dense<0.000000e+00> : vector<16x64xf32>
    %152 = tpu.matmul %150, %151, %cst_54 {dimension_numbers = #tpu.dot_dimension_numbers<[1], [0], [0], [1], [0, 0, 1, 1], [], []>} : vector<16x32xf32>, vector<32x64xf32>, vector<16x64xf32> -> vector<16x64xf32>
    %c0_55 = arith.constant 0 : index
    %c0_56 = arith.constant 0 : index
    %153 = vector.load %arg10[%c0_55, %c0_56] : memref<1x64xf32, #tpu.memory_space<vmem>>, vector<1x64xf32>
    %154 = vector.broadcast %153 : vector<1x64xf32> to vector<16x64xf32>
    %155 = arith.addf %152, %154 : vector<16x64xf32>
    %cst_57 = arith.constant 5.000000e-01 : f32
    %156 = vector.broadcast %cst_57 : f32 to vector<16x64xf32>
    %157 = arith.mulf %156, %155 : vector<16x64xf32>
    %cst_58 = arith.constant 0.707106769 : f32
    %158 = vector.broadcast %cst_58 : f32 to vector<16x64xf32>
    %159 = arith.mulf %155, %158 : vector<16x64xf32>
    %cst_59 = arith.constant 0.000000e+00 : f32
    %160 = vector.broadcast %cst_59 : f32 to vector<16x64xf32>
    %161 = arith.cmpf oge, %159, %160 : vector<16x64xf32>
    %cst_60 = arith.constant 1.000000e+00 : f32
    %cst_61 = arith.constant -1.000000e+00 : f32
    %162 = vector.broadcast %cst_60 : f32 to vector<16x64xf32>
    %163 = vector.broadcast %cst_61 : f32 to vector<16x64xf32>
    %164 = arith.select %161, %162, %163 : vector<16x64xi1>, vector<16x64xf32>
    %165 = math.absf %159 : vector<16x64xf32>
    %cst_62 = arith.constant 0.327591091 : f32
    %166 = vector.broadcast %cst_62 : f32 to vector<16x64xf32>
    %167 = arith.mulf %166, %165 : vector<16x64xf32>
    %cst_63 = arith.constant 1.000000e+00 : f32
    %168 = vector.broadcast %cst_63 : f32 to vector<16x64xf32>
    %169 = arith.addf %168, %167 : vector<16x64xf32>
    %cst_64 = arith.constant 1.000000e+00 : f32
    %170 = vector.broadcast %cst_64 : f32 to vector<16x64xf32>
    %171 = arith.divf %170, %169 : vector<16x64xf32>
    %cst_65 = arith.constant 1.06140542 : f32
    %172 = vector.broadcast %cst_65 : f32 to vector<16x64xf32>
    %173 = arith.mulf %172, %171 : vector<16x64xf32>
    %cst_66 = arith.constant -1.45315206 : f32
    %174 = vector.broadcast %cst_66 : f32 to vector<16x64xf32>
    %175 = arith.addf %173, %174 : vector<16x64xf32>
    %176 = arith.mulf %175, %171 : vector<16x64xf32>
    %cst_67 = arith.constant 1.42141378 : f32
    %177 = vector.broadcast %cst_67 : f32 to vector<16x64xf32>
    %178 = arith.addf %176, %177 : vector<16x64xf32>
    %179 = arith.mulf %178, %171 : vector<16x64xf32>
    %cst_68 = arith.constant -0.284496725 : f32
    %180 = vector.broadcast %cst_68 : f32 to vector<16x64xf32>
    %181 = arith.addf %179, %180 : vector<16x64xf32>
    %182 = arith.mulf %181, %171 : vector<16x64xf32>
    %cst_69 = arith.constant 0.254829586 : f32
    %183 = vector.broadcast %cst_69 : f32 to vector<16x64xf32>
    %184 = arith.addf %182, %183 : vector<16x64xf32>
    %185 = arith.mulf %184, %171 : vector<16x64xf32>
    %cst_70 = arith.constant 0.000000e+00 : f32
    %186 = vector.broadcast %cst_70 : f32 to vector<16x64xf32>
    %187 = arith.subf %186, %165 : vector<16x64xf32>
    %188 = arith.mulf %187, %165 : vector<16x64xf32>
    %189 = math.exp %188 : vector<16x64xf32>
    %190 = arith.mulf %185, %189 : vector<16x64xf32>
    %cst_71 = arith.constant 1.000000e+00 : f32
    %191 = vector.broadcast %cst_71 : f32 to vector<16x64xf32>
    %192 = arith.subf %191, %190 : vector<16x64xf32>
    %193 = arith.mulf %164, %192 : vector<16x64xf32>
    %cst_72 = arith.constant 1.000000e+00 : f32
    %194 = vector.broadcast %cst_72 : f32 to vector<16x64xf32>
    %195 = arith.addf %194, %193 : vector<16x64xf32>
    %196 = arith.mulf %157, %195 : vector<16x64xf32>
    %c0_73 = arith.constant 0 : index
    %c0_74 = arith.constant 0 : index
    %197 = vector.load %arg11[%c0_73, %c0_74] : memref<64x32xf32, #tpu.memory_space<vmem>>, vector<64x32xf32>
    %cst_75 = arith.constant dense<0.000000e+00> : vector<16x32xf32>
    %198 = tpu.matmul %196, %197, %cst_75 {dimension_numbers = #tpu.dot_dimension_numbers<[1], [0], [0], [1], [0, 0, 1, 1], [], []>} : vector<16x64xf32>, vector<64x32xf32>, vector<16x32xf32> -> vector<16x32xf32>
    %c0_76 = arith.constant 0 : index
    %c0_77 = arith.constant 0 : index
    %199 = vector.load %arg12[%c0_76, %c0_77] : memref<1x32xf32, #tpu.memory_space<vmem>>, vector<1x32xf32>
    %200 = vector.broadcast %199 : vector<1x32xf32> to vector<16x32xf32>
    %201 = arith.addf %198, %200 : vector<16x32xf32>
    %202 = arith.addf %126, %201 : vector<16x32xf32>
    %c0_78 = arith.constant 0 : index
    %c0_79 = arith.constant 0 : index
    %203 = vector.load %arg13[%c0_78, %c0_79] : memref<16x32xf32, #tpu.memory_space<vmem>>, vector<16x32xf32>
    tpu.vector_store %arg13[%c0_78, %c0_79], %202 {strides = array<i32>} : memref<16x32xf32, #tpu.memory_space<vmem>>, vector<16x32xf32>,
    return
  }
  func.func @transform_0(%arg0: i32) -> (i32, i32) {
    %c0_i32 = arith.constant 0 : i32
    %c0_i32_0 = arith.constant 0 : i32
    return %arg0, %c0_i32 : i32, i32
  }
  func.func @transform_1(%arg0: i32) -> (i32, i32) {
    %c0_i32 = arith.constant 0 : i32
    %c0_i32_0 = arith.constant 0 : i32
    %c0_i32_1 = arith.constant 0 : i32
    return %c0_i32, %c0_i32_0 : i32, i32
  }
  func.func @transform_2(%arg0: i32) -> (i32, i32) {
    %c0_i32 = arith.constant 0 : i32
    %c0_i32_0 = arith.constant 0 : i32
    %c0_i32_1 = arith.constant 0 : i32
    return %c0_i32, %c0_i32_0 : i32, i32
  }
  func.func @transform_3(%arg0: i32) -> (i32, i32) {
    %c0_i32 = arith.constant 0 : i32
    %c0_i32_0 = arith.constant 0 : i32
    %c0_i32_1 = arith.constant 0 : i32
    return %c0_i32, %c0_i32_0 : i32, i32
  }
  func.func @transform_4(%arg0: i32) -> (i32, i32) {
    %c0_i32 = arith.constant 0 : i32
    %c0_i32_0 = arith.constant 0 : i32
    %c0_i32_1 = arith.constant 0 : i32
    return %c0_i32, %c0_i32_0 : i32, i32
  }
  func.func @transform_5(%arg0: i32) -> (i32, i32) {
    %c0_i32 = arith.constant 0 : i32
    %c0_i32_0 = arith.constant 0 : i32
    %c0_i32_1 = arith.constant 0 : i32
    return %c0_i32, %c0_i32_0 : i32, i32
  }
  func.func @transform_6(%arg0: i32) -> (i32, i32) {
    %c0_i32 = arith.constant 0 : i32
    %c0_i32_0 = arith.constant 0 : i32
    %c0_i32_1 = arith.constant 0 : i32
    return %c0_i32, %c0_i32_0 : i32, i32
  }
  func.func @transform_7(%arg0: i32) -> (i32, i32) {
    %c0_i32 = arith.constant 0 : i32
    %c0_i32_0 = arith.constant 0 : i32
    %c0_i32_1 = arith.constant 0 : i32
    return %c0_i32, %c0_i32_0 : i32, i32
  }
  func.func @transform_8(%arg0: i32) -> (i32, i32) {
    %c0_i32 = arith.constant 0 : i32
    %c0_i32_0 = arith.constant 0 : i32
    %c0_i32_1 = arith.constant 0 : i32
    return %c0_i32, %c0_i32_0 : i32, i32
  }
  func.func @transform_9(%arg0: i32) -> (i32, i32) {
    %c0_i32 = arith.constant 0 : i32
    %c0_i32_0 = arith.constant 0 : i32
    %c0_i32_1 = arith.constant 0 : i32
    return %c0_i32, %c0_i32_0 : i32, i32
  }
  func.func @transform_10(%arg0: i32) -> (i32, i32) {
    %c0_i32 = arith.constant 0 : i32
    %c0_i32_0 = arith.constant 0 : i32
    %c0_i32_1 = arith.constant 0 : i32
    return %c0_i32, %c0_i32_0 : i32, i32
  }
  func.func @transform_11(%arg0: i32) -> (i32, i32) {
    %c0_i32 = arith.constant 0 : i32
    %c0_i32_0 = arith.constant 0 : i32
    %c0_i32_1 = arith.constant 0 : i32
    return %c0_i32, %c0_i32_0 : i32, i32
  }
  func.func @transform_12(%arg0: i32) -> (i32, i32) {
    %c0_i32 = arith.constant 0 : i32
    %c0_i32_0 = arith.constant 0 : i32
    return %arg0, %c0_i32 : i32, i32
  }
}

</mosaic_0001>

<llo_original>
// kernel: tpu_custom_call.1
$region0: #{tpu_custom_call.1}
  #allocation0 [shape = 'u32[]', space=smem, size = 0x4, offset = 0x4, fixed_abs, tag = 'smem constant byte address 0x4 - core index']
  #allocation1 [shape = 'u32[72,128]{1,0:T(1,128)}', space=vmem, size = 0x9000, scoped, tag = 'internal scratch']
  %s0 = inlined_call_operand.hbm [shape: f32[16,32], index: 0, kind: input, shape index: {}]
  %s1 = inlined_call_operand.hbm [shape: f32[1,32], index: 1, kind: input, shape index: {}]
  %s2 = inlined_call_operand.vmem [shape: f32[1,32], index: 2, kind: input, shape index: {}]
  %s3 = inlined_call_operand.vmem [shape: f32[32,96], index: 3, kind: input, shape index: {}]
  %s4 = inlined_call_operand.vmem [shape: f32[32,32], index: 4, kind: input, shape index: {}]
  %s5 = inlined_call_operand.vmem [shape: f32[1,32], index: 5, kind: input, shape index: {}]
  %s6 = inlined_call_operand.vmem [shape: f32[1,32], index: 6, kind: input, shape index: {}]
  %s7 = inlined_call_operand.vmem [shape: f32[1,32], index: 7, kind: input, shape index: {}]
  %s8 = inlined_call_operand.vmem [shape: f32[32,64], index: 8, kind: input, shape index: {}]
  %s9 = inlined_call_operand.vmem [shape: f32[1,64], index: 9, kind: input, shape index: {}]
  %s10 = inlined_call_operand.vmem [shape: f32[64,32], index: 10, kind: input, shape index: {}]
  %s11 = inlined_call_operand.vmem [shape: f32[1,32], index: 11, kind: input, shape index: {}]
  %s12 = inlined_call_operand.hbm [shape: f32[16,32], index: 12, kind: output, shape index: {}]
  %s13 = sld [smem:[#allocation0]]
  $region66: #{tpu_custom_call.1} parent=0
    _
  %s15 = ssub.s32 1, %s13
  %s16 = scalar_select 0, %s15, %s13
  $region1: #{tpu_custom_call.1} parent=0
    #allocation2 [shape = 'u8[8192]{0}', space=vmem, size = 0x2000, scoped, tag = 'input window, operand 0, single buffered']
    #allocation3 [shape = 's32[1]{0}', space=sflag, size = 0x4, scoped, tag = 'scoped memory for tpu_custom_call.1']
    #allocation4 [shape = 's32[1]{0}', space=sflag, size = 0x4, scoped, tag = 'scoped memory for tpu_custom_call.1']
    #allocation5 [shape = 'u8[512]{0}', space=vmem, size = 0x400, scoped, tag = 'input window, operand 1, single buffered']
    #allocation6 [shape = 's32[1]{0}', space=sflag, size = 0x4, scoped, tag = 'scoped memory for tpu_custom_call.1']
    #allocation7 [shape = 'u8[8192]{0}', space=vmem, size = 0x2000, scoped, tag = 'output window, operand 0, single buffered']
    %17 = vsyncpa [#allocation3], 0
    %18 = vsyncpa [#allocation6], 0
    %19 = vsyncpa [#allocation4], 0
    // Predicated region
    $region2: #{tpu_custom_call.1} parent=1 // pred_check
      _
    $region3: #{tpu_custom_call.1} parent=1 // pred_check_branch
      %21 = sbr.rel (0) target = $region5
    $region4: #{tpu_custom_call.1} parent=1 // pred_region
      %23 = vsyncadd [#allocation3], 0
      %s24 = sshll.u32 %s0, 4
      %s25 = int_to_ptr.hbm [resolvable:$true] %s24
      %s26 = sshll.u32 [#allocation2], 4
      %s27 = int_to_ptr.vmem [resolvable:$true] %s26
      %32 = dma.hbm_to_vmem [thread:$0]  %s25, 256, %s27, [#allocation3], 128, 128, 8
    $region5: #{tpu_custom_call.1} parent=1 // pred_fallthru
      _
    // Predicated region
    $region6: #{tpu_custom_call.1} parent=1 // pred_check
      _
    $region7: #{tpu_custom_call.1} parent=1 // pred_check_branch
      %34 = sbr.rel (0) target = $region9
    $region8: #{tpu_custom_call.1} parent=1 // pred_region
      %36 = vsyncadd [#allocation6], 0
      %s38 = sshll.u32 %s1, 4
      %s39 = int_to_ptr.hbm [resolvable:$true] %s38
      %s40 = sshll.u32 [#allocation5], 4
      %s41 = int_to_ptr.vmem [resolvable:$true] %s40
      %43 = dma.hbm_to_vmem [thread:$0]  %s39, 16, %s41, [#allocation6]
    $region9: #{tpu_custom_call.1} parent=1 // pred_fallthru
      _
    // Predicated region
    $region10: #{tpu_custom_call.1} parent=1 // pred_check
      _
    $region11: #{tpu_custom_call.1} parent=1 // pred_check_branch
      %45 = sbr.rel (0) target = $region13
    $region12: #{tpu_custom_call.1} parent=1 // pred_region
      _
    $region13: #{tpu_custom_call.1} parent=1 // pred_fallthru
      _
    // Predicated region
    $region14: #{tpu_custom_call.1} parent=1 // pred_check
      _
    $region15: #{tpu_custom_call.1} parent=1 // pred_check_branch
      %47 = sbr.rel (0) target = $region17
    $region16: #{tpu_custom_call.1} parent=1 // pred_region
      _
    $region17: #{tpu_custom_call.1} parent=1 // pred_fallthru
      _
    // Predicated region
    $region18: #{tpu_custom_call.1} parent=1 // pred_check
      _
    $region19: #{tpu_custom_call.1} parent=1 // pred_check_branch
      %49 = sbr.rel (0) target = $region21
    $region20: #{tpu_custom_call.1} parent=1 // pred_region
      _
    $region21: #{tpu_custom_call.1} parent=1 // pred_fallthru
      _
    // Predicated region
    $region22: #{tpu_custom_call.1} parent=1 // pred_check
      _
    $region23: #{tpu_custom_call.1} parent=1 // pred_check_branch
      %51 = sbr.rel (0) target = $region25
    $region24: #{tpu_custom_call.1} parent=1 // pred_region
      _
    $region25: #{tpu_custom_call.1} parent=1 // pred_fallthru
      _
    // Predicated region
    $region26: #{tpu_custom_call.1} parent=1 // pred_check
      _
    $region27: #{tpu_custom_call.1} parent=1 // pred_check_branch
      %53 = sbr.rel (0) target = $region29
    $region28: #{tpu_custom_call.1} parent=1 // pred_region
      _
    $region29: #{tpu_custom_call.1} parent=1 // pred_fallthru
      _
    // Predicated region
    $region30: #{tpu_custom_call.1} parent=1 // pred_check
      _
    $region31: #{tpu_custom_call.1} parent=1 // pred_check_branch
      %55 = sbr.rel (0) target = $region33
    $region32: #{tpu_custom_call.1} parent=1 // pred_region
      _
    $region33: #{tpu_custom_call.1} parent=1 // pred_fallthru
      _
    // Predicated region
    $region34: #{tpu_custom_call.1} parent=1 // pred_check
      _
    $region35: #{tpu_custom_call.1} parent=1 // pred_check_branch
      %57 = sbr.rel (0) target = $region37
    $region36: #{tpu_custom_call.1} parent=1 // pred_region
      _
    $region37: #{tpu_custom_call.1} parent=1 // pred_fallthru
      _
    // Predicated region
    $region38: #{tpu_custom_call.1} parent=1 // pred_check
      _
    $region39: #{tpu_custom_call.1} parent=1 // pred_check_branch
      %59 = sbr.rel (0) target = $region41
    $region40: #{tpu_custom_call.1} parent=1 // pred_region
      _
    $region41: #{tpu_custom_call.1} parent=1 // pred_fallthru
      _
    // Predicated region
    $region42: #{tpu_custom_call.1} parent=1 // pred_check
      _
    $region43: #{tpu_custom_call.1} parent=1 // pred_check_branch
      %61 = sbr.rel (0) target = $region45
    $region44: #{tpu_custom_call.1} parent=1 // pred_region
      _
    $region45: #{tpu_custom_call.1} parent=1 // pred_fallthru
      _
    // Predicated region
    $region46: #{tpu_custom_call.1} parent=1 // pred_check
      _
    $region47: #{tpu_custom_call.1} parent=1 // pred_check_branch
      %63 = sbr.rel (0) target = $region49
    $region48: #{tpu_custom_call.1} parent=1 // pred_region
      _
    $region49: #{tpu_custom_call.1} parent=1 // pred_fallthru
      _
    // Predicated region
    $region50: #{tpu_custom_call.1} parent=1 // pred_check
      _
    $region51: #{tpu_custom_call.1} parent=1 // pred_check_branch
      %65 = sbr.rel (0) target = $region53
    $region52: #{tpu_custom_call.1} parent=1 // pred_region
      %67 = dma.done [#allocation3], 256
    $region53: #{tpu_custom_call.1} parent=1 // pred_fallthru
      _
    // Predicated region
    $region54: #{tpu_custom_call.1} parent=1 // pred_check
      _
    $region55: #{tpu_custom_call.1} parent=1 // pred_check_branch
      %69 = sbr.rel (0) target = $region57
    $region56: #{tpu_custom_call.1} parent=1 // pred_region
      %71 = dma.done [#allocation6], 16
    $region57: #{tpu_custom_call.1} parent=1 // pred_fallthru
      _
    %v72 = vld [vmem:[#allocation2] sm:$0xff]
    %v73 = vld [vmem:[#allocation2 + $0x8] sm:$0xff]
    %v74 = vld [vmem:[#allocation5] sm:$0x1]
    %v75 = vld [vmem:[%s2] sm:$0x1]
    %vm76 = vcmask 261120
    %v77 = vsel %vm76, %v72, 0.0
    %78 = vadd.xlane.f32.xlu0 %v77
    %v79 = vpop.xlane.xlu0 %78
    %v80 = vsel %vm76, %v73, 0.0
    %81 = vadd.xlane.f32.xlu0 %v80
    %v82 = vpop.xlane.xlu0 %81
    %v83 = vrcp.pop 32.0
    %v84 = vmul.f32 32.0, %v83
    %v85 = vsub.f32 1.0, %v84
    %v86 = vmul.f32 %v83, %v85
    %v87 = vadd.f32 %v83, %v86
    %vm88 = vweird.f32 %v83
    %v89 = vsel %vm88, %v83, %v87
    %v90 = vmul.f32 %v79, %v89
    %v91 = vmul.f32 %v82, %v89
    %v92 = vsub.f32 %v72, %v90
    %v93 = vsub.f32 %v73, %v91
    %v94 = vmul.f32 %v92, %v92
    %v95 = vmul.f32 %v93, %v93
    %v96 = vsel %vm76, %v94, 0.0
    %97 = vadd.xlane.f32.xlu0 %v96
    %v98 = vpop.xlane.xlu0 %97
    %v99 = vsel %vm76, %v95, 0.0
    %100 = vadd.xlane.f32.xlu0 %v99
    %v101 = vpop.xlane.xlu0 %100
    %v102 = vmul.f32 %v98, %v89
    %v103 = vmul.f32 %v101, %v89
    %v104 = vadd.f32 %v102, 1e-05
    %v105 = vadd.f32 %v103, 1e-05
    %v106 = vrsqrt.pop %v104
    %v107 = vmul.f32 %v106, %v104
    %v108 = vmul.f32 %v107, %v106
    %v109 = vmul.f32 0.5, %v108
    %v110 = vsub.f32 1.5, %v109
    %v111 = vmul.f32 %v106, %v110
    %vm112 = vweird.f32 %v104
    %vm113 = vweird.f32 %v106
    %vm114 = vmor %vm112, %vm113
    %v115 = vsel %vm114, %v106, %v111
    %v116 = vrsqrt.pop %v105
    %v117 = vmul.f32 %v116, %v105
    %v118 = vmul.f32 %v117, %v116
    %v119 = vmul.f32 0.5, %v118
    %v120 = vsub.f32 1.5, %v119
    %v121 = vmul.f32 %v116, %v120
    %vm122 = vweird.f32 %v105
    %vm123 = vweird.f32 %v116
    %vm124 = vmor %vm122, %vm123
    %v125 = vsel %vm124, %v116, %v121
    %v126 = vmul.f32 %v92, %v115
    %v127 = vmul.f32 %v93, %v125
    %v129 = vperm.slane %v74, 0
    %v131 = vmul.f32 %v126, %v129
    %v132 = vmul.f32 %v127, %v129
    %v134 = vperm.slane %v75, 0
    %v136 = vadd.f32 %v131, %v134
    %v137 = vadd.f32 %v132, %v134
    %v138 = vld [vmem:[%s3] sm:$0xff]
    %v139 = vld [vmem:[%s3 + $0x8] sm:$0xff]
    %v140 = vld [vmem:[%s3 + $0x10] sm:$0xff]
    %v141 = vld [vmem:[%s3 + $0x18] sm:$0xff]
    %v143 = vsel %vm76, %v136, 0
    %v146 = vsel %vm76, %v137, 0
    %148 = vmatpush.msra.mxu0 0.0
    %149 = vmatpush.msra.mxu0 0.0
    %150 = vmatpush.msra.mxu0 0.0
    %151 = vmatpush.msra.mxu0 0.0
    %152 = vmatpush.msra.mxu0 0.0
    %153 = vmatpush.msra.mxu0 0.0
    %154 = vmatpush.msra.mxu0 0.0
    %155 = vmatpush.msra.mxu0 0.0
    %156 = vmatpush.msra.mxu0 0.0
    %157 = vmatpush.msra.mxu0 0.0
    %158 = vmatpush.msra.mxu0 0.0
    %159 = vmatpush.msra.mxu0 0.0
    %160 = vmatpush.msra.mxu0 %v141
    %161 = vmatpush.msra.mxu0 %v140
    %162 = vmatpush.msra.mxu0 %v139
    %163 = vmatpush.msra.mxu0 %v138
    %164 = vmatmul.f32.gmra.mxu0 %v143
    %v165 = vpop.f32.mrf.mxu0
    %v166 = vadd.f32 0.0, %v165
    %167 = vmatmul.f32.gmra.mxu0 %v146
    %v168 = vpop.f32.mrf.mxu0
    %v169 = vadd.f32 0.0, %v168
    %170 = vdwg.mxu0
    %v171 = vld [vmem:[%s5] sm:$0x1]
    %v173 = vperm.slane %v171, 0
    %176 = vrot.lane.b32.xlu0 %v166, 96
    %v177 = vpop.permute.xlu0 %176
    %vm178 = vcmask 64512
    %v179 = vsel %vm178, %v166, 0
    %v181 = vsel %vm178, %v177, 0
    %183 = vmatpush.xpose.msra.mxu0 0.0
    %184 = vmatpush.xpose.msra.mxu0 0.0
    %185 = vmatpush.xpose.msra.mxu0 0.0
    %186 = vmatpush.xpose.msra.mxu0 0.0
    %187 = vmatpush.xpose.msra.mxu0 0.0
    %188 = vmatpush.xpose.msra.mxu0 0.0
    %189 = vmatpush.xpose.msra.mxu0 0.0
    %190 = vmatpush.xpose.msra.mxu0 0.0
    %191 = vmatpush.xpose.msra.mxu0 0.0
    %192 = vmatpush.xpose.msra.mxu0 0.0
    %193 = vmatpush.xpose.msra.mxu0 0.0
    %194 = vmatpush.xpose.msra.mxu0 0.0
    %195 = vmatpush.xpose.msra.mxu0 0.0
    %196 = vmatpush.xpose.msra.mxu0 0.0
    %197 = vmatpush.xpose.msra.mxu0 0.0
    %198 = vmatpush.xpose.msra.mxu0 %v181
    %199 = vmatmul.f32.gmra.mxu0 %v179
    %v200 = vpop.f32.mrf.mxu0
    %v201 = vadd.f32 0.0, %v200
    %202 = vdwg.mxu0
    %204 = vrot.lane.b32.xlu0 %v169, 96
    %v205 = vpop.permute.xlu0 %204
    %v206 = vsel %vm178, %v169, 0
    %v208 = vsel %vm178, %v205, 0
    %210 = vmatpush.xpose.msra.mxu0 0.0
    %211 = vmatpush.xpose.msra.mxu0 0.0
    %212 = vmatpush.xpose.msra.mxu0 0.0
    %213 = vmatpush.xpose.msra.mxu0 0.0
    %214 = vmatpush.xpose.msra.mxu0 0.0
    %215 = vmatpush.xpose.msra.mxu0 0.0
    %216 = vmatpush.xpose.msra.mxu0 0.0
    %217 = vmatpush.xpose.msra.mxu0 0.0
    %218 = vmatpush.xpose.msra.mxu0 0.0
    %219 = vmatpush.xpose.msra.mxu0 0.0
    %220 = vmatpush.xpose.msra.mxu0 0.0
    %221 = vmatpush.xpose.msra.mxu0 0.0
    %222 = vmatpush.xpose.msra.mxu0 0.0
    %223 = vmatpush.xpose.msra.mxu0 0.0
    %224 = vmatpush.xpose.msra.mxu0 0.0
    %225 = vmatpush.xpose.msra.mxu0 %v208
    %226 = vmatmul.f32.gmra.mxu0 %v206
    %v227 = vpop.f32.mrf.mxu0
    %v228 = vadd.f32 0.0, %v227
    %229 = vdwg.mxu0
    %v230 = vmul.f32 %v201, 0.35355338
    %v231 = vmul.f32 %v228, 0.35355338
    %v232 = vsel %vm178, %v230, -inf
    %233 = vmax.xlane.f32.xlu0 %v232
    %v234 = vpop.xlane.xlu0 %233
    %v235 = vsel %vm178, %v231, -inf
    %236 = vmax.xlane.f32.xlu0 %v235
    %v237 = vpop.xlane.xlu0 %236
    %v238 = vsub.f32 %v230, %v234
    %v239 = vsub.f32 %v231, %v237
    %v240 = vmul.f32 %v238, 1.442695
    %v241 = vpow.pop %v240
    %v242 = vmul.f32 %v239, 1.442695
    %v243 = vpow.pop %v242
    %v244 = vsel %vm178, %v241, 0.0
    %245 = vadd.xlane.f32.xlu0 %v244
    %v246 = vpop.xlane.xlu0 %245
    %v247 = vsel %vm178, %v243, 0.0
    %248 = vadd.xlane.f32.xlu0 %v247
    %v249 = vpop.xlane.xlu0 %248
    %v250 = vrcp.pop %v246
    %v251 = vrcp.pop %v249
    %v252 = vmul.f32 %v241, %v250
    %v253 = vmul.f32 %v243, %v251
    %254 = vrot.lane.b32.xlu0 %v166, 64
    %v255 = vpop.permute.xlu0 %254
    %v258 = vsel %vm178, %v252, 0
    %260 = vmatpush.msra.mxu0 0.0
    %261 = vmatpush.msra.mxu0 0.0
    %262 = vmatpush.msra.mxu0 0.0
    %263 = vmatpush.msra.mxu0 0.0
    %264 = vmatpush.msra.mxu0 0.0
    %265 = vmatpush.msra.mxu0 0.0
    %266 = vmatpush.msra.mxu0 0.0
    %267 = vmatpush.msra.mxu0 0.0
    %268 = vmatpush.msra.mxu0 0.0
    %269 = vmatpush.msra.mxu0 0.0
    %270 = vmatpush.msra.mxu0 0.0
    %271 = vmatpush.msra.mxu0 0.0
    %272 = vmatpush.msra.mxu0 0.0
    %273 = vmatpush.msra.mxu0 0.0
    %274 = vmatpush.msra.mxu0 0.0
    %275 = vmatpush.msra.mxu0 %v255
    %276 = vmatmul.f32.gmra.mxu0 %v258
    %v277 = vpop.f32.mrf.mxu0
    %v278 = vadd.f32 0.0, %v277
    %279 = vdwg.mxu0
    %280 = vrot.lane.b32.xlu0 %v169, 64
    %v281 = vpop.permute.xlu0 %280
    %v284 = vsel %vm178, %v253, 0
    %286 = vmatpush.msra.mxu0 0.0
    %287 = vmatpush.msra.mxu0 0.0
    %288 = vmatpush.msra.mxu0 0.0
    %289 = vmatpush.msra.mxu0 0.0
    %290 = vmatpush.msra.mxu0 0.0
    %291 = vmatpush.msra.mxu0 0.0
    %292 = vmatpush.msra.mxu0 0.0
    %293 = vmatpush.msra.mxu0 0.0
    %294 = vmatpush.msra.mxu0 0.0
    %295 = vmatpush.msra.mxu0 0.0
    %296 = vmatpush.msra.mxu0 0.0
    %297 = vmatpush.msra.mxu0 0.0
    %298 = vmatpush.msra.mxu0 0.0
    %299 = vmatpush.msra.mxu0 0.0
    %300 = vmatpush.msra.mxu0 0.0
    %301 = vmatpush.msra.mxu0 %v281
    %302 = vmatmul.f32.gmra.mxu0 %v284
    %v303 = vpop.f32.mrf.mxu0
    %v304 = vadd.f32 0.0, %v303
    %305 = vdwg.mxu0
    %v306 = vld [vmem:[%s4] sm:$0xff]
    %v308 = vsel %vm178, %v278, 0
    %v311 = vsel %vm178, %v304, 0
    %313 = vmatpush.msra.mxu0 0.0
    %314 = vmatpush.msra.mxu0 0.0
    %315 = vmatpush.msra.mxu0 0.0
    %316 = vmatpush.msra.mxu0 0.0
    %317 = vmatpush.msra.mxu0 0.0
    %318 = vmatpush.msra.mxu0 0.0
    %319 = vmatpush.msra.mxu0 0.0
    %320 = vmatpush.msra.mxu0 0.0
    %321 = vmatpush.msra.mxu0 0.0
    %322 = vmatpush.msra.mxu0 0.0
    %323 = vmatpush.msra.mxu0 0.0
    %324 = vmatpush.msra.mxu0 0.0
    %325 = vmatpush.msra.mxu0 0.0
    %326 = vmatpush.msra.mxu0 0.0
    %327 = vmatpush.msra.mxu0 0.0
    %328 = vmatpush.msra.mxu0 %v306
    %329 = vmatmul.f32.gmra.mxu0 %v308
    %v330 = vpop.f32.mrf.mxu0
    %v331 = vadd.f32 0.0, %v330
    %332 = vmatmul.f32.gmra.mxu0 %v311
    %v333 = vpop.f32.mrf.mxu0
    %v334 = vadd.f32 0.0, %v333
    %335 = vdwg.mxu0
    %v336 = vadd.f32 %v173, %v331
    %v337 = vadd.f32 %v173, %v334
    %338 = vrot.lane.b32.xlu0 %v166, 120
    %v339 = vpop.permute.xlu0 %338
    %340 = vrot.lane.b32.xlu0 %v166, 88
    %v341 = vpop.permute.xlu0 %340
    %v342 = vsel %vm178, %v339, 0
    %v344 = vsel %vm178, %v341, 0
    %346 = vmatpush.xpose.msra.mxu0 0.0
    %347 = vmatpush.xpose.msra.mxu0 0.0
    %348 = vmatpush.xpose.msra.mxu0 0.0
    %349 = vmatpush.xpose.msra.mxu0 0.0
    %350 = vmatpush.xpose.msra.mxu0 0.0
    %351 = vmatpush.xpose.msra.mxu0 0.0
    %352 = vmatpush.xpose.msra.mxu0 0.0
    %353 = vmatpush.xpose.msra.mxu0 0.0
    %354 = vmatpush.xpose.msra.mxu0 0.0
    %355 = vmatpush.xpose.msra.mxu0 0.0
    %356 = vmatpush.xpose.msra.mxu0 0.0
    %357 = vmatpush.xpose.msra.mxu0 0.0
    %358 = vmatpush.xpose.msra.mxu0 0.0
    %359 = vmatpush.xpose.msra.mxu0 0.0
    %360 = vmatpush.xpose.msra.mxu0 0.0
    %361 = vmatpush.xpose.msra.mxu0 %v344
    %362 = vmatmul.f32.gmra.mxu0 %v342
    %v363 = vpop.f32.mrf.mxu0
    %v364 = vadd.f32 0.0, %v363
    %365 = vdwg.mxu0
    %366 = vrot.lane.b32.xlu0 %v169, 120
    %v367 = vpop.permute.xlu0 %366
    %368 = vrot.lane.b32.xlu0 %v169, 88
    %v369 = vpop.permute.xlu0 %368
    %v370 = vsel %vm178, %v367, 0
    %v372 = vsel %vm178, %v369, 0
    %374 = vmatpush.xpose.msra.mxu0 0.0
    %375 = vmatpush.xpose.msra.mxu0 0.0
    %376 = vmatpush.xpose.msra.mxu0 0.0
    %377 = vmatpush.xpose.msra.mxu0 0.0
    %378 = vmatpush.xpose.msra.mxu0 0.0
    %379 = vmatpush.xpose.msra.mxu0 0.0
    %380 = vmatpush.xpose.msra.mxu0 0.0
    %381 = vmatpush.xpose.msra.mxu0 0.0
    %382 = vmatpush.xpose.msra.mxu0 0.0
    %383 = vmatpush.xpose.msra.mxu0 0.0
    %384 = vmatpush.xpose.msra.mxu0 0.0
    %385 = vmatpush.xpose.msra.mxu0 0.0
    %386 = vmatpush.xpose.msra.mxu0 0.0
    %387 = vmatpush.xpose.msra.mxu0 0.0
    %388 = vmatpush.xpose.msra.mxu0 0.0
    %389 = vmatpush.xpose.msra.mxu0 %v372
    %390 = vmatmul.f32.gmra.mxu0 %v370
    %v391 = vpop.f32.mrf.mxu0
    %v392 = vadd.f32 0.0, %v391
    %393 = vdwg.mxu0
    %v394 = vmul.f32 %v364, 0.35355338
    %v395 = vmul.f32 %v392, 0.35355338
    %v396 = vsel %vm178, %v394, -inf
    %397 = vmax.xlane.f32.xlu0 %v396
    %v398 = vpop.xlane.xlu0 %397
    %v399 = vsel %vm178, %v395, -inf
    %400 = vmax.xlane.f32.xlu0 %v399
    %v401 = vpop.xlane.xlu0 %400
    %v402 = vsub.f32 %v394, %v398
    %v403 = vsub.f32 %v395, %v401
    %v404 = vmul.f32 %v402, 1.442695
    %v405 = vpow.pop %v404
    %v406 = vmul.f32 %v403, 1.442695
    %v407 = vpow.pop %v406
    %v408 = vsel %vm178, %v405, 0.0
    %409 = vadd.xlane.f32.xlu0 %v408
    %v410 = vpop.xlane.xlu0 %409
    %v411 = vsel %vm178, %v407, 0.0
    %412 = vadd.xlane.f32.xlu0 %v411
    %v413 = vpop.xlane.xlu0 %412
    %v414 = vrcp.pop %v410
    %v415 = vrcp.pop %v413
    %v416 = vmul.f32 %v405, %v414
    %v417 = vmul.f32 %v407, %v415
    %418 = vrot.lane.b32.xlu0 %v166, 56
    %v419 = vpop.permute.xlu0 %418
    %v422 = vsel %vm178, %v416, 0
    %424 = vmatpush.msra.mxu0 0.0
    %425 = vmatpush.msra.mxu0 0.0
    %426 = vmatpush.msra.mxu0 0.0
    %427 = vmatpush.msra.mxu0 0.0
    %428 = vmatpush.msra.mxu0 0.0
    %429 = vmatpush.msra.mxu0 0.0
    %430 = vmatpush.msra.mxu0 0.0
    %431 = vmatpush.msra.mxu0 0.0
    %432 = vmatpush.msra.mxu0 0.0
    %433 = vmatpush.msra.mxu0 0.0
    %434 = vmatpush.msra.mxu0 0.0
    %435 = vmatpush.msra.mxu0 0.0
    %436 = vmatpush.msra.mxu0 0.0
    %437 = vmatpush.msra.mxu0 0.0
    %438 = vmatpush.msra.mxu0 0.0
    %439 = vmatpush.msra.mxu0 %v419
    %440 = vmatmul.f32.gmra.mxu0 %v422
    %v441 = vpop.f32.mrf.mxu0
    %v442 = vadd.f32 0.0, %v441
    %443 = vdwg.mxu0
    %444 = vrot.lane.b32.xlu0 %v169, 56
    %v445 = vpop.permute.xlu0 %444
    %v448 = vsel %vm178, %v417, 0
    %450 = vmatpush.msra.mxu0 0.0
    %451 = vmatpush.msra.mxu0 0.0
    %452 = vmatpush.msra.mxu0 0.0
    %453 = vmatpush.msra.mxu0 0.0
    %454 = vmatpush.msra.mxu0 0.0
    %455 = vmatpush.msra.mxu0 0.0
    %456 = vmatpush.msra.mxu0 0.0
    %457 = vmatpush.msra.mxu0 0.0
    %458 = vmatpush.msra.mxu0 0.0
    %459 = vmatpush.msra.mxu0 0.0
    %460 = vmatpush.msra.mxu0 0.0
    %461 = vmatpush.msra.mxu0 0.0
    %462 = vmatpush.msra.mxu0 0.0
    %463 = vmatpush.msra.mxu0 0.0
    %464 = vmatpush.msra.mxu0 0.0
    %465 = vmatpush.msra.mxu0 %v445
    %466 = vmatmul.f32.gmra.mxu0 %v448
    %v467 = vpop.f32.mrf.mxu0
    %v468 = vadd.f32 0.0, %v467
    %469 = vdwg.mxu0
    %v470 = vld [vmem:[%s4 + $0x8] sm:$0xff]
    %v472 = vsel %vm178, %v442, 0
    %v475 = vsel %vm178, %v468, 0
    %477 = vmatpush.msra.mxu0 0.0
    %478 = vmatpush.msra.mxu0 0.0
    %479 = vmatpush.msra.mxu0 0.0
    %480 = vmatpush.msra.mxu0 0.0
    %481 = vmatpush.msra.mxu0 0.0
    %482 = vmatpush.msra.mxu0 0.0
    %483 = vmatpush.msra.mxu0 0.0
    %484 = vmatpush.msra.mxu0 0.0
    %485 = vmatpush.msra.mxu0 0.0
    %486 = vmatpush.msra.mxu0 0.0
    %487 = vmatpush.msra.mxu0 0.0
    %488 = vmatpush.msra.mxu0 0.0
    %489 = vmatpush.msra.mxu0 0.0
    %490 = vmatpush.msra.mxu0 0.0
    %491 = vmatpush.msra.mxu0 0.0
    %492 = vmatpush.msra.mxu0 %v470
    %493 = vmatmul.f32.gmra.mxu0 %v472
    %v494 = vpop.f32.mrf.mxu0
    %v495 = vadd.f32 0.0, %v494
    %496 = vmatmul.f32.gmra.mxu0 %v475
    %v497 = vpop.f32.mrf.mxu0
    %v498 = vadd.f32 0.0, %v497
    %499 = vdwg.mxu0
    %v500 = vadd.f32 %v336, %v495
    %v501 = vadd.f32 %v337, %v498
    %502 = vrot.lane.b32.xlu0 %v166, 112
    %v503 = vpop.permute.xlu0 %502
    %504 = vrot.lane.b32.xlu0 %v166, 80
    %v505 = vpop.permute.xlu0 %504
    %v506 = vsel %vm178, %v503, 0
    %v508 = vsel %vm178, %v505, 0
    %510 = vmatpush.xpose.msra.mxu0 0.0
    %511 = vmatpush.xpose.msra.mxu0 0.0
    %512 = vmatpush.xpose.msra.mxu0 0.0
    %513 = vmatpush.xpose.msra.mxu0 0.0
    %514 = vmatpush.xpose.msra.mxu0 0.0
    %515 = vmatpush.xpose.msra.mxu0 0.0
    %516 = vmatpush.xpose.msra.mxu0 0.0
    %517 = vmatpush.xpose.msra.mxu0 0.0
    %518 = vmatpush.xpose.msra.mxu0 0.0
    %519 = vmatpush.xpose.msra.mxu0 0.0
    %520 = vmatpush.xpose.msra.mxu0 0.0
    %521 = vmatpush.xpose.msra.mxu0 0.0
    %522 = vmatpush.xpose.msra.mxu0 0.0
    %523 = vmatpush.xpose.msra.mxu0 0.0
    %524 = vmatpush.xpose.msra.mxu0 0.0
    %525 = vmatpush.xpose.msra.mxu0 %v508
    %526 = vmatmul.f32.gmra.mxu0 %v506
    %v527 = vpop.f32.mrf.mxu0
    %v528 = vadd.f32 0.0, %v527
    %529 = vdwg.mxu0
    %530 = vrot.lane.b32.xlu0 %v169, 112
    %v531 = vpop.permute.xlu0 %530
    %532 = vrot.lane.b32.xlu0 %v169, 80
    %v533 = vpop.permute.xlu0 %532
    %v534 = vsel %vm178, %v531, 0
    %v536 = vsel %vm178, %v533, 0
    %538 = vmatpush.xpose.msra.mxu0 0.0
    %539 = vmatpush.xpose.msra.mxu0 0.0
    %540 = vmatpush.xpose.msra.mxu0 0.0
    %541 = vmatpush.xpose.msra.mxu0 0.0
    %542 = vmatpush.xpose.msra.mxu0 0.0
    %543 = vmatpush.xpose.msra.mxu0 0.0
    %544 = vmatpush.xpose.msra.mxu0 0.0
    %545 = vmatpush.xpose.msra.mxu0 0.0
    %546 = vmatpush.xpose.msra.mxu0 0.0
    %547 = vmatpush.xpose.msra.mxu0 0.0
    %548 = vmatpush.xpose.msra.mxu0 0.0
    %549 = vmatpush.xpose.msra.mxu0 0.0
    %550 = vmatpush.xpose.msra.mxu0 0.0
    %551 = vmatpush.xpose.msra.mxu0 0.0
    %552 = vmatpush.xpose.msra.mxu0 0.0
    %553 = vmatpush.xpose.msra.mxu0 %v536
    %554 = vmatmul.f32.gmra.mxu0 %v534
    %v555 = vpop.f32.mrf.mxu0
    %v556 = vadd.f32 0.0, %v555
    %557 = vdwg.mxu0
    %v558 = vmul.f32 %v528, 0.35355338
    %v559 = vmul.f32 %v556, 0.35355338
    %v560 = vsel %vm178, %v558, -inf
    %561 = vmax.xlane.f32.xlu0 %v560
    %v562 = vpop.xlane.xlu0 %561
    %v563 = vsel %vm178, %v559, -inf
    %564 = vmax.xlane.f32.xlu0 %v563
    %v565 = vpop.xlane.xlu0 %564
    %v566 = vsub.f32 %v558, %v562
    %v567 = vsub.f32 %v559, %v565
    %v568 = vmul.f32 %v566, 1.442695
    %v569 = vpow.pop %v568
    %v570 = vmul.f32 %v567, 1.442695
    %v571 = vpow.pop %v570
    %v572 = vsel %vm178, %v569, 0.0
    %573 = vadd.xlane.f32.xlu0 %v572
    %v574 = vpop.xlane.xlu0 %573
    %v575 = vsel %vm178, %v571, 0.0
    %576 = vadd.xlane.f32.xlu0 %v575
    %v577 = vpop.xlane.xlu0 %576
    %v578 = vrcp.pop %v574
    %v579 = vrcp.pop %v577
    %v580 = vmul.f32 %v569, %v578
    %v581 = vmul.f32 %v571, %v579
    %582 = vrot.lane.b32.xlu0 %v166, 48
    %v583 = vpop.permute.xlu0 %582
    %v586 = vsel %vm178, %v580, 0
    %588 = vmatpush.msra.mxu0 0.0
    %589 = vmatpush.msra.mxu0 0.0
    %590 = vmatpush.msra.mxu0 0.0
    %591 = vmatpush.msra.mxu0 0.0
    %592 = vmatpush.msra.mxu0 0.0
    %593 = vmatpush.msra.mxu0 0.0
    %594 = vmatpush.msra.mxu0 0.0
    %595 = vmatpush.msra.mxu0 0.0
    %596 = vmatpush.msra.mxu0 0.0
    %597 = vmatpush.msra.mxu0 0.0
    %598 = vmatpush.msra.mxu0 0.0
    %599 = vmatpush.msra.mxu0 0.0
    %600 = vmatpush.msra.mxu0 0.0
    %601 = vmatpush.msra.mxu0 0.0
    %602 = vmatpush.msra.mxu0 0.0
    %603 = vmatpush.msra.mxu0 %v583
    %604 = vmatmul.f32.gmra.mxu0 %v586
    %v605 = vpop.f32.mrf.mxu0
    %v606 = vadd.f32 0.0, %v605
    %607 = vdwg.mxu0
    %608 = vrot.lane.b32.xlu0 %v169, 48
    %v609 = vpop.permute.xlu0 %608
    %v612 = vsel %vm178, %v581, 0
    %614 = vmatpush.msra.mxu0 0.0
    %615 = vmatpush.msra.mxu0 0.0
    %616 = vmatpush.msra.mxu0 0.0
    %617 = vmatpush.msra.mxu0 0.0
    %618 = vmatpush.msra.mxu0 0.0
    %619 = vmatpush.msra.mxu0 0.0
    %620 = vmatpush.msra.mxu0 0.0
    %621 = vmatpush.msra.mxu0 0.0
    %622 = vmatpush.msra.mxu0 0.0
    %623 = vmatpush.msra.mxu0 0.0
    %624 = vmatpush.msra.mxu0 0.0
    %625 = vmatpush.msra.mxu0 0.0
    %626 = vmatpush.msra.mxu0 0.0
    %627 = vmatpush.msra.mxu0 0.0
    %628 = vmatpush.msra.mxu0 0.0
    %629 = vmatpush.msra.mxu0 %v609
    %630 = vmatmul.f32.gmra.mxu0 %v612
    %v631 = vpop.f32.mrf.mxu0
    %v632 = vadd.f32 0.0, %v631
    %633 = vdwg.mxu0
    %v634 = vld [vmem:[%s4 + $0x10] sm:$0xff]
    %v636 = vsel %vm178, %v606, 0
    %v639 = vsel %vm178, %v632, 0
    %641 = vmatpush.msra.mxu0 0.0
    %642 = vmatpush.msra.mxu0 0.0
    %643 = vmatpush.msra.mxu0 0.0
    %644 = vmatpush.msra.mxu0 0.0
    %645 = vmatpush.msra.mxu0 0.0
    %646 = vmatpush.msra.mxu0 0.0
    %647 = vmatpush.msra.mxu0 0.0
    %648 = vmatpush.msra.mxu0 0.0
    %649 = vmatpush.msra.mxu0 0.0
    %650 = vmatpush.msra.mxu0 0.0
    %651 = vmatpush.msra.mxu0 0.0
    %652 = vmatpush.msra.mxu0 0.0
    %653 = vmatpush.msra.mxu0 0.0
    %654 = vmatpush.msra.mxu0 0.0
    %655 = vmatpush.msra.mxu0 0.0
    %656 = vmatpush.msra.mxu0 %v634
    %657 = vmatmul.f32.gmra.mxu0 %v636
    %v658 = vpop.f32.mrf.mxu0
    %v659 = vadd.f32 0.0, %v658
    %660 = vmatmul.f32.gmra.mxu0 %v639
    %v661 = vpop.f32.mrf.mxu0
    %v662 = vadd.f32 0.0, %v661
    %663 = vdwg.mxu0
    %v664 = vadd.f32 %v500, %v659
    %v665 = vadd.f32 %v501, %v662
    %666 = vrot.lane.b32.xlu0 %v166, 104
    %v667 = vpop.permute.xlu0 %666
    %668 = vrot.lane.b32.xlu0 %v166, 72
    %v669 = vpop.permute.xlu0 %668
    %v670 = vsel %vm178, %v667, 0
    %v672 = vsel %vm178, %v669, 0
    %674 = vmatpush.xpose.msra.mxu0 0.0
    %675 = vmatpush.xpose.msra.mxu0 0.0
    %676 = vmatpush.xpose.msra.mxu0 0.0
    %677 = vmatpush.xpose.msra.mxu0 0.0
    %678 = vmatpush.xpose.msra.mxu0 0.0
    %679 = vmatpush.xpose.msra.mxu0 0.0
    %680 = vmatpush.xpose.msra.mxu0 0.0
    %681 = vmatpush.xpose.msra.mxu0 0.0
    %682 = vmatpush.xpose.msra.mxu0 0.0
    %683 = vmatpush.xpose.msra.mxu0 0.0
    %684 = vmatpush.xpose.msra.mxu0 0.0
    %685 = vmatpush.xpose.msra.mxu0 0.0
    %686 = vmatpush.xpose.msra.mxu0 0.0
    %687 = vmatpush.xpose.msra.mxu0 0.0
    %688 = vmatpush.xpose.msra.mxu0 0.0
    %689 = vmatpush.xpose.msra.mxu0 %v672
    %690 = vmatmul.f32.gmra.mxu0 %v670
    %v691 = vpop.f32.mrf.mxu0
    %v692 = vadd.f32 0.0, %v691
    %693 = vdwg.mxu0
    %694 = vrot.lane.b32.xlu0 %v169, 104
    %v695 = vpop.permute.xlu0 %694
    %696 = vrot.lane.b32.xlu0 %v169, 72
    %v697 = vpop.permute.xlu0 %696
    %v698 = vsel %vm178, %v695, 0
    %v700 = vsel %vm178, %v697, 0
    %702 = vmatpush.xpose.msra.mxu0 0.0
    %703 = vmatpush.xpose.msra.mxu0 0.0
    %704 = vmatpush.xpose.msra.mxu0 0.0
    %705 = vmatpush.xpose.msra.mxu0 0.0
    %706 = vmatpush.xpose.msra.mxu0 0.0
    %707 = vmatpush.xpose.msra.mxu0 0.0
    %708 = vmatpush.xpose.msra.mxu0 0.0
    %709 = vmatpush.xpose.msra.mxu0 0.0
    %710 = vmatpush.xpose.msra.mxu0 0.0
    %711 = vmatpush.xpose.msra.mxu0 0.0
    %712 = vmatpush.xpose.msra.mxu0 0.0
    %713 = vmatpush.xpose.msra.mxu0 0.0
    %714 = vmatpush.xpose.msra.mxu0 0.0
    %715 = vmatpush.xpose.msra.mxu0 0.0
    %716 = vmatpush.xpose.msra.mxu0 0.0
    %717 = vmatpush.xpose.msra.mxu0 %v700
    %718 = vmatmul.f32.gmra.mxu0 %v698
    %v719 = vpop.f32.mrf.mxu0
    %v720 = vadd.f32 0.0, %v719
    %721 = vdwg.mxu0
    %v722 = vmul.f32 %v692, 0.35355338
    %v723 = vmul.f32 %v720, 0.35355338
    %v724 = vsel %vm178, %v722, -inf
    %725 = vmax.xlane.f32.xlu0 %v724
    %v726 = vpop.xlane.xlu0 %725
    %v727 = vsel %vm178, %v723, -inf
    %728 = vmax.xlane.f32.xlu0 %v727
    %v729 = vpop.xlane.xlu0 %728
    %v730 = vsub.f32 %v722, %v726
    %v731 = vsub.f32 %v723, %v729
    %v732 = vmul.f32 %v730, 1.442695
    %v733 = vpow.pop %v732
    %v734 = vmul.f32 %v731, 1.442695
    %v735 = vpow.pop %v734
    %v736 = vsel %vm178, %v733, 0.0
    %737 = vadd.xlane.f32.xlu0 %v736
    %v738 = vpop.xlane.xlu0 %737
    %v739 = vsel %vm178, %v735, 0.0
    %740 = vadd.xlane.f32.xlu0 %v739
    %v741 = vpop.xlane.xlu0 %740
    %v742 = vrcp.pop %v738
    %v743 = vrcp.pop %v741
    %v744 = vmul.f32 %v733, %v742
    %v745 = vmul.f32 %v735, %v743
    %746 = vrot.lane.b32.xlu0 %v166, 40
    %v747 = vpop.permute.xlu0 %746
    %v750 = vsel %vm178, %v744, 0
    %752 = vmatpush.msra.mxu0 0.0
    %753 = vmatpush.msra.mxu0 0.0
    %754 = vmatpush.msra.mxu0 0.0
    %755 = vmatpush.msra.mxu0 0.0
    %756 = vmatpush.msra.mxu0 0.0
    %757 = vmatpush.msra.mxu0 0.0
    %758 = vmatpush.msra.mxu0 0.0
    %759 = vmatpush.msra.mxu0 0.0
    %760 = vmatpush.msra.mxu0 0.0
    %761 = vmatpush.msra.mxu0 0.0
    %762 = vmatpush.msra.mxu0 0.0
    %763 = vmatpush.msra.mxu0 0.0
    %764 = vmatpush.msra.mxu0 0.0
    %765 = vmatpush.msra.mxu0 0.0
    %766 = vmatpush.msra.mxu0 0.0
    %767 = vmatpush.msra.mxu0 %v747
    %768 = vmatmul.f32.gmra.mxu0 %v750
    %v769 = vpop.f32.mrf.mxu0
    %v770 = vadd.f32 0.0, %v769
    %771 = vdwg.mxu0
    %772 = vrot.lane.b32.xlu0 %v169, 40
    %v773 = vpop.permute.xlu0 %772
    %v776 = vsel %vm178, %v745, 0
    %778 = vmatpush.msra.mxu0 0.0
    %779 = vmatpush.msra.mxu0 0.0
    %780 = vmatpush.msra.mxu0 0.0
    %781 = vmatpush.msra.mxu0 0.0
    %782 = vmatpush.msra.mxu0 0.0
    %783 = vmatpush.msra.mxu0 0.0
    %784 = vmatpush.msra.mxu0 0.0
    %785 = vmatpush.msra.mxu0 0.0
    %786 = vmatpush.msra.mxu0 0.0
    %787 = vmatpush.msra.mxu0 0.0
    %788 = vmatpush.msra.mxu0 0.0
    %789 = vmatpush.msra.mxu0 0.0
    %790 = vmatpush.msra.mxu0 0.0
    %791 = vmatpush.msra.mxu0 0.0
    %792 = vmatpush.msra.mxu0 0.0
    %793 = vmatpush.msra.mxu0 %v773
    %794 = vmatmul.f32.gmra.mxu0 %v776
    %v795 = vpop.f32.mrf.mxu0
    %v796 = vadd.f32 0.0, %v795
    %797 = vdwg.mxu0
    %v798 = vld [vmem:[%s4 + $0x18] sm:$0xff]
    %v800 = vsel %vm178, %v770, 0
    %v803 = vsel %vm178, %v796, 0
    %805 = vmatpush.msra.mxu0 0.0
    %806 = vmatpush.msra.mxu0 0.0
    %807 = vmatpush.msra.mxu0 0.0
    %808 = vmatpush.msra.mxu0 0.0
    %809 = vmatpush.msra.mxu0 0.0
    %810 = vmatpush.msra.mxu0 0.0
    %811 = vmatpush.msra.mxu0 0.0
    %812 = vmatpush.msra.mxu0 0.0
    %813 = vmatpush.msra.mxu0 0.0
    %814 = vmatpush.msra.mxu0 0.0
    %815 = vmatpush.msra.mxu0 0.0
    %816 = vmatpush.msra.mxu0 0.0
    %817 = vmatpush.msra.mxu0 0.0
    %818 = vmatpush.msra.mxu0 0.0
    %819 = vmatpush.msra.mxu0 0.0
    %820 = vmatpush.msra.mxu0 %v798
    %821 = vmatmul.f32.gmra.mxu0 %v800
    %v822 = vpop.f32.mrf.mxu0
    %v823 = vadd.f32 0.0, %v822
    %824 = vmatmul.f32.gmra.mxu0 %v803
    %v825 = vpop.f32.mrf.mxu0
    %v826 = vadd.f32 0.0, %v825
    %827 = vdwg.mxu0
    %v828 = vadd.f32 %v664, %v823
    %v829 = vadd.f32 %v665, %v826
    %v830 = vadd.f32 %v72, %v828
    %v831 = vadd.f32 %v73, %v829
    %v832 = vld [vmem:[%s6] sm:$0x1]
    %v833 = vld [vmem:[%s7] sm:$0x1]
    %v834 = vsel %vm76, %v830, 0.0
    %835 = vadd.xlane.f32.xlu0 %v834
    %v836 = vpop.xlane.xlu0 %835
    %v837 = vsel %vm76, %v831, 0.0
    %838 = vadd.xlane.f32.xlu0 %v837
    %v839 = vpop.xlane.xlu0 %838
    %v840 = vmul.f32 %v836, %v89
    %v841 = vmul.f32 %v839, %v89
    %v842 = vsub.f32 %v830, %v840
    %v843 = vsub.f32 %v831, %v841
    %v844 = vmul.f32 %v842, %v842
    %v845 = vmul.f32 %v843, %v843
    %v846 = vsel %vm76, %v844, 0.0
    %847 = vadd.xlane.f32.xlu0 %v846
    %v848 = vpop.xlane.xlu0 %847
    %v849 = vsel %vm76, %v845, 0.0
    %850 = vadd.xlane.f32.xlu0 %v849
    %v851 = vpop.xlane.xlu0 %850
    %v852 = vmul.f32 %v848, %v89
    %v853 = vmul.f32 %v851, %v89
    %v854 = vadd.f32 %v852, 1e-05
    %v855 = vadd.f32 %v853, 1e-05
    %v856 = vrsqrt.pop %v854
    %v857 = vmul.f32 %v856, %v854
    %v858 = vmul.f32 %v857, %v856
    %v859 = vmul.f32 0.5, %v858
    %v860 = vsub.f32 1.5, %v859
    %v861 = vmul.f32 %v856, %v860
    %vm862 = vweird.f32 %v854
    %vm863 = vweird.f32 %v856
    %vm864 = vmor %vm862, %vm863
    %v865 = vsel %vm864, %v856, %v861
    %v866 = vrsqrt.pop %v855
    %v867 = vmul.f32 %v866, %v855
    %v868 = vmul.f32 %v867, %v866
    %v869 = vmul.f32 0.5, %v868
    %v870 = vsub.f32 1.5, %v869
    %v871 = vmul.f32 %v866, %v870
    %vm872 = vweird.f32 %v855
    %vm873 = vweird.f32 %v866
    %vm874 = vmor %vm872, %vm873
    %v875 = vsel %vm874, %v866, %v871
    %v876 = vmul.f32 %v842, %v865
    %v877 = vmul.f32 %v843, %v875
    %v879 = vperm.slane %v832, 0
    %v881 = vmul.f32 %v876, %v879
    %v882 = vmul.f32 %v877, %v879
    %v884 = vperm.slane %v833, 0
    %v886 = vadd.f32 %v881, %v884
    %v887 = vadd.f32 %v882, %v884
    %v888 = vld [vmem:[%s8] sm:$0xff]
    %v889 = vld [vmem:[%s8 + $0x8] sm:$0xff]
    %v890 = vld [vmem:[%s8 + $0x10] sm:$0xff]
    %v891 = vld [vmem:[%s8 + $0x18] sm:$0xff]
    %v892 = vld [vmem:[%s9] sm:$0x1]
    %v894 = vperm.slane %v892, 0
    %v897 = vsel %vm76, %v886, 0
    %v900 = vsel %vm76, %v887, 0
    %902 = vmatpush.msra.mxu0 0.0
    %903 = vmatpush.msra.mxu0 0.0
    %904 = vmatpush.msra.mxu0 0.0
    %905 = vmatpush.msra.mxu0 0.0
    %906 = vmatpush.msra.mxu0 0.0
    %907 = vmatpush.msra.mxu0 0.0
    %908 = vmatpush.msra.mxu0 0.0
    %909 = vmatpush.msra.mxu0 0.0
    %910 = vmatpush.msra.mxu0 0.0
    %911 = vmatpush.msra.mxu0 0.0
    %912 = vmatpush.msra.mxu0 0.0
    %913 = vmatpush.msra.mxu0 0.0
    %914 = vmatpush.msra.mxu0 %v891
    %915 = vmatpush.msra.mxu0 %v890
    %916 = vmatpush.msra.mxu0 %v889
    %917 = vmatpush.msra.mxu0 %v888
    %918 = vmatmul.f32.gmra.mxu0 %v897
    %v919 = vpop.f32.mrf.mxu0
    %v920 = vadd.f32 %v894, %v919
    %921 = vmatmul.f32.gmra.mxu0 %v900
    %v922 = vpop.f32.mrf.mxu0
    %v923 = vadd.f32 %v894, %v922
    %924 = vdwg.mxu0
    %v925 = vmul.f32 %v920, 0.5
    %v926 = vmul.f32 %v923, 0.5
    %v927 = vmul.f32 %v920, 0.70710677
    %v928 = vmul.f32 %v923, 0.70710677
    %vm929 = vcmp.ge.f32.partialorder %v927, 0.0
    %vm930 = vcmp.ge.f32.partialorder %v928, 0.0
    %v931 = vsel %vm929, 1.0, -1.0
    %v932 = vsel %vm930, 1.0, -1.0
    %v933 = vand.u32 2147483647, %v927
    %v934 = vand.u32 2147483647, %v928
    %v935 = vmul.f32 %v933, 0.3275911
    %v936 = vmul.f32 %v934, 0.3275911
    %v937 = vadd.f32 %v935, 1.0
    %v938 = vadd.f32 %v936, 1.0
    %v939 = vrcp.pop %v937
    %v940 = vmul.f32 %v937, %v939
    %v941 = vsub.f32 1.0, %v940
    %v942 = vmul.f32 %v939, %v941
    %v943 = vadd.f32 %v939, %v942
    %vm944 = vweird.f32 %v937
    %vm945 = vweird.f32 %v939
    %vm946 = vmor %vm944, %vm945
    %v947 = vsel %vm946, %v939, %v943
    %v948 = vand.u32 2147483647, %v937
    %vm949 = vcmp.eq.f32.partialorder %v948, 8.507059e+37
    %v950 = vand.u32 %v937, 2147483648
    %v951 = vor.u32 1.1754944e-38, %v950
    %v952 = vsel %vm949, %v951, %v947
    %v953 = vmul.f32 1.0, %v952
    %v954 = vrcp.pop %v938
    %v955 = vmul.f32 %v938, %v954
    %v956 = vsub.f32 1.0, %v955
    %v957 = vmul.f32 %v954, %v956
    %v958 = vadd.f32 %v954, %v957
    %vm959 = vweird.f32 %v938
    %vm960 = vweird.f32 %v954
    %vm961 = vmor %vm959, %vm960
    %v962 = vsel %vm961, %v954, %v958
    %v963 = vand.u32 2147483647, %v938
    %vm964 = vcmp.eq.f32.partialorder %v963, 8.507059e+37
    %v965 = vand.u32 %v938, 2147483648
    %v966 = vor.u32 1.1754944e-38, %v965
    %v967 = vsel %vm964, %v966, %v962
    %v968 = vmul.f32 1.0, %v967
    %v969 = vmul.f32 %v953, 1.0614054
    %v970 = vmul.f32 %v968, 1.0614054
    %v971 = vadd.f32 %v969, -1.4531521
    %v972 = vadd.f32 %v970, -1.4531521
    %v973 = vmul.f32 %v971, %v953
    %v974 = vmul.f32 %v972, %v968
    %v975 = vadd.f32 %v973, 1.4214138
    %v976 = vadd.f32 %v974, 1.4214138
    %v977 = vmul.f32 %v975, %v953
    %v978 = vmul.f32 %v976, %v968
    %v979 = vadd.f32 %v977, -0.28449672
    %v980 = vadd.f32 %v978, -0.28449672
    %v981 = vmul.f32 %v979, %v953
    %v982 = vmul.f32 %v980, %v968
    %v983 = vadd.f32 %v981, 0.2548296
    %v984 = vadd.f32 %v982, 0.2548296
    %v985 = vmul.f32 %v983, %v953
    %v986 = vmul.f32 %v984, %v968
    %v987 = vsub.f32 0.0, %v933
    %v988 = vsub.f32 0.0, %v934
    %v989 = vmul.f32 %v987, %v933
    %v990 = vmul.f32 %v988, %v934
    %v991 = vmul.f32 %v989, 1.442695
    %v992 = vpow.pop %v991
    %v993 = vmul.f32 %v990, 1.442695
    %v994 = vpow.pop %v993
    %v995 = vmul.f32 %v985, %v992
    %v996 = vmul.f32 %v986, %v994
    %v997 = vsub.f32 1.0, %v995
    %v998 = vsub.f32 1.0, %v996
    %v999 = vmul.f32 %v931, %v997
    %v1000 = vmul.f32 %v932, %v998
    %v1001 = vadd.f32 %v999, 1.0
    %v1002 = vadd.f32 %v1000, 1.0
    %v1003 = vmul.f32 %v925, %v1001
    %v1004 = vmul.f32 %v926, %v1002
    %v1005 = vld [vmem:[%s10] sm:$0xff]
    %v1006 = vld [vmem:[%s10 + $0x8] sm:$0xff]
    %v1007 = vld [vmem:[%s10 + $0x10] sm:$0xff]
    %v1008 = vld [vmem:[%s10 + $0x18] sm:$0xff]
    %v1009 = vld [vmem:[%s10 + $0x20] sm:$0xff]
    %v1010 = vld [vmem:[%s10 + $0x28] sm:$0xff]
    %v1011 = vld [vmem:[%s10 + $0x30] sm:$0xff]
    %v1012 = vld [vmem:[%s10 + $0x38] sm:$0xff]
    %v1013 = vld [vmem:[%s11] sm:$0x1]
    %v1015 = vperm.slane %v1013, 0
    %vm1017 = vcmask 523264
    %v1019 = vsel %vm1017, %v1003, 0
    %v1022 = vsel %vm1017, %v1004, 0
    %1024 = vmatpush.msra.mxu0 0.0
    %1025 = vmatpush.msra.mxu0 0.0
    %1026 = vmatpush.msra.mxu0 0.0
    %1027 = vmatpush.msra.mxu0 0.0
    %1028 = vmatpush.msra.mxu0 0.0
    %1029 = vmatpush.msra.mxu0 0.0
    %1030 = vmatpush.msra.mxu0 0.0
    %1031 = vmatpush.msra.mxu0 0.0
    %1032 = vmatpush.msra.mxu0 %v1012
    %1033 = vmatpush.msra.mxu0 %v1011
    %1034 = vmatpush.msra.mxu0 %v1010
    %1035 = vmatpush.msra.mxu0 %v1009
    %1036 = vmatpush.msra.mxu0 %v1008
    %1037 = vmatpush.msra.mxu0 %v1007
    %1038 = vmatpush.msra.mxu0 %v1006
    %1039 = vmatpush.msra.mxu0 %v1005
    %1040 = vmatmul.f32.gmra.mxu0 %v1019
    %v1041 = vpop.f32.mrf.mxu0
    %v1042 = vadd.f32 %v1015, %v1041
    %1043 = vmatmul.f32.gmra.mxu0 %v1022
    %v1044 = vpop.f32.mrf.mxu0
    %v1045 = vadd.f32 %v1015, %v1044
    %1046 = vdwg.mxu0
    %v1047 = vadd.f32 %v830, %v1042
    %v1048 = vadd.f32 %v831, %v1045
    %1049 = vst.msk [vmem:[#allocation7] sm:$0xff] %vm76, %v1047
    %1050 = vst.msk [vmem:[#allocation7 + $0x8] sm:$0xff] %vm76, %v1048
    // Predicated region
    $region58: #{tpu_custom_call.1} parent=1 // pred_check
      _
    $region59: #{tpu_custom_call.1} parent=1 // pred_check_branch
      %1052 = sbr.rel (0) target = $region61
    $region60: #{tpu_custom_call.1} parent=1 // pred_region
      %1054 = vsyncadd [#allocation4], 0
      %s1055 = sshll.u32 [#allocation7], 4
      %s1056 = int_to_ptr.vmem [resolvable:$true] %s1055
      %s1057 = sshll.u32 %s12, 4
      %s1058 = int_to_ptr.hbm [resolvable:$true] %s1057
      %1063 = dma.vmem_to_hbm [thread:$0]  %s1056, 256, %s1058, [#allocation4], 128, 128, 8
    $region61: #{tpu_custom_call.1} parent=1 // pred_fallthru
      _
    // Predicated region
    $region62: #{tpu_custom_call.1} parent=1 // pred_check
      _
    $region63: #{tpu_custom_call.1} parent=1 // pred_check_branch
      %1065 = sbr.rel (0) target = $region65
    $region64: #{tpu_custom_call.1} parent=1 // pred_region
      %1067 = dma.done [#allocation4], 256
    $region65: #{tpu_custom_call.1} parent=1 // pred_fallthru
      _
    %1068 = vsyncpa [#allocation3], 1
    %1069 = vsyncpa [#allocation6], 1
    %1070 = vsyncpa [#allocation4], 1

// kernel: tpu_custom_call.1
$region0: #{tpu_custom_call.1}
  #allocation0 [shape = 'u32[]', space=smem, size = 0x4, offset = 0x4, fixed_abs, tag = 'smem constant byte address 0x4 - core index']
  #allocation1 [shape = 'u32[72,128]{1,0:T(1,128)}', space=vmem, size = 0x9000, scoped, tag = 'internal scratch']
  %s0 = inlined_call_operand.hbm [shape: f32[16,32], index: 0, kind: input, shape index: {}]
  %s1 = inlined_call_operand.hbm [shape: f32[1,32], index: 1, kind: input, shape index: {}]
  %s2 = inlined_call_operand.vmem [shape: f32[1,32], index: 2, kind: input, shape index: {}]
  %s3 = inlined_call_operand.vmem [shape: f32[32,96], index: 3, kind: input, shape index: {}]
  %s4 = inlined_call_operand.vmem [shape: f32[32,32], index: 4, kind: input, shape index: {}]
  %s5 = inlined_call_operand.vmem [shape: f32[1,32], index: 5, kind: input, shape index: {}]
  %s6 = inlined_call_operand.vmem [shape: f32[1,32], index: 6, kind: input, shape index: {}]
  %s7 = inlined_call_operand.vmem [shape: f32[1,32], index: 7, kind: input, shape index: {}]
  %s8 = inlined_call_operand.vmem [shape: f32[32,64], index: 8, kind: input, shape index: {}]
  %s9 = inlined_call_operand.vmem [shape: f32[1,64], index: 9, kind: input, shape index: {}]
  %s10 = inlined_call_operand.vmem [shape: f32[64,32], index: 10, kind: input, shape index: {}]
  %s11 = inlined_call_operand.vmem [shape: f32[1,32], index: 11, kind: input, shape index: {}]
  %s12 = inlined_call_operand.hbm [shape: f32[16,32], index: 12, kind: output, shape index: {}]
  %s13 = sld [smem:[#allocation0]]
  $region66: #{tpu_custom_call.1} parent=0
    _
  %s15 = ssub.s32 1, %s13
  %s16 = scalar_select 0, %s15, %s13
  $region1: #{tpu_custom_call.1} parent=0
    #allocation2 [shape = 'u8[8192]{0}', space=vmem, size = 0x2000, scoped, tag = 'input window, operand 0, single buffered']
    #allocation3 [shape = 's32[1]{0}', space=sflag, size = 0x4, scoped, tag = 'scoped memory for tpu_custom_call.1']
    #allocation4 [shape = 's32[1]{0}', space=sflag, size = 0x4, scoped, tag = 'scoped memory for tpu_custom_call.1']
    #allocation5 [shape = 'u8[512]{0}', space=vmem, size = 0x400, scoped, tag = 'input window, operand 1, single buffered']
    #allocation6 [shape = 's32[1]{0}', space=sflag, size = 0x4, scoped, tag = 'scoped memory for tpu_custom_call.1']
    #allocation7 [shape = 'u8[8192]{0}', space=vmem, size = 0x2000, scoped, tag = 'output window, operand 0, single buffered']
    %17 = vsyncpa [#allocation3], 0
    %18 = vsyncpa [#allocation6], 0
    %19 = vsyncpa [#allocation4], 0
    // Predicated region
    $region2: #{tpu_custom_call.1} parent=1 // pred_check
      _
    $region3: #{tpu_custom_call.1} parent=1 // pred_check_branch
      %21 = sbr.rel (0) target = $region5
    $region4: #{tpu_custom_call.1} parent=1 // pred_region
      %23 = vsyncadd [#allocation3], 0
      %s24 = sshll.u32 %s0, 4
      %s25 = int_to_ptr.hbm [resolvable:$true] %s24
      %s26 = sshll.u32 [#allocation2], 4
      %s27 = int_to_ptr.vmem [resolvable:$true] %s26
      %32 = dma.hbm_to_vmem [thread:$0]  %s25, 256, %s27, [#allocation3], 128, 128, 8
    $region5: #{tpu_custom_call.1} parent=1 // pred_fallthru
      _
    // Predicated region
    $region6: #{tpu_custom_call.1} parent=1 // pred_check
      _
    $region7: #{tpu_custom_call.1} parent=1 // pred_check_branch
      %34 = sbr.rel (0) target = $region9
    $region8: #{tpu_custom_call.1} parent=1 // pred_region
      %36 = vsyncadd [#allocation6], 0
      %s38 = sshll.u32 %s1, 4
      %s39 = int_to_ptr.hbm [resolvable:$true] %s38
      %s40 = sshll.u32 [#allocation5], 4
      %s41 = int_to_ptr.vmem [resolvable:$true] %s40
      %43 = dma.hbm_to_vmem [thread:$0]  %s39, 16, %s41, [#allocation6]
    $region9: #{tpu_custom_call.1} parent=1 // pred_fallthru
      _
    // Predicated region
    $region10: #{tpu_custom_call.1} parent=1 // pred_check
      _
    $region11: #{tpu_custom_call.1} parent=1 // pred_check_branch
      %45 = sbr.rel (0) target = $region13
    $region12: #{tpu_custom_call.1} parent=1 // pred_region
      _
    $region13: #{tpu_custom_call.1} parent=1 // pred_fallthru
      _
    // Predicated region
    $region14: #{tpu_custom_call.1} parent=1 // pred_check
      _
    $region15: #{tpu_custom_call.1} parent=1 // pred_check_branch
      %47 = sbr.rel (0) target = $region17
    $region16: #{tpu_custom_call.1} parent=1 // pred_region
      _
    $region17: #{tpu_custom_call.1} parent=1 // pred_fallthru
      _
    // Predicated region
    $region18: #{tpu_custom_call.1} parent=1 // pred_check
      _
    $region19: #{tpu_custom_call.1} parent=1 // pred_check_branch
      %49 = sbr.rel (0) target = $region21
    $region20: #{tpu_custom_call.1} parent=1 // pred_region
      _
    $region21: #{tpu_custom_call.1} parent=1 // pred_fallthru
      _
    // Predicated region
    $region22: #{tpu_custom_call.1} parent=1 // pred_check
      _
    $region23: #{tpu_custom_call.1} parent=1 // pred_check_branch
      %51 = sbr.rel (0) target = $region25
    $region24: #{tpu_custom_call.1} parent=1 // pred_region
      _
    $region25: #{tpu_custom_call.1} parent=1 // pred_fallthru
      _
    // Predicated region
    $region26: #{tpu_custom_call.1} parent=1 // pred_check
      _
    $region27: #{tpu_custom_call.1} parent=1 // pred_check_branch
      %53 = sbr.rel (0) target = $region29
    $region28: #{tpu_custom_call.1} parent=1 // pred_region
      _
    $region29: #{tpu_custom_call.1} parent=1 // pred_fallthru
      _
    // Predicated region
    $region30: #{tpu_custom_call.1} parent=1 // pred_check
      _
    $region31: #{tpu_custom_call.1} parent=1 // pred_check_branch
      %55 = sbr.rel (0) target = $region33
    $region32: #{tpu_custom_call.1} parent=1 // pred_region
      _
    $region33: #{tpu_custom_call.1} parent=1 // pred_fallthru
      _
    // Predicated region
    $region34: #{tpu_custom_call.1} parent=1 // pred_check
      _
    $region35: #{tpu_custom_call.1} parent=1 // pred_check_branch
      %57 = sbr.rel (0) target = $region37
    $region36: #{tpu_custom_call.1} parent=1 // pred_region
      _
    $region37: #{tpu_custom_call.1} parent=1 // pred_fallthru
      _
    // Predicated region
    $region38: #{tpu_custom_call.1} parent=1 // pred_check
      _
    $region39: #{tpu_custom_call.1} parent=1 // pred_check_branch
      %59 = sbr.rel (0) target = $region41
    $region40: #{tpu_custom_call.1} parent=1 // pred_region
      _
    $region41: #{tpu_custom_call.1} parent=1 // pred_fallthru
      _
    // Predicated region
    $region42: #{tpu_custom_call.1} parent=1 // pred_check
      _
    $region43: #{tpu_custom_call.1} parent=1 // pred_check_branch
      %61 = sbr.rel (0) target = $region45
    $region44: #{tpu_custom_call.1} parent=1 // pred_region
      _
    $region45: #{tpu_custom_call.1} parent=1 // pred_fallthru
      _
    // Predicated region
    $region46: #{tpu_custom_call.1} parent=1 // pred_check
      _
    $region47: #{tpu_custom_call.1} parent=1 // pred_check_branch
      %63 = sbr.rel (0) target = $region49
    $region48: #{tpu_custom_call.1} parent=1 // pred_region
      _
    $region49: #{tpu_custom_call.1} parent=1 // pred_fallthru
      _
    // Predicated region
    $region50: #{tpu_custom_call.1} parent=1 // pred_check
      _
    $region51: #{tpu_custom_call.1} parent=1 // pred_check_branch
      %65 = sbr.rel (0) target = $region53
    $region52: #{tpu_custom_call.1} parent=1 // pred_region
      %67 = dma.done [#allocation3], 256
    $region53: #{tpu_custom_call.1} parent=1 // pred_fallthru
      _
    // Predicated region
    $region54: #{tpu_custom_call.1} parent=1 // pred_check
      _
    $region55: #{tpu_custom_call.1} parent=1 // pred_check_branch
      %69 = sbr.rel (0) target = $region57
    $region56: #{tpu_custom_call.1} parent=1 // pred_region
      %71 = dma.done [#allocation6], 16
    $region57: #{tpu_custom_call.1} parent=1 // pred_fallthru
      _
    %v72 = vld [vmem:[#allocation2] sm:$0xff]
    %v73 = vld [vmem:[#allocation2 + $0x8] sm:$0xff]
    %v74 = vld [vmem:[#allocation5] sm:$0x1]
    %v75 = vld [vmem:[%s2] sm:$0x1]
    %vm76 = vcmask 261120
    %v77 = vsel %vm76, %v72, 0.0
    %78 = vadd.xlane.f32.xlu0 %v77
    %v79 = vpop.xlane.xlu0 %78
    %v80 = vsel %vm76, %v73, 0.0
    %81 = vadd.xlane.f32.xlu0 %v80
    %v82 = vpop.xlane.xlu0 %81
    %v83 = vrcp.pop 32.0
    %v84 = vmul.f32 32.0, %v83
    %v85 = vsub.f32 1.0, %v84
    %v86 = vmul.f32 %v83, %v85
    %v87 = vadd.f32 %v83, %v86
    %vm88 = vweird.f32 %v83
    %v89 = vsel %vm88, %v83, %v87
    %v90 = vmul.f32 %v79, %v89
    %v91 = vmul.f32 %v82, %v89
    %v92 = vsub.f32 %v72, %v90
    %v93 = vsub.f32 %v73, %v91
    %v94 = vmul.f32 %v92, %v92
    %v95 = vmul.f32 %v93, %v93
    %v96 = vsel %vm76, %v94, 0.0
    %97 = vadd.xlane.f32.xlu0 %v96
    %v98 = vpop.xlane.xlu0 %97
    %v99 = vsel %vm76, %v95, 0.0
    %100 = vadd.xlane.f32.xlu0 %v99
    %v101 = vpop.xlane.xlu0 %100
    %v102 = vmul.f32 %v98, %v89
    %v103 = vmul.f32 %v101, %v89
    %v104 = vadd.f32 %v102, 1e-05
    %v105 = vadd.f32 %v103, 1e-05
    %v106 = vrsqrt.pop %v104
    %v107 = vmul.f32 %v106, %v104
    %v108 = vmul.f32 %v107, %v106
    %v109 = vmul.f32 0.5, %v108
    %v110 = vsub.f32 1.5, %v109
    %v111 = vmul.f32 %v106, %v110
    %vm112 = vweird.f32 %v104
    %vm113 = vweird.f32 %v106
    %vm114 = vmor %vm112, %vm113
    %v115 = vsel %vm114, %v106, %v111
    %v116 = vrsqrt.pop %v105
    %v117 = vmul.f32 %v116, %v105
    %v118 = vmul.f32 %v117, %v116
    %v119 = vmul.f32 0.5, %v118
    %v120 = vsub.f32 1.5, %v119
    %v121 = vmul.f32 %v116, %v120
    %vm122 = vweird.f32 %v105
    %vm123 = vweird.f32 %v116
    %vm124 = vmor %vm122, %vm123
    %v125 = vsel %vm124, %v116, %v121
    %v126 = vmul.f32 %v92, %v115
    %v127 = vmul.f32 %v93, %v125
    %v129 = vperm.slane %v74, 0
    %v131 = vmul.f32 %v126, %v129
    %v132 = vmul.f32 %v127, %v129
    %v134 = vperm.slane %v75, 0
    %v136 = vadd.f32 %v131, %v134
    %v137 = vadd.f32 %v132, %v134
    %v138 = vld [vmem:[%s3] sm:$0xff]
    %v139 = vld [vmem:[%s3 + $0x8] sm:$0xff]
    %v140 = vld [vmem:[%s3 + $0x10] sm:$0xff]
    %v141 = vld [vmem:[%s3 + $0x18] sm:$0xff]
    %v143 = vsel %vm76, %v136, 0
    %v146 = vsel %vm76, %v137, 0
    %148 = vmatpush.msra.mxu0 0.0
    %149 = vmatpush.msra.mxu0 0.0
    %150 = vmatpush.msra.mxu0 0.0
    %151 = vmatpush.msra.mxu0 0.0
    %152 = vmatpush.msra.mxu0 0.0
    %153 = vmatpush.msra.mxu0 0.0
    %154 = vmatpush.msra.mxu0 0.0
    %155 = vmatpush.msra.mxu0 0.0
    %156 = vmatpush.msra.mxu0 0.0
    %157 = vmatpush.msra.mxu0 0.0
    %158 = vmatpush.msra.mxu0 0.0
    %159 = vmatpush.msra.mxu0 0.0
    %160 = vmatpush.msra.mxu0 %v141
    %161 = vmatpush.msra.mxu0 %v140
    %162 = vmatpush.msra.mxu0 %v139
    %163 = vmatpush.msra.mxu0 %v138
    %164 = vmatmul.f32.gmra.mxu0 %v143
    %v165 = vpop.f32.mrf.mxu0
    %v166 = vadd.f32 0.0, %v165
    %167 = vmatmul.f32.gmra.mxu0 %v146
    %v168 = vpop.f32.mrf.mxu0
    %v169 = vadd.f32 0.0, %v168
    %170 = vdwg.mxu0
    %v171 = vld [vmem:[%s5] sm:$0x1]
    %v173 = vperm.slane %v171, 0
    %176 = vrot.lane.b32.xlu0 %v166, 96
    %v177 = vpop.permute.xlu0 %176
    %vm178 = vcmask 64512
    %v179 = vsel %vm178, %v166, 0
    %v181 = vsel %vm178, %v177, 0
    %183 = vmatpush.xpose.msra.mxu0 0.0
    %184 = vmatpush.xpose.msra.mxu0 0.0
    %185 = vmatpush.xpose.msra.mxu0 0.0
    %186 = vmatpush.xpose.msra.mxu0 0.0
    %187 = vmatpush.xpose.msra.mxu0 0.0
    %188 = vmatpush.xpose.msra.mxu0 0.0
    %189 = vmatpush.xpose.msra.mxu0 0.0
    %190 = vmatpush.xpose.msra.mxu0 0.0
    %191 = vmatpush.xpose.msra.mxu0 0.0
    %192 = vmatpush.xpose.msra.mxu0 0.0
    %193 = vmatpush.xpose.msra.mxu0 0.0
    %194 = vmatpush.xpose.msra.mxu0 0.0
    %195 = vmatpush.xpose.msra.mxu0 0.0
    %196 = vmatpush.xpose.msra.mxu0 0.0
    %197 = vmatpush.xpose.msra.mxu0 0.0
    %198 = vmatpush.xpose.msra.mxu0 %v181
    %199 = vmatmul.f32.gmra.mxu0 %v179
    %v200 = vpop.f32.mrf.mxu0
    %v201 = vadd.f32 0.0, %v200
    %202 = vdwg.mxu0
    %204 = vrot.lane.b32.xlu0 %v169, 96
    %v205 = vpop.permute.xlu0 %204
    %v206 = vsel %vm178, %v169, 0
    %v208 = vsel %vm178, %v205, 0
    %210 = vmatpush.xpose.msra.mxu0 0.0
    %211 = vmatpush.xpose.msra.mxu0 0.0
    %212 = vmatpush.xpose.msra.mxu0 0.0
    %213 = vmatpush.xpose.msra.mxu0 0.0
    %214 = vmatpush.xpose.msra.mxu0 0.0
    %215 = vmatpush.xpose.msra.mxu0 0.0
    %216 = vmatpush.xpose.msra.mxu0 0.0
    %217 = vmatpush.xpose.msra.mxu0 0.0
    %218 = vmatpush.xpose.msra.mxu0 0.0
    %219 = vmatpush.xpose.msra.mxu0 0.0
    %220 = vmatpush.xpose.msra.mxu0 0.0
    %221 = vmatpush.xpose.msra.mxu0 0.0
    %222 = vmatpush.xpose.msra.mxu0 0.0
    %223 = vmatpush.xpose.msra.mxu0 0.0
    %224 = vmatpush.xpose.msra.mxu0 0.0
    %225 = vmatpush.xpose.msra.mxu0 %v208
    %226 = vmatmul.f32.gmra.mxu0 %v206
    %v227 = vpop.f32.mrf.mxu0
    %v228 = vadd.f32 0.0, %v227
    %229 = vdwg.mxu0
    %v230 = vmul.f32 %v201, 0.35355338
    %v231 = vmul.f32 %v228, 0.35355338
    %v232 = vsel %vm178, %v230, -inf
    %233 = vmax.xlane.f32.xlu0 %v232
    %v234 = vpop.xlane.xlu0 %233
    %v235 = vsel %vm178, %v231, -inf
    %236 = vmax.xlane.f32.xlu0 %v235
    %v237 = vpop.xlane.xlu0 %236
    %v238 = vsub.f32 %v230, %v234
    %v239 = vsub.f32 %v231, %v237
    %v240 = vmul.f32 %v238, 1.442695
    %v241 = vpow.pop %v240
    %v242 = vmul.f32 %v239, 1.442695
    %v243 = vpow.pop %v242
    %v244 = vsel %vm178, %v241, 0.0
    %245 = vadd.xlane.f32.xlu0 %v244
    %v246 = vpop.xlane.xlu0 %245
    %v247 = vsel %vm178, %v243, 0.0
    %248 = vadd.xlane.f32.xlu0 %v247
    %v249 = vpop.xlane.xlu0 %248
    %v250 = vrcp.pop %v246
    %v251 = vrcp.pop %v249
    %v252 = vmul.f32 %v241, %v250
    %v253 = vmul.f32 %v243, %v251
    %254 = vrot.lane.b32.xlu0 %v166, 64
    %v255 = vpop.permute.xlu0 %254
    %v258 = vsel %vm178, %v252, 0
    %260 = vmatpush.msra.mxu0 0.0
    %261 = vmatpush.msra.mxu0 0.0
    %262 = vmatpush.msra.mxu0 0.0
    %263 = vmatpush.msra.mxu0 0.0
    %264 = vmatpush.msra.mxu0 0.0
    %265 = vmatpush.msra.mxu0 0.0
    %266 = vmatpush.msra.mxu0 0.0
    %267 = vmatpush.msra.mxu0 0.0
    %268 = vmatpush.msra.mxu0 0.0
    %269 = vmatpush.msra.mxu0 0.0
    %270 = vmatpush.msra.mxu0 0.0
    %271 = vmatpush.msra.mxu0 0.0
    %272 = vmatpush.msra.mxu0 0.0
    %273 = vmatpush.msra.mxu0 0.0
    %274 = vmatpush.msra.mxu0 0.0
    %275 = vmatpush.msra.mxu0 %v255
    %276 = vmatmul.f32.gmra.mxu0 %v258
    %v277 = vpop.f32.mrf.mxu0
    %v278 = vadd.f32 0.0, %v277
    %279 = vdwg.mxu0
    %280 = vrot.lane.b32.xlu0 %v169, 64
    %v281 = vpop.permute.xlu0 %280
    %v284 = vsel %vm178, %v253, 0
    %286 = vmatpush.msra.mxu0 0.0
    %287 = vmatpush.msra.mxu0 0.0
    %288 = vmatpush.msra.mxu0 0.0
    %289 = vmatpush.msra.mxu0 0.0
    %290 = vmatpush.msra.mxu0 0.0
    %291 = vmatpush.msra.mxu0 0.0
    %292 = vmatpush.msra.mxu0 0.0
    %293 = vmatpush.msra.mxu0 0.0
    %294 = vmatpush.msra.mxu0 0.0
    %295 = vmatpush.msra.mxu0 0.0
    %296 = vmatpush.msra.mxu0 0.0
    %297 = vmatpush.msra.mxu0 0.0
    %298 = vmatpush.msra.mxu0 0.0
    %299 = vmatpush.msra.mxu0 0.0
    %300 = vmatpush.msra.mxu0 0.0
    %301 = vmatpush.msra.mxu0 %v281
    %302 = vmatmul.f32.gmra.mxu0 %v284
    %v303 = vpop.f32.mrf.mxu0
    %v304 = vadd.f32 0.0, %v303
    %305 = vdwg.mxu0
    %v306 = vld [vmem:[%s4] sm:$0xff]
    %v308 = vsel %vm178, %v278, 0
    %v311 = vsel %vm178, %v304, 0
    %313 = vmatpush.msra.mxu0 0.0
    %314 = vmatpush.msra.mxu0 0.0
    %315 = vmatpush.msra.mxu0 0.0
    %316 = vmatpush.msra.mxu0 0.0
    %317 = vmatpush.msra.mxu0 0.0
    %318 = vmatpush.msra.mxu0 0.0
    %319 = vmatpush.msra.mxu0 0.0
    %320 = vmatpush.msra.mxu0 0.0
    %321 = vmatpush.msra.mxu0 0.0
    %322 = vmatpush.msra.mxu0 0.0
    %323 = vmatpush.msra.mxu0 0.0
    %324 = vmatpush.msra.mxu0 0.0
    %325 = vmatpush.msra.mxu0 0.0
    %326 = vmatpush.msra.mxu0 0.0
    %327 = vmatpush.msra.mxu0 0.0
    %328 = vmatpush.msra.mxu0 %v306
    %329 = vmatmul.f32.gmra.mxu0 %v308
    %v330 = vpop.f32.mrf.mxu0
    %v331 = vadd.f32 0.0, %v330
    %332 = vmatmul.f32.gmra.mxu0 %v311
    %v333 = vpop.f32.mrf.mxu0
    %v334 = vadd.f32 0.0, %v333
    %335 = vdwg.mxu0
    %v336 = vadd.f32 %v173, %v331
    %v337 = vadd.f32 %v173, %v334
    %338 = vrot.lane.b32.xlu0 %v166, 120
    %v339 = vpop.permute.xlu0 %338
    %340 = vrot.lane.b32.xlu0 %v166, 88
    %v341 = vpop.permute.xlu0 %340
    %v342 = vsel %vm178, %v339, 0
    %v344 = vsel %vm178, %v341, 0
    %346 = vmatpush.xpose.msra.mxu0 0.0
    %347 = vmatpush.xpose.msra.mxu0 0.0
    %348 = vmatpush.xpose.msra.mxu0 0.0
    %349 = vmatpush.xpose.msra.mxu0 0.0
    %350 = vmatpush.xpose.msra.mxu0 0.0
    %351 = vmatpush.xpose.msra.mxu0 0.0
    %352 = vmatpush.xpose.msra.mxu0 0.0
    %353 = vmatpush.xpose.msra.mxu0 0.0
    %354 = vmatpush.xpose.msra.mxu0 0.0
    %355 = vmatpush.xpose.msra.mxu0 0.0
    %356 = vmatpush.xpose.msra.mxu0 0.0
    %357 = vmatpush.xpose.msra.mxu0 0.0
    %358 = vmatpush.xpose.msra.mxu0 0.0
    %359 = vmatpush.xpose.msra.mxu0 0.0
    %360 = vmatpush.xpose.msra.mxu0 0.0
    %361 = vmatpush.xpose.msra.mxu0 %v344
    %362 = vmatmul.f32.gmra.mxu0 %v342
    %v363 = vpop.f32.mrf.mxu0
    %v364 = vadd.f32 0.0, %v363
    %365 = vdwg.mxu0
    %366 = vrot.lane.b32.xlu0 %v169, 120
    %v367 = vpop.permute.xlu0 %366
    %368 = vrot.lane.b32.xlu0 %v169, 88
    %v369 = vpop.permute.xlu0 %368
    %v370 = vsel %vm178, %v367, 0
    %v372 = vsel %vm178, %v369, 0
    %374 = vmatpush.xpose.msra.mxu0 0.0
    %375 = vmatpush.xpose.msra.mxu0 0.0
    %376 = vmatpush.xpose.msra.mxu0 0.0
    %377 = vmatpush.xpose.msra.mxu0 0.0
    %378 = vmatpush.xpose.msra.mxu0 0.0
    %379 = vmatpush.xpose.msra.mxu0 0.0
    %380 = vmatpush.xpose.msra.mxu0 0.0
    %381 = vmatpush.xpose.msra.mxu0 0.0
    %382 = vmatpush.xpose.msra.mxu0 0.0
    %383 = vmatpush.xpose.msra.mxu0 0.0
    %384 = vmatpush.xpose.msra.mxu0 0.0
    %385 = vmatpush.xpose.msra.mxu0 0.0
    %386 = vmatpush.xpose.msra.mxu0 0.0
    %387 = vmatpush.xpose.msra.mxu0 0.0
    %388 = vmatpush.xpose.msra.mxu0 0.0
    %389 = vmatpush.xpose.msra.mxu0 %v372
    %390 = vmatmul.f32.gmra.mxu0 %v370
    %v391 = vpop.f32.mrf.mxu0
    %v392 = vadd.f32 0.0, %v391
    %393 = vdwg.mxu0
    %v394 = vmul.f32 %v364, 0.35355338
    %v395 = vmul.f32 %v392, 0.35355338
    %v396 = vsel %vm178, %v394, -inf
    %397 = vmax.xlane.f32.xlu0 %v396
    %v398 = vpop.xlane.xlu0 %397
    %v399 = vsel %vm178, %v395, -inf
    %400 = vmax.xlane.f32.xlu0 %v399
    %v401 = vpop.xlane.xlu0 %400
    %v402 = vsub.f32 %v394, %v398
    %v403 = vsub.f32 %v395, %v401
    %v404 = vmul.f32 %v402, 1.442695
    %v405 = vpow.pop %v404
    %v406 = vmul.f32 %v403, 1.442695
    %v407 = vpow.pop %v406
    %v408 = vsel %vm178, %v405, 0.0
    %409 = vadd.xlane.f32.xlu0 %v408
    %v410 = vpop.xlane.xlu0 %409
    %v411 = vsel %vm178, %v407, 0.0
    %412 = vadd.xlane.f32.xlu0 %v411
    %v413 = vpop.xlane.xlu0 %412
    %v414 = vrcp.pop %v410
    %v415 = vrcp.pop %v413
    %v416 = vmul.f32 %v405, %v414
    %v417 = vmul.f32 %v407, %v415
    %418 = vrot.lane.b32.xlu0 %v166, 56
    %v419 = vpop.permute.xlu0 %418
    %v422 = vsel %vm178, %v416, 0
    %424 = vmatpush.msra.mxu0 0.0
    %425 = vmatpush.msra.mxu0 0.0
    %426 = vmatpush.msra.mxu0 0.0
    %427 = vmatpush.msra.mxu0 0.0
    %428 = vmatpush.msra.mxu0 0.0
    %429 = vmatpush.msra.mxu0 0.0
    %430 = vmatpush.msra.mxu0 0.0
    %431 = vmatpush.msra.mxu0 0.0
    %432 = vmatpush.msra.mxu0 0.0
    %433 = vmatpush.msra.mxu0 0.0
    %434 = vmatpush.msra.mxu0 0.0
    %435 = vmatpush.msra.mxu0 0.0
    %436 = vmatpush.msra.mxu0 0.0
    %437 = vmatpush.msra.mxu0 0.0
    %438 = vmatpush.msra.mxu0 0.0
    %439 = vmatpush.msra.mxu0 %v419
    %440 = vmatmul.f32.gmra.mxu0 %v422
    %v441 = vpop.f32.mrf.mxu0
    %v442 = vadd.f32 0.0, %v441
    %443 = vdwg.mxu0
    %444 = vrot.lane.b32.xlu0 %v169, 56
    %v445 = vpop.permute.xlu0 %444
    %v448 = vsel %vm178, %v417, 0
    %450 = vmatpush.msra.mxu0 0.0
    %451 = vmatpush.msra.mxu0 0.0
    %452 = vmatpush.msra.mxu0 0.0
    %453 = vmatpush.msra.mxu0 0.0
    %454 = vmatpush.msra.mxu0 0.0
    %455 = vmatpush.msra.mxu0 0.0
    %456 = vmatpush.msra.mxu0 0.0
    %457 = vmatpush.msra.mxu0 0.0
    %458 = vmatpush.msra.mxu0 0.0
    %459 = vmatpush.msra.mxu0 0.0
    %460 = vmatpush.msra.mxu0 0.0
    %461 = vmatpush.msra.mxu0 0.0
    %462 = vmatpush.msra.mxu0 0.0
    %463 = vmatpush.msra.mxu0 0.0
    %464 = vmatpush.msra.mxu0 0.0
    %465 = vmatpush.msra.mxu0 %v445
    %466 = vmatmul.f32.gmra.mxu0 %v448
    %v467 = vpop.f32.mrf.mxu0
    %v468 = vadd.f32 0.0, %v467
    %469 = vdwg.mxu0
    %v470 = vld [vmem:[%s4 + $0x8] sm:$0xff]
    %v472 = vsel %vm178, %v442, 0
    %v475 = vsel %vm178, %v468, 0
    %477 = vmatpush.msra.mxu0 0.0
    %478 = vmatpush.msra.mxu0 0.0
    %479 = vmatpush.msra.mxu0 0.0
    %480 = vmatpush.msra.mxu0 0.0
    %481 = vmatpush.msra.mxu0 0.0
    %482 = vmatpush.msra.mxu0 0.0
    %483 = vmatpush.msra.mxu0 0.0
    %484 = vmatpush.msra.mxu0 0.0
    %485 = vmatpush.msra.mxu0 0.0
    %486 = vmatpush.msra.mxu0 0.0
    %487 = vmatpush.msra.mxu0 0.0
    %488 = vmatpush.msra.mxu0 0.0
    %489 = vmatpush.msra.mxu0 0.0
    %490 = vmatpush.msra.mxu0 0.0
    %491 = vmatpush.msra.mxu0 0.0
    %492 = vmatpush.msra.mxu0 %v470
    %493 = vmatmul.f32.gmra.mxu0 %v472
    %v494 = vpop.f32.mrf.mxu0
    %v495 = vadd.f32 0.0, %v494
    %496 = vmatmul.f32.gmra.mxu0 %v475
    %v497 = vpop.f32.mrf.mxu0
    %v498 = vadd.f32 0.0, %v497
    %499 = vdwg.mxu0
    %v500 = vadd.f32 %v336, %v495
    %v501 = vadd.f32 %v337, %v498
    %502 = vrot.lane.b32.xlu0 %v166, 112
    %v503 = vpop.permute.xlu0 %502
    %504 = vrot.lane.b32.xlu0 %v166, 80
    %v505 = vpop.permute.xlu0 %504
    %v506 = vsel %vm178, %v503, 0
    %v508 = vsel %vm178, %v505, 0
    %510 = vmatpush.xpose.msra.mxu0 0.0
    %511 = vmatpush.xpose.msra.mxu0 0.0
    %512 = vmatpush.xpose.msra.mxu0 0.0
    %513 = vmatpush.xpose.msra.mxu0 0.0
    %514 = vmatpush.xpose.msra.mxu0 0.0
    %515 = vmatpush.xpose.msra.mxu0 0.0
    %516 = vmatpush.xpose.msra.mxu0 0.0
    %517 = vmatpush.xpose.msra.mxu0 0.0
    %518 = vmatpush.xpose.msra.mxu0 0.0
    %519 = vmatpush.xpose.msra.mxu0 0.0
    %520 = vmatpush.xpose.msra.mxu0 0.0
    %521 = vmatpush.xpose.msra.mxu0 0.0
    %522 = vmatpush.xpose.msra.mxu0 0.0
    %523 = vmatpush.xpose.msra.mxu0 0.0
    %524 = vmatpush.xpose.msra.mxu0 0.0
    %525 = vmatpush.xpose.msra.mxu0 %v508
    %526 = vmatmul.f32.gmra.mxu0 %v506
    %v527 = vpop.f32.mrf.mxu0
    %v528 = vadd.f32 0.0, %v527
    %529 = vdwg.mxu0
    %530 = vrot.lane.b32.xlu0 %v169, 112
    %v531 = vpop.permute.xlu0 %530
    %532 = vrot.lane.b32.xlu0 %v169, 80
    %v533 = vpop.permute.xlu0 %532
    %v534 = vsel %vm178, %v531, 0
    %v536 = vsel %vm178, %v533, 0
    %538 = vmatpush.xpose.msra.mxu0 0.0
    %539 = vmatpush.xpose.msra.mxu0 0.0
    %540 = vmatpush.xpose.msra.mxu0 0.0
    %541 = vmatpush.xpose.msra.mxu0 0.0
    %542 = vmatpush.xpose.msra.mxu0 0.0
    %543 = vmatpush.xpose.msra.mxu0 0.0
    %544 = vmatpush.xpose.msra.mxu0 0.0
    %545 = vmatpush.xpose.msra.mxu0 0.0
    %546 = vmatpush.xpose.msra.mxu0 0.0
    %547 = vmatpush.xpose.msra.mxu0 0.0
    %548 = vmatpush.xpose.msra.mxu0 0.0
    %549 = vmatpush.xpose.msra.mxu0 0.0
    %550 = vmatpush.xpose.msra.mxu0 0.0
    %551 = vmatpush.xpose.msra.mxu0 0.0
    %552 = vmatpush.xpose.msra.mxu0 0.0
    %553 = vmatpush.xpose.msra.mxu0 %v536
    %554 = vmatmul.f32.gmra.mxu0 %v534
    %v555 = vpop.f32.mrf.mxu0
    %v556 = vadd.f32 0.0, %v555
    %557 = vdwg.mxu0
    %v558 = vmul.f32 %v528, 0.35355338
    %v559 = vmul.f32 %v556, 0.35355338
    %v560 = vsel %vm178, %v558, -inf
    %561 = vmax.xlane.f32.xlu0 %v560
    %v562 = vpop.xlane.xlu0 %561
    %v563 = vsel %vm178, %v559, -inf
    %564 = vmax.xlane.f32.xlu0 %v563
    %v565 = vpop.xlane.xlu0 %564
    %v566 = vsub.f32 %v558, %v562
    %v567 = vsub.f32 %v559, %v565
    %v568 = vmul.f32 %v566, 1.442695
    %v569 = vpow.pop %v568
    %v570 = vmul.f32 %v567, 1.442695
    %v571 = vpow.pop %v570
    %v572 = vsel %vm178, %v569, 0.0
    %573 = vadd.xlane.f32.xlu0 %v572
    %v574 = vpop.xlane.xlu0 %573
    %v575 = vsel %vm178, %v571, 0.0
    %576 = vadd.xlane.f32.xlu0 %v575
    %v577 = vpop.xlane.xlu0 %576
    %v578 = vrcp.pop %v574
    %v579 = vrcp.pop %v577
    %v580 = vmul.f32 %v569, %v578
    %v581 = vmul.f32 %v571, %v579
    %582 = vrot.lane.b32.xlu0 %v166, 48
    %v583 = vpop.permute.xlu0 %582
    %v586 = vsel %vm178, %v580, 0
    %588 = vmatpush.msra.mxu0 0.0
    %589 = vmatpush.msra.mxu0 0.0
    %590 = vmatpush.msra.mxu0 0.0
    %591 = vmatpush.msra.mxu0 0.0
    %592 = vmatpush.msra.mxu0 0.0
    %593 = vmatpush.msra.mxu0 0.0
    %594 = vmatpush.msra.mxu0 0.0
    %595 = vmatpush.msra.mxu0 0.0
    %596 = vmatpush.msra.mxu0 0.0
    %597 = vmatpush.msra.mxu0 0.0
    %598 = vmatpush.msra.mxu0 0.0
    %599 = vmatpush.msra.mxu0 0.0
    %600 = vmatpush.msra.mxu0 0.0
    %601 = vmatpush.msra.mxu0 0.0
    %602 = vmatpush.msra.mxu0 0.0
    %603 = vmatpush.msra.mxu0 %v583
    %604 = vmatmul.f32.gmra.mxu0 %v586
    %v605 = vpop.f32.mrf.mxu0
    %v606 = vadd.f32 0.0, %v605
    %607 = vdwg.mxu0
    %608 = vrot.lane.b32.xlu0 %v169, 48
    %v609 = vpop.permute.xlu0 %608
    %v612 = vsel %vm178, %v581, 0
    %614 = vmatpush.msra.mxu0 0.0
    %615 = vmatpush.msra.mxu0 0.0
    %616 = vmatpush.msra.mxu0 0.0
    %617 = vmatpush.msra.mxu0 0.0
    %618 = vmatpush.msra.mxu0 0.0
    %619 = vmatpush.msra.mxu0 0.0
    %620 = vmatpush.msra.mxu0 0.0
    %621 = vmatpush.msra.mxu0 0.0
    %622 = vmatpush.msra.mxu0 0.0
    %623 = vmatpush.msra.mxu0 0.0
    %624 = vmatpush.msra.mxu0 0.0
    %625 = vmatpush.msra.mxu0 0.0
    %626 = vmatpush.msra.mxu0 0.0
    %627 = vmatpush.msra.mxu0 0.0
    %628 = vmatpush.msra.mxu0 0.0
    %629 = vmatpush.msra.mxu0 %v609
    %630 = vmatmul.f32.gmra.mxu0 %v612
    %v631 = vpop.f32.mrf.mxu0
    %v632 = vadd.f32 0.0, %v631
    %633 = vdwg.mxu0
    %v634 = vld [vmem:[%s4 + $0x10] sm:$0xff]
    %v636 = vsel %vm178, %v606, 0
    %v639 = vsel %vm178, %v632, 0
    %641 = vmatpush.msra.mxu0 0.0
    %642 = vmatpush.msra.mxu0 0.0
    %643 = vmatpush.msra.mxu0 0.0
    %644 = vmatpush.msra.mxu0 0.0
    %645 = vmatpush.msra.mxu0 0.0
    %646 = vmatpush.msra.mxu0 0.0
    %647 = vmatpush.msra.mxu0 0.0
    %648 = vmatpush.msra.mxu0 0.0
    %649 = vmatpush.msra.mxu0 0.0
    %650 = vmatpush.msra.mxu0 0.0
    %651 = vmatpush.msra.mxu0 0.0
    %652 = vmatpush.msra.mxu0 0.0
    %653 = vmatpush.msra.mxu0 0.0
    %654 = vmatpush.msra.mxu0 0.0
    %655 = vmatpush.msra.mxu0 0.0
    %656 = vmatpush.msra.mxu0 %v634
    %657 = vmatmul.f32.gmra.mxu0 %v636
    %v658 = vpop.f32.mrf.mxu0
    %v659 = vadd.f32 0.0, %v658
    %660 = vmatmul.f32.gmra.mxu0 %v639
    %v661 = vpop.f32.mrf.mxu0
    %v662 = vadd.f32 0.0, %v661
    %663 = vdwg.mxu0
    %v664 = vadd.f32 %v500, %v659
    %v665 = vadd.f32 %v501, %v662
    %666 = vrot.lane.b32.xlu0 %v166, 104
    %v667 = vpop.permute.xlu0 %666
    %668 = vrot.lane.b32.xlu0 %v166, 72
    %v669 = vpop.permute.xlu0 %668
    %v670 = vsel %vm178, %v667, 0
    %v672 = vsel %vm178, %v669, 0
    %674 = vmatpush.xpose.msra.mxu0 0.0
    %675 = vmatpush.xpose.msra.mxu0 0.0
    %676 = vmatpush.xpose.msra.mxu0 0.0
    %677 = vmatpush.xpose.msra.mxu0 0.0
    %678 = vmatpush.xpose.msra.mxu0 0.0
    %679 = vmatpush.xpose.msra.mxu0 0.0
    %680 = vmatpush.xpose.msra.mxu0 0.0
    %681 = vmatpush.xpose.msra.mxu0 0.0
    %682 = vmatpush.xpose.msra.mxu0 0.0
    %683 = vmatpush.xpose.msra.mxu0 0.0
    %684 = vmatpush.xpose.msra.mxu0 0.0
    %685 = vmatpush.xpose.msra.mxu0 0.0
    %686 = vmatpush.xpose.msra.mxu0 0.0
    %687 = vmatpush.xpose.msra.mxu0 0.0
    %688 = vmatpush.xpose.msra.mxu0 0.0
    %689 = vmatpush.xpose.msra.mxu0 %v672
    %690 = vmatmul.f32.gmra.mxu0 %v670
    %v691 = vpop.f32.mrf.mxu0
    %v692 = vadd.f32 0.0, %v691
    %693 = vdwg.mxu0
    %694 = vrot.lane.b32.xlu0 %v169, 104
    %v695 = vpop.permute.xlu0 %694
    %696 = vrot.lane.b32.xlu0 %v169, 72
    %v697 = vpop.permute.xlu0 %696
    %v698 = vsel %vm178, %v695, 0
    %v700 = vsel %vm178, %v697, 0
    %702 = vmatpush.xpose.msra.mxu0 0.0
    %703 = vmatpush.xpose.msra.mxu0 0.0
    %704 = vmatpush.xpose.msra.mxu0 0.0
    %705 = vmatpush.xpose.msra.mxu0 0.0
    %706 = vmatpush.xpose.msra.mxu0 0.0
    %707 = vmatpush.xpose.msra.mxu0 0.0
    %708 = vmatpush.xpose.msra.mxu0 0.0
    %709 = vmatpush.xpose.msra.mxu0 0.0
    %710 = vmatpush.xpose.msra.mxu0 0.0
    %711 = vmatpush.xpose.msra.mxu0 0.0
    %712 = vmatpush.xpose.msra.mxu0 0.0
    %713 = vmatpush.xpose.msra.mxu0 0.0
    %714 = vmatpush.xpose.msra.mxu0 0.0
    %715 = vmatpush.xpose.msra.mxu0 0.0
    %716 = vmatpush.xpose.msra.mxu0 0.0
    %717 = vmatpush.xpose.msra.mxu0 %v700
    %718 = vmatmul.f32.gmra.mxu0 %v698
    %v719 = vpop.f32.mrf.mxu0
    %v720 = vadd.f32 0.0, %v719
    %721 = vdwg.mxu0
    %v722 = vmul.f32 %v692, 0.35355338
    %v723 = vmul.f32 %v720, 0.35355338
    %v724 = vsel %vm178, %v722, -inf
    %725 = vmax.xlane.f32.xlu0 %v724
    %v726 = vpop.xlane.xlu0 %725
    %v727 = vsel %vm178, %v723, -inf
    %728 = vmax.xlane.f32.xlu0 %v727
    %v729 = vpop.xlane.xlu0 %728
    %v730 = vsub.f32 %v722, %v726
    %v731 = vsub.f32 %v723, %v729
    %v732 = vmul.f32 %v730, 1.442695
    %v733 = vpow.pop %v732
    %v734 = vmul.f32 %v731, 1.442695
    %v735 = vpow.pop %v734
    %v736 = vsel %vm178, %v733, 0.0
    %737 = vadd.xlane.f32.xlu0 %v736
    %v738 = vpop.xlane.xlu0 %737
    %v739 = vsel %vm178, %v735, 0.0
    %740 = vadd.xlane.f32.xlu0 %v739
    %v741 = vpop.xlane.xlu0 %740
    %v742 = vrcp.pop %v738
    %v743 = vrcp.pop %v741
    %v744 = vmul.f32 %v733, %v742
    %v745 = vmul.f32 %v735, %v743
    %746 = vrot.lane.b32.xlu0 %v166, 40
    %v747 = vpop.permute.xlu0 %746
    %v750 = vsel %vm178, %v744, 0
    %752 = vmatpush.msra.mxu0 0.0
    %753 = vmatpush.msra.mxu0 0.0
    %754 = vmatpush.msra.mxu0 0.0
    %755 = vmatpush.msra.mxu0 0.0
    %756 = vmatpush.msra.mxu0 0.0
    %757 = vmatpush.msra.mxu0 0.0
    %758 = vmatpush.msra.mxu0 0.0
    %759 = vmatpush.msra.mxu0 0.0
    %760 = vmatpush.msra.mxu0 0.0
    %761 = vmatpush.msra.mxu0 0.0
    %762 = vmatpush.msra.mxu0 0.0
    %763 = vmatpush.msra.mxu0 0.0
    %764 = vmatpush.msra.mxu0 0.0
    %765 = vmatpush.msra.mxu0 0.0
    %766 = vmatpush.msra.mxu0 0.0
    %767 = vmatpush.msra.mxu0 %v747
    %768 = vmatmul.f32.gmra.mxu0 %v750
    %v769 = vpop.f32.mrf.mxu0
    %v770 = vadd.f32 0.0, %v769
    %771 = vdwg.mxu0
    %772 = vrot.lane.b32.xlu0 %v169, 40
    %v773 = vpop.permute.xlu0 %772
    %v776 = vsel %vm178, %v745, 0
    %778 = vmatpush.msra.mxu0 0.0
    %779 = vmatpush.msra.mxu0 0.0
    %780 = vmatpush.msra.mxu0 0.0
    %781 = vmatpush.msra.mxu0 0.0
    %782 = vmatpush.msra.mxu0 0.0
    %783 = vmatpush.msra.mxu0 0.0
    %784 = vmatpush.msra.mxu0 0.0
    %785 = vmatpush.msra.mxu0 0.0
    %786 = vmatpush.msra.mxu0 0.0
    %787 = vmatpush.msra.mxu0 0.0
    %788 = vmatpush.msra.mxu0 0.0
    %789 = vmatpush.msra.mxu0 0.0
    %790 = vmatpush.msra.mxu0 0.0
    %791 = vmatpush.msra.mxu0 0.0
    %792 = vmatpush.msra.mxu0 0.0
    %793 = vmatpush.msra.mxu0 %v773
    %794 = vmatmul.f32.gmra.mxu0 %v776
    %v795 = vpop.f32.mrf.mxu0
    %v796 = vadd.f32 0.0, %v795
    %797 = vdwg.mxu0
    %v798 = vld [vmem:[%s4 + $0x18] sm:$0xff]
    %v800 = vsel %vm178, %v770, 0
    %v803 = vsel %vm178, %v796, 0
    %805 = vmatpush.msra.mxu0 0.0
    %806 = vmatpush.msra.mxu0 0.0
    %807 = vmatpush.msra.mxu0 0.0
    %808 = vmatpush.msra.mxu0 0.0
    %809 = vmatpush.msra.mxu0 0.0
    %810 = vmatpush.msra.mxu0 0.0
    %811 = vmatpush.msra.mxu0 0.0
    %812 = vmatpush.msra.mxu0 0.0
    %813 = vmatpush.msra.mxu0 0.0
    %814 = vmatpush.msra.mxu0 0.0
    %815 = vmatpush.msra.mxu0 0.0
    %816 = vmatpush.msra.mxu0 0.0
    %817 = vmatpush.msra.mxu0 0.0
    %818 = vmatpush.msra.mxu0 0.0
    %819 = vmatpush.msra.mxu0 0.0
    %820 = vmatpush.msra.mxu0 %v798
    %821 = vmatmul.f32.gmra.mxu0 %v800
    %v822 = vpop.f32.mrf.mxu0
    %v823 = vadd.f32 0.0, %v822
    %824 = vmatmul.f32.gmra.mxu0 %v803
    %v825 = vpop.f32.mrf.mxu0
    %v826 = vadd.f32 0.0, %v825
    %827 = vdwg.mxu0
    %v828 = vadd.f32 %v664, %v823
    %v829 = vadd.f32 %v665, %v826
    %v830 = vadd.f32 %v72, %v828
    %v831 = vadd.f32 %v73, %v829
    %v832 = vld [vmem:[%s6] sm:$0x1]
    %v833 = vld [vmem:[%s7] sm:$0x1]
    %v834 = vsel %vm76, %v830, 0.0
    %835 = vadd.xlane.f32.xlu0 %v834
    %v836 = vpop.xlane.xlu0 %835
    %v837 = vsel %vm76, %v831, 0.0
    %838 = vadd.xlane.f32.xlu0 %v837
    %v839 = vpop.xlane.xlu0 %838
    %v840 = vmul.f32 %v836, %v89
    %v841 = vmul.f32 %v839, %v89
    %v842 = vsub.f32 %v830, %v840
    %v843 = vsub.f32 %v831, %v841
    %v844 = vmul.f32 %v842, %v842
    %v845 = vmul.f32 %v843, %v843
    %v846 = vsel %vm76, %v844, 0.0
    %847 = vadd.xlane.f32.xlu0 %v846
    %v848 = vpop.xlane.xlu0 %847
    %v849 = vsel %vm76, %v845, 0.0
    %850 = vadd.xlane.f32.xlu0 %v849
    %v851 = vpop.xlane.xlu0 %850
    %v852 = vmul.f32 %v848, %v89
    %v853 = vmul.f32 %v851, %v89
    %v854 = vadd.f32 %v852, 1e-05
    %v855 = vadd.f32 %v853, 1e-05
    %v856 = vrsqrt.pop %v854
    %v857 = vmul.f32 %v856, %v854
    %v858 = vmul.f32 %v857, %v856
    %v859 = vmul.f32 0.5, %v858
    %v860 = vsub.f32 1.5, %v859
    %v861 = vmul.f32 %v856, %v860
    %vm862 = vweird.f32 %v854
    %vm863 = vweird.f32 %v856
    %vm864 = vmor %vm862, %vm863
    %v865 = vsel %vm864, %v856, %v861
    %v866 = vrsqrt.pop %v855
    %v867 = vmul.f32 %v866, %v855
    %v868 = vmul.f32 %v867, %v866
    %v869 = vmul.f32 0.5, %v868
    %v870 = vsub.f32 1.5, %v869
    %v871 = vmul.f32 %v866, %v870
    %vm872 = vweird.f32 %v855
    %vm873 = vweird.f32 %v866
    %vm874 = vmor %vm872, %vm873
    %v875 = vsel %vm874, %v866, %v871
    %v876 = vmul.f32 %v842, %v865
    %v877 = vmul.f32 %v843, %v875
    %v879 = vperm.slane %v832, 0
    %v881 = vmul.f32 %v876, %v879
    %v882 = vmul.f32 %v877, %v879
    %v884 = vperm.slane %v833, 0
    %v886 = vadd.f32 %v881, %v884
    %v887 = vadd.f32 %v882, %v884
    %v888 = vld [vmem:[%s8] sm:$0xff]
    %v889 = vld [vmem:[%s8 + $0x8] sm:$0xff]
    %v890 = vld [vmem:[%s8 + $0x10] sm:$0xff]
    %v891 = vld [vmem:[%s8 + $0x18] sm:$0xff]
    %v892 = vld [vmem:[%s9] sm:$0x1]
    %v894 = vperm.slane %v892, 0
    %v897 = vsel %vm76, %v886, 0
    %v900 = vsel %vm76, %v887, 0
    %902 = vmatpush.msra.mxu0 0.0
    %903 = vmatpush.msra.mxu0 0.0
    %904 = vmatpush.msra.mxu0 0.0
    %905 = vmatpush.msra.mxu0 0.0
    %906 = vmatpush.msra.mxu0 0.0
    %907 = vmatpush.msra.mxu0 0.0
    %908 = vmatpush.msra.mxu0 0.0
    %909 = vmatpush.msra.mxu0 0.0
    %910 = vmatpush.msra.mxu0 0.0
    %911 = vmatpush.msra.mxu0 0.0
    %912 = vmatpush.msra.mxu0 0.0
    %913 = vmatpush.msra.mxu0 0.0
    %914 = vmatpush.msra.mxu0 %v891
    %915 = vmatpush.msra.mxu0 %v890
    %916 = vmatpush.msra.mxu0 %v889
    %917 = vmatpush.msra.mxu0 %v888
    %918 = vmatmul.f32.gmra.mxu0 %v897
    %v919 = vpop.f32.mrf.mxu0
    %v920 = vadd.f32 %v894, %v919
    %921 = vmatmul.f32.gmra.mxu0 %v900
    %v922 = vpop.f32.mrf.mxu0
    %v923 = vadd.f32 %v894, %v922
    %924 = vdwg.mxu0
    %v925 = vmul.f32 %v920, 0.5
    %v926 = vmul.f32 %v923, 0.5
    %v927 = vmul.f32 %v920, 0.70710677
    %v928 = vmul.f32 %v923, 0.70710677
    %vm929 = vcmp.ge.f32.partialorder %v927, 0.0
    %vm930 = vcmp.ge.f32.partialorder %v928, 0.0
    %v931 = vsel %vm929, 1.0, -1.0
    %v932 = vsel %vm930, 1.0, -1.0
    %v933 = vand.u32 2147483647, %v927
    %v934 = vand.u32 2147483647, %v928
    %v935 = vmul.f32 %v933, 0.3275911
    %v936 = vmul.f32 %v934, 0.3275911
    %v937 = vadd.f32 %v935, 1.0
    %v938 = vadd.f32 %v936, 1.0
    %v939 = vrcp.pop %v937
    %v940 = vmul.f32 %v937, %v939
    %v941 = vsub.f32 1.0, %v940
    %v942 = vmul.f32 %v939, %v941
    %v943 = vadd.f32 %v939, %v942
    %vm944 = vweird.f32 %v937
    %vm945 = vweird.f32 %v939
    %vm946 = vmor %vm944, %vm945
    %v947 = vsel %vm946, %v939, %v943
    %v948 = vand.u32 2147483647, %v937
    %vm949 = vcmp.eq.f32.partialorder %v948, 8.507059e+37
    %v950 = vand.u32 %v937, 2147483648
    %v951 = vor.u32 1.1754944e-38, %v950
    %v952 = vsel %vm949, %v951, %v947
    %v953 = vmul.f32 1.0, %v952
    %v954 = vrcp.pop %v938
    %v955 = vmul.f32 %v938, %v954
    %v956 = vsub.f32 1.0, %v955
    %v957 = vmul.f32 %v954, %v956
    %v958 = vadd.f32 %v954, %v957
    %vm959 = vweird.f32 %v938
    %vm960 = vweird.f32 %v954
    %vm961 = vmor %vm959, %vm960
    %v962 = vsel %vm961, %v954, %v958
    %v963 = vand.u32 2147483647, %v938
    %vm964 = vcmp.eq.f32.partialorder %v963, 8.507059e+37
    %v965 = vand.u32 %v938, 2147483648
    %v966 = vor.u32 1.1754944e-38, %v965
    %v967 = vsel %vm964, %v966, %v962
    %v968 = vmul.f32 1.0, %v967
    %v969 = vmul.f32 %v953, 1.0614054
    %v970 = vmul.f32 %v968, 1.0614054
    %v971 = vadd.f32 %v969, -1.4531521
    %v972 = vadd.f32 %v970, -1.4531521
    %v973 = vmul.f32 %v971, %v953
    %v974 = vmul.f32 %v972, %v968
    %v975 = vadd.f32 %v973, 1.4214138
    %v976 = vadd.f32 %v974, 1.4214138
    %v977 = vmul.f32 %v975, %v953
    %v978 = vmul.f32 %v976, %v968
    %v979 = vadd.f32 %v977, -0.28449672
    %v980 = vadd.f32 %v978, -0.28449672
    %v981 = vmul.f32 %v979, %v953
    %v982 = vmul.f32 %v980, %v968
    %v983 = vadd.f32 %v981, 0.2548296
    %v984 = vadd.f32 %v982, 0.2548296
    %v985 = vmul.f32 %v983, %v953
    %v986 = vmul.f32 %v984, %v968
    %v987 = vsub.f32 0.0, %v933
    %v988 = vsub.f32 0.0, %v934
    %v989 = vmul.f32 %v987, %v933
    %v990 = vmul.f32 %v988, %v934
    %v991 = vmul.f32 %v989, 1.442695
    %v992 = vpow.pop %v991
    %v993 = vmul.f32 %v990, 1.442695
    %v994 = vpow.pop %v993
    %v995 = vmul.f32 %v985, %v992
    %v996 = vmul.f32 %v986, %v994
    %v997 = vsub.f32 1.0, %v995
    %v998 = vsub.f32 1.0, %v996
    %v999 = vmul.f32 %v931, %v997
    %v1000 = vmul.f32 %v932, %v998
    %v1001 = vadd.f32 %v999, 1.0
    %v1002 = vadd.f32 %v1000, 1.0
    %v1003 = vmul.f32 %v925, %v1001
    %v1004 = vmul.f32 %v926, %v1002
    %v1005 = vld [vmem:[%s10] sm:$0xff]
    %v1006 = vld [vmem:[%s10 + $0x8] sm:$0xff]
    %v1007 = vld [vmem:[%s10 + $0x10] sm:$0xff]
    %v1008 = vld [vmem:[%s10 + $0x18] sm:$0xff]
    %v1009 = vld [vmem:[%s10 + $0x20] sm:$0xff]
    %v1010 = vld [vmem:[%s10 + $0x28] sm:$0xff]
    %v1011 = vld [vmem:[%s10 + $0x30] sm:$0xff]
    %v1012 = vld [vmem:[%s10 + $0x38] sm:$0xff]
    %v1013 = vld [vmem:[%s11] sm:$0x1]
    %v1015 = vperm.slane %v1013, 0
    %vm1017 = vcmask 523264
    %v1019 = vsel %vm1017, %v1003, 0
    %v1022 = vsel %vm1017, %v1004, 0
    %1024 = vmatpush.msra.mxu0 0.0
    %1025 = vmatpush.msra.mxu0 0.0
    %1026 = vmatpush.msra.mxu0 0.0
    %1027 = vmatpush.msra.mxu0 0.0
    %1028 = vmatpush.msra.mxu0 0.0
    %1029 = vmatpush.msra.mxu0 0.0
    %1030 = vmatpush.msra.mxu0 0.0
    %1031 = vmatpush.msra.mxu0 0.0
    %1032 = vmatpush.msra.mxu0 %v1012
    %1033 = vmatpush.msra.mxu0 %v1011
    %1034 = vmatpush.msra.mxu0 %v1010
    %1035 = vmatpush.msra.mxu0 %v1009
    %1036 = vmatpush.msra.mxu0 %v1008
    %1037 = vmatpush.msra.mxu0 %v1007
    %1038 = vmatpush.msra.mxu0 %v1006
    %1039 = vmatpush.msra.mxu0 %v1005
    %1040 = vmatmul.f32.gmra.mxu0 %v1019
    %v1041 = vpop.f32.mrf.mxu0
    %v1042 = vadd.f32 %v1015, %v1041
    %1043 = vmatmul.f32.gmra.mxu0 %v1022
    %v1044 = vpop.f32.mrf.mxu0
    %v1045 = vadd.f32 %v1015, %v1044
    %1046 = vdwg.mxu0
    %v1047 = vadd.f32 %v830, %v1042
    %v1048 = vadd.f32 %v831, %v1045
    %1049 = vst.msk [vmem:[#allocation7] sm:$0xff] %vm76, %v1047
    %1050 = vst.msk [vmem:[#allocation7 + $0x8] sm:$0xff] %vm76, %v1048
    // Predicated region
    $region58: #{tpu_custom_call.1} parent=1 // pred_check
      _
    $region59: #{tpu_custom_call.1} parent=1 // pred_check_branch
      %1052 = sbr.rel (0) target = $region61
    $region60: #{tpu_custom_call.1} parent=1 // pred_region
      %1054 = vsyncadd [#allocation4], 0
      %s1055 = sshll.u32 [#allocation7], 4
      %s1056 = int_to_ptr.vmem [resolvable:$true] %s1055
      %s1057 = sshll.u32 %s12, 4
      %s1058 = int_to_ptr.hbm [resolvable:$true] %s1057
      %1063 = dma.vmem_to_hbm [thread:$0]  %s1056, 256, %s1058, [#allocation4], 128, 128, 8
    $region61: #{tpu_custom_call.1} parent=1 // pred_fallthru
      _
    // Predicated region
    $region62: #{tpu_custom_call.1} parent=1 // pred_check
      _
    $region63: #{tpu_custom_call.1} parent=1 // pred_check_branch
      %1065 = sbr.rel (0) target = $region65
    $region64: #{tpu_custom_call.1} parent=1 // pred_region
      %1067 = dma.done [#allocation4], 256
    $region65: #{tpu_custom_call.1} parent=1 // pred_fallthru
      _
    %1068 = vsyncpa [#allocation3], 1
    %1069 = vsyncpa [#allocation6], 1
    %1070 = vsyncpa [#allocation4], 1

</llo_original>
